<compile_context>
chip_gen: v5e
topology: v5e:2x2
jax: 0.10.0
libtpu: 0.0.40
codegen_flags: <defaults>
</compile_context>

<pallas_src>
import jax
import jax.numpy as jnp
import numpy as np
from jax import lax
from jax.experimental import pallas as pl
from jax.experimental.pallas import tpu as pltpu

SIGMA = 0.1
TAU = 0.01
LANES = 128


def _round_up(x, m):
    return (x + m - 1) // m * m


def _make_kernel(C, HID, tau, tile_r, chunk):
    n_chunks = tile_r // chunk

    def sure_kernel(y_ref, xnet_ref, b_ref, a_ref, w1_ref, w2a_t_ref,
                    div_ref, mse_ref):
        # Accumulator blocks are resident across the innermost ("arbitrary")
        # spatial axis; zero them on the first visit.
        @pl.when(pl.program_id(2) == 0)
        def _():
            div_ref[...] = jnp.zeros_like(div_ref)
            mse_ref[...] = jnp.zeros_like(mse_ref)

        def chunk_body(i, carry):
            div_acc, mse_acc = carry
            r0 = pl.multiple_of(i * chunk, chunk)
            rows = pl.ds(r0, chunk)

            # u_c = y_c + tau * b_c   -- loaded per channel at point of use.
            u = [y_ref[0, c, rows, :] + tau * b_ref[0, c, rows, :]
                 for c in range(C)]

            # Fused hidden pass: h_j = relu(sum_c W1[c,j] * u_c) is folded into
            # the y2_d accumulators immediately and dropped.
            y2 = [jnp.zeros((chunk, LANES), jnp.float32) for _ in range(C)]
            for j in range(HID):
                hj = w1_ref[0, j] * u[0]
                for c in range(1, C):
                    hj = hj + w1_ref[c, j] * u[c]
                hj = jnp.maximum(hj, 0.0)
                for d in range(C):
                    y2[d] = y2[d] + w2a_t_ref[d, j] * hj

            div_part = None
            mse_part = None
            for d in range(C):
                # y1_d = (physics.A(x_net))[:, d]
                y1_d = a_ref[0, d] * xnet_ref[0, 0, rows, :]
                for c in range(1, C):
                    y1_d = y1_d + a_ref[c, d] * xnet_ref[0, c, rows, :]
                dc = b_ref[0, d, rows, :] * (y2[d] - y1_d)   # MC divergence numerator
                r = y1_d - y_ref[0, d, rows, :]              # residual for MSE
                div_part = dc if div_part is None else div_part + dc
                mse_part = r * r if mse_part is None else mse_part + r * r

            return div_acc + div_part, mse_acc + mse_part

        zero = jnp.zeros((chunk, LANES), jnp.float32)
        div_carry, mse_carry = lax.fori_loop(0, n_chunks, chunk_body,
                                             (zero, zero))
        div_ref[0, :, :] = div_ref[0, :, :] + div_carry
        mse_ref[0, :, :] = mse_ref[0, :, :] + mse_carry

    return sure_kernel


def _pick_tile_r(R, C, max_block_bytes=1 << 20):
    """Spatial tile (rows of 128 lanes): multiple of 8, ~1 MiB input blocks max."""
    cap = max(8, (max_block_bytes // (C * LANES * 4)) // 8 * 8)
    return min(cap, _round_up(max(R, 1), 8))


def sure_gaussian_loss_pallas(y, x_net, b, A, W1, W2, sigma=SIGMA, tau=TAU):
    """y, x_net, b: [N, C, H, W] float32. A: [C,C], W1: [C,HID], W2: [HID,C]."""
    N, C, H, W = y.shape
    HID = W1.shape[1]
    S = H * W
    numel = float(N * C * S)

    R = (S + LANES - 1) // LANES
    tile_r = _pick_tile_r(R, C)
    R_pad = _round_up(R, tile_r)              # never emit oversized blocks
    S_pad = R_pad * LANES
    chunk = 16 if tile_r % 16 == 0 else 8
    T = R_pad // tile_r
    T_outer = 2 if T % 2 == 0 else 1          # keep both v7x TCs busy for any N
    T_inner = T // T_outer

    def to_blocks(t):
        # Single fused (lane + row) zero-pad; padded pixels contribute exactly
        # zero to both sums (no bias, relu(0)=0, physics.A linear).
        t = t.reshape(N, C, S)
        if S_pad != S:
            t = jnp.pad(t, ((0, 0), (0, 0), (0, S_pad - S)))
        return t.reshape(N, C, R_pad, LANES)

    y_b, x_b, b_b = to_blocks(y), to_blocks(x_net), to_blocks(b)

    # Fold physics.A into the model head: (h @ W2) @ A == h @ (W2 @ A);
    # pass transposed so the SMEM long axis is last.
    w2a_t = jnp.transpose(jnp.dot(W2, A))      # (C, HID)

    row_spec = pl.BlockSpec((1, C, tile_r, LANES),
                            lambda n, to, ti: (n, 0, to * T_inner + ti, 0))
    smem_spec = pl.BlockSpec(memory_space=pltpu.MemorySpace.SMEM)
    acc_spec = pl.BlockSpec((1, chunk, LANES),
                            lambda n, to, ti: (n * T_outer + to, 0, 0))

    div_p, mse_p = pl.pallas_call(
        _make_kernel(C, HID, tau, tile_r, chunk),
        out_shape=(jax.ShapeDtypeStruct((N * T_outer, chunk, LANES), jnp.float32),
                   jax.ShapeDtypeStruct((N * T_outer, chunk, LANES), jnp.float32)),
        grid=(N, T_outer, T_inner),
        in_specs=[row_spec, row_spec, row_spec,
                  smem_spec, smem_spec, smem_spec],
        out_specs=(acc_spec, acc_spec),
        compiler_params=pltpu.CompilerParams(
            dimension_semantics=("parallel", "parallel", "arbitrary"),
            vmem_limit_bytes=32 * 1024 * 1024),
    )(y_b, x_b, b_b, A, W1, w2a_t)

    sigma2 = sigma ** 2
    div = 2.0 * sigma2 * (jnp.sum(div_p) / tau) / numel
    mse = jnp.sum(mse_p) / numel
    loss = mse + div - sigma2 / N              # averaged_cst=False branch
    return loss


def sure_gaussian_loss_ref(y, x_net, b, A, W1, W2, sigma=SIGMA, tau=TAU):
    """Pure-JAX reference mirroring the PyTorch forward semantics."""
    def physics_A(u):                          # 1x1 conv over channels (NCHW)
        return jnp.einsum('nchw,cd->ndhw', u, A)

    def model(u):
        h = jnp.maximum(jnp.einsum('nchw,cd->ndhw', u, W1), 0.0)
        return jnp.einsum('nchw,cd->ndhw', h, W2)

    sigma2 = sigma ** 2
    y1 = physics_A(x_net)
    y2 = physics_A(model(y + b * tau))
    div = jnp.mean(b * (y2 - y1) / tau)
    div = 2.0 * sigma2 * div
    mse = jnp.mean((y1 - y) ** 2)
    return mse + div - sigma2 / y.shape[0]


if __name__ == "__main__":
    key = jax.random.PRNGKey(0)
    k_y, k_x, k_b, k_a, k_w1, k_w2 = jax.random.split(key, 6)

    N, C, H, W = 2, 4, 16, 16
    HID = 32

    y = jax.random.normal(k_y, (N, C, H, W), dtype=jnp.float32)
    x_net = jax.random.normal(k_x, (N, C, H, W), dtype=jnp.float32)
    # b = torch.randn_like(y) in mc_div (margin=0 path) -- drawn once here so
    # the kernel and the reference see the identical Monte-Carlo probe.
    b = jax.random.normal(k_b, (N, C, H, W), dtype=jnp.float32)

    # Deterministic synthetic parameters for physics.A and model.
    A = jax.random.normal(k_a, (C, C), dtype=jnp.float32) * 0.5
    W1 = jax.random.normal(k_w1, (C, HID), dtype=jnp.float32) * 0.2
    W2 = jax.random.normal(k_w2, (HID, C), dtype=jnp.float32) * 0.2

    loss = sure_gaussian_loss_pallas(y, x_net, b, A, W1, W2)
    loss = jax.block_until_ready(loss)

    ref = jax.block_until_ready(sure_gaussian_loss_ref(y, x_net, b, A, W1, W2))
    np.testing.assert_allclose(np.asarray(loss), np.asarray(ref),
                               rtol=1e-3, atol=1e-4)
    print("KERNEL_OK")
</pallas_src>

<mosaic_0001>
module attributes {stable_mosaic.version = 11 : i64} {
  func.func @sure_kernel(%arg0: i32, %arg1: i32, %arg2: i32, %arg3: memref<1x4x8x128xf32, #tpu.memory_space<vmem>>, %arg4: memref<1x4x8x128xf32, #tpu.memory_space<vmem>>, %arg5: memref<1x4x8x128xf32, #tpu.memory_space<vmem>>, %arg6: memref<4x4xf32, #tpu.memory_space<smem>>, %arg7: memref<4x32xf32, #tpu.memory_space<smem>>, %arg8: memref<4x32xf32, #tpu.memory_space<smem>>, %arg9: memref<1x8x128xf32, #tpu.memory_space<vmem>>, %arg10: memref<1x8x128xf32, #tpu.memory_space<vmem>>) attributes {dimension_semantics = [#tpu.dimension_semantics<parallel>, #tpu.dimension_semantics<parallel>, #tpu.dimension_semantics<arbitrary>], iteration_bounds = array<i64: 2, 1, 1>, scalar_prefetch = 0 : i64, scratch_operands = 0 : i64, tpu.core_type = #tpu.core_type<tc>, window_params = [{transform_indices = @transform_0, window_bounds = array<i64: 1, 4, 8, 128>}, {transform_indices = @transform_1, window_bounds = array<i64: 1, 4, 8, 128>}, {transform_indices = @transform_2, window_bounds = array<i64: 1, 4, 8, 128>}, {transform_indices = @transform_3, window_bounds = array<i64: 4, 4>}, {transform_indices = @transform_4, window_bounds = array<i64: 4, 32>}, {transform_indices = @transform_5, window_bounds = array<i64: 4, 32>}, {transform_indices = @transform_6, window_bounds = array<i64: 1, 8, 128>}, {transform_indices = @transform_7, window_bounds = array<i64: 1, 8, 128>}]} {
    %c0_i32 = arith.constant 0 : i32
    %0 = arith.cmpi eq, %arg2, %c0_i32 : i32
    %1 = arith.extui %0 : i1 to i32
    %c0_i32_0 = arith.constant 0 : i32
    %2 = arith.cmpi ne, %1, %c0_i32_0 : i32
    scf.if %2 {
      %cst_662 = arith.constant 0.000000e+00 : f32
      %1270 = vector.broadcast %cst_662 : f32 to vector<1x8x128xf32>
      %c0_663 = arith.constant 0 : index
      %c0_664 = arith.constant 0 : index
      %c0_665 = arith.constant 0 : index
      %1271 = vector.load %arg9[%c0_663, %c0_664, %c0_665] : memref<1x8x128xf32, #tpu.memory_space<vmem>>, vector<1x8x128xf32>
      tpu.vector_store %arg9[%c0_663, %c0_664, %c0_665], %1270 {strides = array<i32>} : memref<1x8x128xf32, #tpu.memory_space<vmem>>, vector<1x8x128xf32>,
      %cst_666 = arith.constant 0.000000e+00 : f32
      %1272 = vector.broadcast %cst_666 : f32 to vector<1x8x128xf32>
      %c0_667 = arith.constant 0 : index
      %c0_668 = arith.constant 0 : index
      %c0_669 = arith.constant 0 : index
      %1273 = vector.load %arg10[%c0_667, %c0_668, %c0_669] : memref<1x8x128xf32, #tpu.memory_space<vmem>>, vector<1x8x128xf32>
      tpu.vector_store %arg10[%c0_667, %c0_668, %c0_669], %1272 {strides = array<i32>} : memref<1x8x128xf32, #tpu.memory_space<vmem>>, vector<1x8x128xf32>,
    } else {
    }
    %cst = arith.constant 0.000000e+00 : f32
    %3 = vector.broadcast %cst : f32 to vector<8x128xf32>
    %c0_i32_1 = arith.constant 0 : i32
    %c8_i32 = arith.constant 8 : i32
    %4 = arith.muli %c0_i32_1, %c8_i32 : i32
    %5 = tpu.assume_multiple %4, 8 : i32
    %c0 = arith.constant 0 : index
    %c0_2 = arith.constant 0 : index
    %6 = arith.index_cast %5 : i32 to index
    %c0_3 = arith.constant 0 : index
    %7 = vector.load %arg3[%c0, %c0_2, %6, %c0_3] : memref<1x4x8x128xf32, #tpu.memory_space<vmem>>, vector<1x1x8x128xf32>
    %8 = vector.shape_cast %7 : vector<1x1x8x128xf32> to vector<8x128xf32>
    %c0_4 = arith.constant 0 : index
    %c0_5 = arith.constant 0 : index
    %9 = arith.index_cast %5 : i32 to index
    %c0_6 = arith.constant 0 : index
    %10 = vector.load %arg5[%c0_4, %c0_5, %9, %c0_6] : memref<1x4x8x128xf32, #tpu.memory_space<vmem>>, vector<1x1x8x128xf32>
    %11 = vector.shape_cast %10 : vector<1x1x8x128xf32> to vector<8x128xf32>
    %cst_7 = arith.constant 0.00999999977 : f32
    %12 = vector.broadcast %cst_7 : f32 to vector<8x128xf32>
    %13 = arith.mulf %12, %11 : vector<8x128xf32>
    %14 = arith.addf %8, %13 : vector<8x128xf32>
    %c0_8 = arith.constant 0 : index
    %c1 = arith.constant 1 : index
    %15 = arith.index_cast %5 : i32 to index
    %c0_9 = arith.constant 0 : index
    %16 = vector.load %arg3[%c0_8, %c1, %15, %c0_9] : memref<1x4x8x128xf32, #tpu.memory_space<vmem>>, vector<1x1x8x128xf32>
    %17 = vector.shape_cast %16 : vector<1x1x8x128xf32> to vector<8x128xf32>
    %c0_10 = arith.constant 0 : index
    %c1_11 = arith.constant 1 : index
    %18 = arith.index_cast %5 : i32 to index
    %c0_12 = arith.constant 0 : index
    %19 = vector.load %arg5[%c0_10, %c1_11, %18, %c0_12] : memref<1x4x8x128xf32, #tpu.memory_space<vmem>>, vector<1x1x8x128xf32>
    %20 = vector.shape_cast %19 : vector<1x1x8x128xf32> to vector<8x128xf32>
    %cst_13 = arith.constant 0.00999999977 : f32
    %21 = vector.broadcast %cst_13 : f32 to vector<8x128xf32>
    %22 = arith.mulf %21, %20 : vector<8x128xf32>
    %23 = arith.addf %17, %22 : vector<8x128xf32>
    %c0_14 = arith.constant 0 : index
    %c2 = arith.constant 2 : index
    %24 = arith.index_cast %5 : i32 to index
    %c0_15 = arith.constant 0 : index
    %25 = vector.load %arg3[%c0_14, %c2, %24, %c0_15] : memref<1x4x8x128xf32, #tpu.memory_space<vmem>>, vector<1x1x8x128xf32>
    %26 = vector.shape_cast %25 : vector<1x1x8x128xf32> to vector<8x128xf32>
    %c0_16 = arith.constant 0 : index
    %c2_17 = arith.constant 2 : index
    %27 = arith.index_cast %5 : i32 to index
    %c0_18 = arith.constant 0 : index
    %28 = vector.load %arg5[%c0_16, %c2_17, %27, %c0_18] : memref<1x4x8x128xf32, #tpu.memory_space<vmem>>, vector<1x1x8x128xf32>
    %29 = vector.shape_cast %28 : vector<1x1x8x128xf32> to vector<8x128xf32>
    %cst_19 = arith.constant 0.00999999977 : f32
    %30 = vector.broadcast %cst_19 : f32 to vector<8x128xf32>
    %31 = arith.mulf %30, %29 : vector<8x128xf32>
    %32 = arith.addf %26, %31 : vector<8x128xf32>
    %c0_20 = arith.constant 0 : index
    %c3 = arith.constant 3 : index
    %33 = arith.index_cast %5 : i32 to index
    %c0_21 = arith.constant 0 : index
    %34 = vector.load %arg3[%c0_20, %c3, %33, %c0_21] : memref<1x4x8x128xf32, #tpu.memory_space<vmem>>, vector<1x1x8x128xf32>
    %35 = vector.shape_cast %34 : vector<1x1x8x128xf32> to vector<8x128xf32>
    %c0_22 = arith.constant 0 : index
    %c3_23 = arith.constant 3 : index
    %36 = arith.index_cast %5 : i32 to index
    %c0_24 = arith.constant 0 : index
    %37 = vector.load %arg5[%c0_22, %c3_23, %36, %c0_24] : memref<1x4x8x128xf32, #tpu.memory_space<vmem>>, vector<1x1x8x128xf32>
    %38 = vector.shape_cast %37 : vector<1x1x8x128xf32> to vector<8x128xf32>
    %cst_25 = arith.constant 0.00999999977 : f32
    %39 = vector.broadcast %cst_25 : f32 to vector<8x128xf32>
    %40 = arith.mulf %39, %38 : vector<8x128xf32>
    %41 = arith.addf %35, %40 : vector<8x128xf32>
    %cst_26 = arith.constant 0.000000e+00 : f32
    %42 = vector.broadcast %cst_26 : f32 to vector<8x128xf32>
    %cst_27 = arith.constant 0.000000e+00 : f32
    %43 = vector.broadcast %cst_27 : f32 to vector<8x128xf32>
    %cst_28 = arith.constant 0.000000e+00 : f32
    %44 = vector.broadcast %cst_28 : f32 to vector<8x128xf32>
    %cst_29 = arith.constant 0.000000e+00 : f32
    %45 = vector.broadcast %cst_29 : f32 to vector<8x128xf32>
    %c0_30 = arith.constant 0 : index
    %c0_31 = arith.constant 0 : index
    %46 = memref.load %arg7[%c0_30, %c0_31] : memref<4x32xf32, #tpu.memory_space<smem>>
    %47 = vector.broadcast %46 : f32 to vector<8x128xf32>
    %48 = arith.mulf %47, %14 : vector<8x128xf32>
    %c1_32 = arith.constant 1 : index
    %c0_33 = arith.constant 0 : index
    %49 = memref.load %arg7[%c1_32, %c0_33] : memref<4x32xf32, #tpu.memory_space<smem>>
    %50 = vector.broadcast %49 : f32 to vector<8x128xf32>
    %51 = arith.mulf %50, %23 : vector<8x128xf32>
    %52 = arith.addf %48, %51 : vector<8x128xf32>
    %c2_34 = arith.constant 2 : index
    %c0_35 = arith.constant 0 : index
    %53 = memref.load %arg7[%c2_34, %c0_35] : memref<4x32xf32, #tpu.memory_space<smem>>
    %54 = vector.broadcast %53 : f32 to vector<8x128xf32>
    %55 = arith.mulf %54, %32 : vector<8x128xf32>
    %56 = arith.addf %52, %55 : vector<8x128xf32>
    %c3_36 = arith.constant 3 : index
    %c0_37 = arith.constant 0 : index
    %57 = memref.load %arg7[%c3_36, %c0_37] : memref<4x32xf32, #tpu.memory_space<smem>>
    %58 = vector.broadcast %57 : f32 to vector<8x128xf32>
    %59 = arith.mulf %58, %41 : vector<8x128xf32>
    %60 = arith.addf %56, %59 : vector<8x128xf32>
    %cst_38 = arith.constant 0.000000e+00 : f32
    %61 = vector.broadcast %cst_38 : f32 to vector<8x128xf32>
    %62 = arith.maximumf %60, %61 : vector<8x128xf32>
    %c0_39 = arith.constant 0 : index
    %c0_40 = arith.constant 0 : index
    %63 = memref.load %arg8[%c0_39, %c0_40] : memref<4x32xf32, #tpu.memory_space<smem>>
    %64 = vector.broadcast %63 : f32 to vector<8x128xf32>
    %65 = arith.mulf %64, %62 : vector<8x128xf32>
    %66 = arith.addf %42, %65 : vector<8x128xf32>
    %c1_41 = arith.constant 1 : index
    %c0_42 = arith.constant 0 : index
    %67 = memref.load %arg8[%c1_41, %c0_42] : memref<4x32xf32, #tpu.memory_space<smem>>
    %68 = vector.broadcast %67 : f32 to vector<8x128xf32>
    %69 = arith.mulf %68, %62 : vector<8x128xf32>
    %70 = arith.addf %43, %69 : vector<8x128xf32>
    %c2_43 = arith.constant 2 : index
    %c0_44 = arith.constant 0 : index
    %71 = memref.load %arg8[%c2_43, %c0_44] : memref<4x32xf32, #tpu.memory_space<smem>>
    %72 = vector.broadcast %71 : f32 to vector<8x128xf32>
    %73 = arith.mulf %72, %62 : vector<8x128xf32>
    %74 = arith.addf %44, %73 : vector<8x128xf32>
    %c3_45 = arith.constant 3 : index
    %c0_46 = arith.constant 0 : index
    %75 = memref.load %arg8[%c3_45, %c0_46] : memref<4x32xf32, #tpu.memory_space<smem>>
    %76 = vector.broadcast %75 : f32 to vector<8x128xf32>
    %77 = arith.mulf %76, %62 : vector<8x128xf32>
    %78 = arith.addf %45, %77 : vector<8x128xf32>
    %c0_47 = arith.constant 0 : index
    %c1_48 = arith.constant 1 : index
    %79 = memref.load %arg7[%c0_47, %c1_48] : memref<4x32xf32, #tpu.memory_space<smem>>
    %80 = vector.broadcast %79 : f32 to vector<8x128xf32>
    %81 = arith.mulf %80, %14 : vector<8x128xf32>
    %c1_49 = arith.constant 1 : index
    %c1_50 = arith.constant 1 : index
    %82 = memref.load %arg7[%c1_49, %c1_50] : memref<4x32xf32, #tpu.memory_space<smem>>
    %83 = vector.broadcast %82 : f32 to vector<8x128xf32>
    %84 = arith.mulf %83, %23 : vector<8x128xf32>
    %85 = arith.addf %81, %84 : vector<8x128xf32>
    %c2_51 = arith.constant 2 : index
    %c1_52 = arith.constant 1 : index
    %86 = memref.load %arg7[%c2_51, %c1_52] : memref<4x32xf32, #tpu.memory_space<smem>>
    %87 = vector.broadcast %86 : f32 to vector<8x128xf32>
    %88 = arith.mulf %87, %32 : vector<8x128xf32>
    %89 = arith.addf %85, %88 : vector<8x128xf32>
    %c3_53 = arith.constant 3 : index
    %c1_54 = arith.constant 1 : index
    %90 = memref.load %arg7[%c3_53, %c1_54] : memref<4x32xf32, #tpu.memory_space<smem>>
    %91 = vector.broadcast %90 : f32 to vector<8x128xf32>
    %92 = arith.mulf %91, %41 : vector<8x128xf32>
    %93 = arith.addf %89, %92 : vector<8x128xf32>
    %cst_55 = arith.constant 0.000000e+00 : f32
    %94 = vector.broadcast %cst_55 : f32 to vector<8x128xf32>
    %95 = arith.maximumf %93, %94 : vector<8x128xf32>
    %c0_56 = arith.constant 0 : index
    %c1_57 = arith.constant 1 : index
    %96 = memref.load %arg8[%c0_56, %c1_57] : memref<4x32xf32, #tpu.memory_space<smem>>
    %97 = vector.broadcast %96 : f32 to vector<8x128xf32>
    %98 = arith.mulf %97, %95 : vector<8x128xf32>
    %99 = arith.addf %66, %98 : vector<8x128xf32>
    %c1_58 = arith.constant 1 : index
    %c1_59 = arith.constant 1 : index
    %100 = memref.load %arg8[%c1_58, %c1_59] : memref<4x32xf32, #tpu.memory_space<smem>>
    %101 = vector.broadcast %100 : f32 to vector<8x128xf32>
    %102 = arith.mulf %101, %95 : vector<8x128xf32>
    %103 = arith.addf %70, %102 : vector<8x128xf32>
    %c2_60 = arith.constant 2 : index
    %c1_61 = arith.constant 1 : index
    %104 = memref.load %arg8[%c2_60, %c1_61] : memref<4x32xf32, #tpu.memory_space<smem>>
    %105 = vector.broadcast %104 : f32 to vector<8x128xf32>
    %106 = arith.mulf %105, %95 : vector<8x128xf32>
    %107 = arith.addf %74, %106 : vector<8x128xf32>
    %c3_62 = arith.constant 3 : index
    %c1_63 = arith.constant 1 : index
    %108 = memref.load %arg8[%c3_62, %c1_63] : memref<4x32xf32, #tpu.memory_space<smem>>
    %109 = vector.broadcast %108 : f32 to vector<8x128xf32>
    %110 = arith.mulf %109, %95 : vector<8x128xf32>
    %111 = arith.addf %78, %110 : vector<8x128xf32>
    %c0_64 = arith.constant 0 : index
    %c2_65 = arith.constant 2 : index
    %112 = memref.load %arg7[%c0_64, %c2_65] : memref<4x32xf32, #tpu.memory_space<smem>>
    %113 = vector.broadcast %112 : f32 to vector<8x128xf32>
    %114 = arith.mulf %113, %14 : vector<8x128xf32>
    %c1_66 = arith.constant 1 : index
    %c2_67 = arith.constant 2 : index
    %115 = memref.load %arg7[%c1_66, %c2_67] : memref<4x32xf32, #tpu.memory_space<smem>>
    %116 = vector.broadcast %115 : f32 to vector<8x128xf32>
    %117 = arith.mulf %116, %23 : vector<8x128xf32>
    %118 = arith.addf %114, %117 : vector<8x128xf32>
    %c2_68 = arith.constant 2 : index
    %c2_69 = arith.constant 2 : index
    %119 = memref.load %arg7[%c2_68, %c2_69] : memref<4x32xf32, #tpu.memory_space<smem>>
    %120 = vector.broadcast %119 : f32 to vector<8x128xf32>
    %121 = arith.mulf %120, %32 : vector<8x128xf32>
    %122 = arith.addf %118, %121 : vector<8x128xf32>
    %c3_70 = arith.constant 3 : index
    %c2_71 = arith.constant 2 : index
    %123 = memref.load %arg7[%c3_70, %c2_71] : memref<4x32xf32, #tpu.memory_space<smem>>
    %124 = vector.broadcast %123 : f32 to vector<8x128xf32>
    %125 = arith.mulf %124, %41 : vector<8x128xf32>
    %126 = arith.addf %122, %125 : vector<8x128xf32>
    %cst_72 = arith.constant 0.000000e+00 : f32
    %127 = vector.broadcast %cst_72 : f32 to vector<8x128xf32>
    %128 = arith.maximumf %126, %127 : vector<8x128xf32>
    %c0_73 = arith.constant 0 : index
    %c2_74 = arith.constant 2 : index
    %129 = memref.load %arg8[%c0_73, %c2_74] : memref<4x32xf32, #tpu.memory_space<smem>>
    %130 = vector.broadcast %129 : f32 to vector<8x128xf32>
    %131 = arith.mulf %130, %128 : vector<8x128xf32>
    %132 = arith.addf %99, %131 : vector<8x128xf32>
    %c1_75 = arith.constant 1 : index
    %c2_76 = arith.constant 2 : index
    %133 = memref.load %arg8[%c1_75, %c2_76] : memref<4x32xf32, #tpu.memory_space<smem>>
    %134 = vector.broadcast %133 : f32 to vector<8x128xf32>
    %135 = arith.mulf %134, %128 : vector<8x128xf32>
    %136 = arith.addf %103, %135 : vector<8x128xf32>
    %c2_77 = arith.constant 2 : index
    %c2_78 = arith.constant 2 : index
    %137 = memref.load %arg8[%c2_77, %c2_78] : memref<4x32xf32, #tpu.memory_space<smem>>
    %138 = vector.broadcast %137 : f32 to vector<8x128xf32>
    %139 = arith.mulf %138, %128 : vector<8x128xf32>
    %140 = arith.addf %107, %139 : vector<8x128xf32>
    %c3_79 = arith.constant 3 : index
    %c2_80 = arith.constant 2 : index
    %141 = memref.load %arg8[%c3_79, %c2_80] : memref<4x32xf32, #tpu.memory_space<smem>>
    %142 = vector.broadcast %141 : f32 to vector<8x128xf32>
    %143 = arith.mulf %142, %128 : vector<8x128xf32>
    %144 = arith.addf %111, %143 : vector<8x128xf32>
    %c0_81 = arith.constant 0 : index
    %c3_82 = arith.constant 3 : index
    %145 = memref.load %arg7[%c0_81, %c3_82] : memref<4x32xf32, #tpu.memory_space<smem>>
    %146 = vector.broadcast %145 : f32 to vector<8x128xf32>
    %147 = arith.mulf %146, %14 : vector<8x128xf32>
    %c1_83 = arith.constant 1 : index
    %c3_84 = arith.constant 3 : index
    %148 = memref.load %arg7[%c1_83, %c3_84] : memref<4x32xf32, #tpu.memory_space<smem>>
    %149 = vector.broadcast %148 : f32 to vector<8x128xf32>
    %150 = arith.mulf %149, %23 : vector<8x128xf32>
    %151 = arith.addf %147, %150 : vector<8x128xf32>
    %c2_85 = arith.constant 2 : index
    %c3_86 = arith.constant 3 : index
    %152 = memref.load %arg7[%c2_85, %c3_86] : memref<4x32xf32, #tpu.memory_space<smem>>
    %153 = vector.broadcast %152 : f32 to vector<8x128xf32>
    %154 = arith.mulf %153, %32 : vector<8x128xf32>
    %155 = arith.addf %151, %154 : vector<8x128xf32>
    %c3_87 = arith.constant 3 : index
    %c3_88 = arith.constant 3 : index
    %156 = memref.load %arg7[%c3_87, %c3_88] : memref<4x32xf32, #tpu.memory_space<smem>>
    %157 = vector.broadcast %156 : f32 to vector<8x128xf32>
    %158 = arith.mulf %157, %41 : vector<8x128xf32>
    %159 = arith.addf %155, %158 : vector<8x128xf32>
    %cst_89 = arith.constant 0.000000e+00 : f32
    %160 = vector.broadcast %cst_89 : f32 to vector<8x128xf32>
    %161 = arith.maximumf %159, %160 : vector<8x128xf32>
    %c0_90 = arith.constant 0 : index
    %c3_91 = arith.constant 3 : index
    %162 = memref.load %arg8[%c0_90, %c3_91] : memref<4x32xf32, #tpu.memory_space<smem>>
    %163 = vector.broadcast %162 : f32 to vector<8x128xf32>
    %164 = arith.mulf %163, %161 : vector<8x128xf32>
    %165 = arith.addf %132, %164 : vector<8x128xf32>
    %c1_92 = arith.constant 1 : index
    %c3_93 = arith.constant 3 : index
    %166 = memref.load %arg8[%c1_92, %c3_93] : memref<4x32xf32, #tpu.memory_space<smem>>
    %167 = vector.broadcast %166 : f32 to vector<8x128xf32>
    %168 = arith.mulf %167, %161 : vector<8x128xf32>
    %169 = arith.addf %136, %168 : vector<8x128xf32>
    %c2_94 = arith.constant 2 : index
    %c3_95 = arith.constant 3 : index
    %170 = memref.load %arg8[%c2_94, %c3_95] : memref<4x32xf32, #tpu.memory_space<smem>>
    %171 = vector.broadcast %170 : f32 to vector<8x128xf32>
    %172 = arith.mulf %171, %161 : vector<8x128xf32>
    %173 = arith.addf %140, %172 : vector<8x128xf32>
    %c3_96 = arith.constant 3 : index
    %c3_97 = arith.constant 3 : index
    %174 = memref.load %arg8[%c3_96, %c3_97] : memref<4x32xf32, #tpu.memory_space<smem>>
    %175 = vector.broadcast %174 : f32 to vector<8x128xf32>
    %176 = arith.mulf %175, %161 : vector<8x128xf32>
    %177 = arith.addf %144, %176 : vector<8x128xf32>
    %c0_98 = arith.constant 0 : index
    %c4 = arith.constant 4 : index
    %178 = memref.load %arg7[%c0_98, %c4] : memref<4x32xf32, #tpu.memory_space<smem>>
    %179 = vector.broadcast %178 : f32 to vector<8x128xf32>
    %180 = arith.mulf %179, %14 : vector<8x128xf32>
    %c1_99 = arith.constant 1 : index
    %c4_100 = arith.constant 4 : index
    %181 = memref.load %arg7[%c1_99, %c4_100] : memref<4x32xf32, #tpu.memory_space<smem>>
    %182 = vector.broadcast %181 : f32 to vector<8x128xf32>
    %183 = arith.mulf %182, %23 : vector<8x128xf32>
    %184 = arith.addf %180, %183 : vector<8x128xf32>
    %c2_101 = arith.constant 2 : index
    %c4_102 = arith.constant 4 : index
    %185 = memref.load %arg7[%c2_101, %c4_102] : memref<4x32xf32, #tpu.memory_space<smem>>
    %186 = vector.broadcast %185 : f32 to vector<8x128xf32>
    %187 = arith.mulf %186, %32 : vector<8x128xf32>
    %188 = arith.addf %184, %187 : vector<8x128xf32>
    %c3_103 = arith.constant 3 : index
    %c4_104 = arith.constant 4 : index
    %189 = memref.load %arg7[%c3_103, %c4_104] : memref<4x32xf32, #tpu.memory_space<smem>>
    %190 = vector.broadcast %189 : f32 to vector<8x128xf32>
    %191 = arith.mulf %190, %41 : vector<8x128xf32>
    %192 = arith.addf %188, %191 : vector<8x128xf32>
    %cst_105 = arith.constant 0.000000e+00 : f32
    %193 = vector.broadcast %cst_105 : f32 to vector<8x128xf32>
    %194 = arith.maximumf %192, %193 : vector<8x128xf32>
    %c0_106 = arith.constant 0 : index
    %c4_107 = arith.constant 4 : index
    %195 = memref.load %arg8[%c0_106, %c4_107] : memref<4x32xf32, #tpu.memory_space<smem>>
    %196 = vector.broadcast %195 : f32 to vector<8x128xf32>
    %197 = arith.mulf %196, %194 : vector<8x128xf32>
    %198 = arith.addf %165, %197 : vector<8x128xf32>
    %c1_108 = arith.constant 1 : index
    %c4_109 = arith.constant 4 : index
    %199 = memref.load %arg8[%c1_108, %c4_109] : memref<4x32xf32, #tpu.memory_space<smem>>
    %200 = vector.broadcast %199 : f32 to vector<8x128xf32>
    %201 = arith.mulf %200, %194 : vector<8x128xf32>
    %202 = arith.addf %169, %201 : vector<8x128xf32>
    %c2_110 = arith.constant 2 : index
    %c4_111 = arith.constant 4 : index
    %203 = memref.load %arg8[%c2_110, %c4_111] : memref<4x32xf32, #tpu.memory_space<smem>>
    %204 = vector.broadcast %203 : f32 to vector<8x128xf32>
    %205 = arith.mulf %204, %194 : vector<8x128xf32>
    %206 = arith.addf %173, %205 : vector<8x128xf32>
    %c3_112 = arith.constant 3 : index
    %c4_113 = arith.constant 4 : index
    %207 = memref.load %arg8[%c3_112, %c4_113] : memref<4x32xf32, #tpu.memory_space<smem>>
    %208 = vector.broadcast %207 : f32 to vector<8x128xf32>
    %209 = arith.mulf %208, %194 : vector<8x128xf32>
    %210 = arith.addf %177, %209 : vector<8x128xf32>
    %c0_114 = arith.constant 0 : index
    %c5 = arith.constant 5 : index
    %211 = memref.load %arg7[%c0_114, %c5] : memref<4x32xf32, #tpu.memory_space<smem>>
    %212 = vector.broadcast %211 : f32 to vector<8x128xf32>
    %213 = arith.mulf %212, %14 : vector<8x128xf32>
    %c1_115 = arith.constant 1 : index
    %c5_116 = arith.constant 5 : index
    %214 = memref.load %arg7[%c1_115, %c5_116] : memref<4x32xf32, #tpu.memory_space<smem>>
    %215 = vector.broadcast %214 : f32 to vector<8x128xf32>
    %216 = arith.mulf %215, %23 : vector<8x128xf32>
    %217 = arith.addf %213, %216 : vector<8x128xf32>
    %c2_117 = arith.constant 2 : index
    %c5_118 = arith.constant 5 : index
    %218 = memref.load %arg7[%c2_117, %c5_118] : memref<4x32xf32, #tpu.memory_space<smem>>
    %219 = vector.broadcast %218 : f32 to vector<8x128xf32>
    %220 = arith.mulf %219, %32 : vector<8x128xf32>
    %221 = arith.addf %217, %220 : vector<8x128xf32>
    %c3_119 = arith.constant 3 : index
    %c5_120 = arith.constant 5 : index
    %222 = memref.load %arg7[%c3_119, %c5_120] : memref<4x32xf32, #tpu.memory_space<smem>>
    %223 = vector.broadcast %222 : f32 to vector<8x128xf32>
    %224 = arith.mulf %223, %41 : vector<8x128xf32>
    %225 = arith.addf %221, %224 : vector<8x128xf32>
    %cst_121 = arith.constant 0.000000e+00 : f32
    %226 = vector.broadcast %cst_121 : f32 to vector<8x128xf32>
    %227 = arith.maximumf %225, %226 : vector<8x128xf32>
    %c0_122 = arith.constant 0 : index
    %c5_123 = arith.constant 5 : index
    %228 = memref.load %arg8[%c0_122, %c5_123] : memref<4x32xf32, #tpu.memory_space<smem>>
    %229 = vector.broadcast %228 : f32 to vector<8x128xf32>
    %230 = arith.mulf %229, %227 : vector<8x128xf32>
    %231 = arith.addf %198, %230 : vector<8x128xf32>
    %c1_124 = arith.constant 1 : index
    %c5_125 = arith.constant 5 : index
    %232 = memref.load %arg8[%c1_124, %c5_125] : memref<4x32xf32, #tpu.memory_space<smem>>
    %233 = vector.broadcast %232 : f32 to vector<8x128xf32>
    %234 = arith.mulf %233, %227 : vector<8x128xf32>
    %235 = arith.addf %202, %234 : vector<8x128xf32>
    %c2_126 = arith.constant 2 : index
    %c5_127 = arith.constant 5 : index
    %236 = memref.load %arg8[%c2_126, %c5_127] : memref<4x32xf32, #tpu.memory_space<smem>>
    %237 = vector.broadcast %236 : f32 to vector<8x128xf32>
    %238 = arith.mulf %237, %227 : vector<8x128xf32>
    %239 = arith.addf %206, %238 : vector<8x128xf32>
    %c3_128 = arith.constant 3 : index
    %c5_129 = arith.constant 5 : index
    %240 = memref.load %arg8[%c3_128, %c5_129] : memref<4x32xf32, #tpu.memory_space<smem>>
    %241 = vector.broadcast %240 : f32 to vector<8x128xf32>
    %242 = arith.mulf %241, %227 : vector<8x128xf32>
    %243 = arith.addf %210, %242 : vector<8x128xf32>
    %c0_130 = arith.constant 0 : index
    %c6 = arith.constant 6 : index
    %244 = memref.load %arg7[%c0_130, %c6] : memref<4x32xf32, #tpu.memory_space<smem>>
    %245 = vector.broadcast %244 : f32 to vector<8x128xf32>
    %246 = arith.mulf %245, %14 : vector<8x128xf32>
    %c1_131 = arith.constant 1 : index
    %c6_132 = arith.constant 6 : index
    %247 = memref.load %arg7[%c1_131, %c6_132] : memref<4x32xf32, #tpu.memory_space<smem>>
    %248 = vector.broadcast %247 : f32 to vector<8x128xf32>
    %249 = arith.mulf %248, %23 : vector<8x128xf32>
    %250 = arith.addf %246, %249 : vector<8x128xf32>
    %c2_133 = arith.constant 2 : index
    %c6_134 = arith.constant 6 : index
    %251 = memref.load %arg7[%c2_133, %c6_134] : memref<4x32xf32, #tpu.memory_space<smem>>
    %252 = vector.broadcast %251 : f32 to vector<8x128xf32>
    %253 = arith.mulf %252, %32 : vector<8x128xf32>
    %254 = arith.addf %250, %253 : vector<8x128xf32>
    %c3_135 = arith.constant 3 : index
    %c6_136 = arith.constant 6 : index
    %255 = memref.load %arg7[%c3_135, %c6_136] : memref<4x32xf32, #tpu.memory_space<smem>>
    %256 = vector.broadcast %255 : f32 to vector<8x128xf32>
    %257 = arith.mulf %256, %41 : vector<8x128xf32>
    %258 = arith.addf %254, %257 : vector<8x128xf32>
    %cst_137 = arith.constant 0.000000e+00 : f32
    %259 = vector.broadcast %cst_137 : f32 to vector<8x128xf32>
    %260 = arith.maximumf %258, %259 : vector<8x128xf32>
    %c0_138 = arith.constant 0 : index
    %c6_139 = arith.constant 6 : index
    %261 = memref.load %arg8[%c0_138, %c6_139] : memref<4x32xf32, #tpu.memory_space<smem>>
    %262 = vector.broadcast %261 : f32 to vector<8x128xf32>
    %263 = arith.mulf %262, %260 : vector<8x128xf32>
    %264 = arith.addf %231, %263 : vector<8x128xf32>
    %c1_140 = arith.constant 1 : index
    %c6_141 = arith.constant 6 : index
    %265 = memref.load %arg8[%c1_140, %c6_141] : memref<4x32xf32, #tpu.memory_space<smem>>
    %266 = vector.broadcast %265 : f32 to vector<8x128xf32>
    %267 = arith.mulf %266, %260 : vector<8x128xf32>
    %268 = arith.addf %235, %267 : vector<8x128xf32>
    %c2_142 = arith.constant 2 : index
    %c6_143 = arith.constant 6 : index
    %269 = memref.load %arg8[%c2_142, %c6_143] : memref<4x32xf32, #tpu.memory_space<smem>>
    %270 = vector.broadcast %269 : f32 to vector<8x128xf32>
    %271 = arith.mulf %270, %260 : vector<8x128xf32>
    %272 = arith.addf %239, %271 : vector<8x128xf32>
    %c3_144 = arith.constant 3 : index
    %c6_145 = arith.constant 6 : index
    %273 = memref.load %arg8[%c3_144, %c6_145] : memref<4x32xf32, #tpu.memory_space<smem>>
    %274 = vector.broadcast %273 : f32 to vector<8x128xf32>
    %275 = arith.mulf %274, %260 : vector<8x128xf32>
    %276 = arith.addf %243, %275 : vector<8x128xf32>
    %c0_146 = arith.constant 0 : index
    %c7 = arith.constant 7 : index
    %277 = memref.load %arg7[%c0_146, %c7] : memref<4x32xf32, #tpu.memory_space<smem>>
    %278 = vector.broadcast %277 : f32 to vector<8x128xf32>
    %279 = arith.mulf %278, %14 : vector<8x128xf32>
    %c1_147 = arith.constant 1 : index
    %c7_148 = arith.constant 7 : index
    %280 = memref.load %arg7[%c1_147, %c7_148] : memref<4x32xf32, #tpu.memory_space<smem>>
    %281 = vector.broadcast %280 : f32 to vector<8x128xf32>
    %282 = arith.mulf %281, %23 : vector<8x128xf32>
    %283 = arith.addf %279, %282 : vector<8x128xf32>
    %c2_149 = arith.constant 2 : index
    %c7_150 = arith.constant 7 : index
    %284 = memref.load %arg7[%c2_149, %c7_150] : memref<4x32xf32, #tpu.memory_space<smem>>
    %285 = vector.broadcast %284 : f32 to vector<8x128xf32>
    %286 = arith.mulf %285, %32 : vector<8x128xf32>
    %287 = arith.addf %283, %286 : vector<8x128xf32>
    %c3_151 = arith.constant 3 : index
    %c7_152 = arith.constant 7 : index
    %288 = memref.load %arg7[%c3_151, %c7_152] : memref<4x32xf32, #tpu.memory_space<smem>>
    %289 = vector.broadcast %288 : f32 to vector<8x128xf32>
    %290 = arith.mulf %289, %41 : vector<8x128xf32>
    %291 = arith.addf %287, %290 : vector<8x128xf32>
    %cst_153 = arith.constant 0.000000e+00 : f32
    %292 = vector.broadcast %cst_153 : f32 to vector<8x128xf32>
    %293 = arith.maximumf %291, %292 : vector<8x128xf32>
    %c0_154 = arith.constant 0 : index
    %c7_155 = arith.constant 7 : index
    %294 = memref.load %arg8[%c0_154, %c7_155] : memref<4x32xf32, #tpu.memory_space<smem>>
    %295 = vector.broadcast %294 : f32 to vector<8x128xf32>
    %296 = arith.mulf %295, %293 : vector<8x128xf32>
    %297 = arith.addf %264, %296 : vector<8x128xf32>
    %c1_156 = arith.constant 1 : index
    %c7_157 = arith.constant 7 : index
    %298 = memref.load %arg8[%c1_156, %c7_157] : memref<4x32xf32, #tpu.memory_space<smem>>
    %299 = vector.broadcast %298 : f32 to vector<8x128xf32>
    %300 = arith.mulf %299, %293 : vector<8x128xf32>
    %301 = arith.addf %268, %300 : vector<8x128xf32>
    %c2_158 = arith.constant 2 : index
    %c7_159 = arith.constant 7 : index
    %302 = memref.load %arg8[%c2_158, %c7_159] : memref<4x32xf32, #tpu.memory_space<smem>>
    %303 = vector.broadcast %302 : f32 to vector<8x128xf32>
    %304 = arith.mulf %303, %293 : vector<8x128xf32>
    %305 = arith.addf %272, %304 : vector<8x128xf32>
    %c3_160 = arith.constant 3 : index
    %c7_161 = arith.constant 7 : index
    %306 = memref.load %arg8[%c3_160, %c7_161] : memref<4x32xf32, #tpu.memory_space<smem>>
    %307 = vector.broadcast %306 : f32 to vector<8x128xf32>
    %308 = arith.mulf %307, %293 : vector<8x128xf32>
    %309 = arith.addf %276, %308 : vector<8x128xf32>
    %c0_162 = arith.constant 0 : index
    %c8 = arith.constant 8 : index
    %310 = memref.load %arg7[%c0_162, %c8] : memref<4x32xf32, #tpu.memory_space<smem>>
    %311 = vector.broadcast %310 : f32 to vector<8x128xf32>
    %312 = arith.mulf %311, %14 : vector<8x128xf32>
    %c1_163 = arith.constant 1 : index
    %c8_164 = arith.constant 8 : index
    %313 = memref.load %arg7[%c1_163, %c8_164] : memref<4x32xf32, #tpu.memory_space<smem>>
    %314 = vector.broadcast %313 : f32 to vector<8x128xf32>
    %315 = arith.mulf %314, %23 : vector<8x128xf32>
    %316 = arith.addf %312, %315 : vector<8x128xf32>
    %c2_165 = arith.constant 2 : index
    %c8_166 = arith.constant 8 : index
    %317 = memref.load %arg7[%c2_165, %c8_166] : memref<4x32xf32, #tpu.memory_space<smem>>
    %318 = vector.broadcast %317 : f32 to vector<8x128xf32>
    %319 = arith.mulf %318, %32 : vector<8x128xf32>
    %320 = arith.addf %316, %319 : vector<8x128xf32>
    %c3_167 = arith.constant 3 : index
    %c8_168 = arith.constant 8 : index
    %321 = memref.load %arg7[%c3_167, %c8_168] : memref<4x32xf32, #tpu.memory_space<smem>>
    %322 = vector.broadcast %321 : f32 to vector<8x128xf32>
    %323 = arith.mulf %322, %41 : vector<8x128xf32>
    %324 = arith.addf %320, %323 : vector<8x128xf32>
    %cst_169 = arith.constant 0.000000e+00 : f32
    %325 = vector.broadcast %cst_169 : f32 to vector<8x128xf32>
    %326 = arith.maximumf %324, %325 : vector<8x128xf32>
    %c0_170 = arith.constant 0 : index
    %c8_171 = arith.constant 8 : index
    %327 = memref.load %arg8[%c0_170, %c8_171] : memref<4x32xf32, #tpu.memory_space<smem>>
    %328 = vector.broadcast %327 : f32 to vector<8x128xf32>
    %329 = arith.mulf %328, %326 : vector<8x128xf32>
    %330 = arith.addf %297, %329 : vector<8x128xf32>
    %c1_172 = arith.constant 1 : index
    %c8_173 = arith.constant 8 : index
    %331 = memref.load %arg8[%c1_172, %c8_173] : memref<4x32xf32, #tpu.memory_space<smem>>
    %332 = vector.broadcast %331 : f32 to vector<8x128xf32>
    %333 = arith.mulf %332, %326 : vector<8x128xf32>
    %334 = arith.addf %301, %333 : vector<8x128xf32>
    %c2_174 = arith.constant 2 : index
    %c8_175 = arith.constant 8 : index
    %335 = memref.load %arg8[%c2_174, %c8_175] : memref<4x32xf32, #tpu.memory_space<smem>>
    %336 = vector.broadcast %335 : f32 to vector<8x128xf32>
    %337 = arith.mulf %336, %326 : vector<8x128xf32>
    %338 = arith.addf %305, %337 : vector<8x128xf32>
    %c3_176 = arith.constant 3 : index
    %c8_177 = arith.constant 8 : index
    %339 = memref.load %arg8[%c3_176, %c8_177] : memref<4x32xf32, #tpu.memory_space<smem>>
    %340 = vector.broadcast %339 : f32 to vector<8x128xf32>
    %341 = arith.mulf %340, %326 : vector<8x128xf32>
    %342 = arith.addf %309, %341 : vector<8x128xf32>
    %c0_178 = arith.constant 0 : index
    %c9 = arith.constant 9 : index
    %343 = memref.load %arg7[%c0_178, %c9] : memref<4x32xf32, #tpu.memory_space<smem>>
    %344 = vector.broadcast %343 : f32 to vector<8x128xf32>
    %345 = arith.mulf %344, %14 : vector<8x128xf32>
    %c1_179 = arith.constant 1 : index
    %c9_180 = arith.constant 9 : index
    %346 = memref.load %arg7[%c1_179, %c9_180] : memref<4x32xf32, #tpu.memory_space<smem>>
    %347 = vector.broadcast %346 : f32 to vector<8x128xf32>
    %348 = arith.mulf %347, %23 : vector<8x128xf32>
    %349 = arith.addf %345, %348 : vector<8x128xf32>
    %c2_181 = arith.constant 2 : index
    %c9_182 = arith.constant 9 : index
    %350 = memref.load %arg7[%c2_181, %c9_182] : memref<4x32xf32, #tpu.memory_space<smem>>
    %351 = vector.broadcast %350 : f32 to vector<8x128xf32>
    %352 = arith.mulf %351, %32 : vector<8x128xf32>
    %353 = arith.addf %349, %352 : vector<8x128xf32>
    %c3_183 = arith.constant 3 : index
    %c9_184 = arith.constant 9 : index
    %354 = memref.load %arg7[%c3_183, %c9_184] : memref<4x32xf32, #tpu.memory_space<smem>>
    %355 = vector.broadcast %354 : f32 to vector<8x128xf32>
    %356 = arith.mulf %355, %41 : vector<8x128xf32>
    %357 = arith.addf %353, %356 : vector<8x128xf32>
    %cst_185 = arith.constant 0.000000e+00 : f32
    %358 = vector.broadcast %cst_185 : f32 to vector<8x128xf32>
    %359 = arith.maximumf %357, %358 : vector<8x128xf32>
    %c0_186 = arith.constant 0 : index
    %c9_187 = arith.constant 9 : index
    %360 = memref.load %arg8[%c0_186, %c9_187] : memref<4x32xf32, #tpu.memory_space<smem>>
    %361 = vector.broadcast %360 : f32 to vector<8x128xf32>
    %362 = arith.mulf %361, %359 : vector<8x128xf32>
    %363 = arith.addf %330, %362 : vector<8x128xf32>
    %c1_188 = arith.constant 1 : index
    %c9_189 = arith.constant 9 : index
    %364 = memref.load %arg8[%c1_188, %c9_189] : memref<4x32xf32, #tpu.memory_space<smem>>
    %365 = vector.broadcast %364 : f32 to vector<8x128xf32>
    %366 = arith.mulf %365, %359 : vector<8x128xf32>
    %367 = arith.addf %334, %366 : vector<8x128xf32>
    %c2_190 = arith.constant 2 : index
    %c9_191 = arith.constant 9 : index
    %368 = memref.load %arg8[%c2_190, %c9_191] : memref<4x32xf32, #tpu.memory_space<smem>>
    %369 = vector.broadcast %368 : f32 to vector<8x128xf32>
    %370 = arith.mulf %369, %359 : vector<8x128xf32>
    %371 = arith.addf %338, %370 : vector<8x128xf32>
    %c3_192 = arith.constant 3 : index
    %c9_193 = arith.constant 9 : index
    %372 = memref.load %arg8[%c3_192, %c9_193] : memref<4x32xf32, #tpu.memory_space<smem>>
    %373 = vector.broadcast %372 : f32 to vector<8x128xf32>
    %374 = arith.mulf %373, %359 : vector<8x128xf32>
    %375 = arith.addf %342, %374 : vector<8x128xf32>
    %c0_194 = arith.constant 0 : index
    %c10 = arith.constant 10 : index
    %376 = memref.load %arg7[%c0_194, %c10] : memref<4x32xf32, #tpu.memory_space<smem>>
    %377 = vector.broadcast %376 : f32 to vector<8x128xf32>
    %378 = arith.mulf %377, %14 : vector<8x128xf32>
    %c1_195 = arith.constant 1 : index
    %c10_196 = arith.constant 10 : index
    %379 = memref.load %arg7[%c1_195, %c10_196] : memref<4x32xf32, #tpu.memory_space<smem>>
    %380 = vector.broadcast %379 : f32 to vector<8x128xf32>
    %381 = arith.mulf %380, %23 : vector<8x128xf32>
    %382 = arith.addf %378, %381 : vector<8x128xf32>
    %c2_197 = arith.constant 2 : index
    %c10_198 = arith.constant 10 : index
    %383 = memref.load %arg7[%c2_197, %c10_198] : memref<4x32xf32, #tpu.memory_space<smem>>
    %384 = vector.broadcast %383 : f32 to vector<8x128xf32>
    %385 = arith.mulf %384, %32 : vector<8x128xf32>
    %386 = arith.addf %382, %385 : vector<8x128xf32>
    %c3_199 = arith.constant 3 : index
    %c10_200 = arith.constant 10 : index
    %387 = memref.load %arg7[%c3_199, %c10_200] : memref<4x32xf32, #tpu.memory_space<smem>>
    %388 = vector.broadcast %387 : f32 to vector<8x128xf32>
    %389 = arith.mulf %388, %41 : vector<8x128xf32>
    %390 = arith.addf %386, %389 : vector<8x128xf32>
    %cst_201 = arith.constant 0.000000e+00 : f32
    %391 = vector.broadcast %cst_201 : f32 to vector<8x128xf32>
    %392 = arith.maximumf %390, %391 : vector<8x128xf32>
    %c0_202 = arith.constant 0 : index
    %c10_203 = arith.constant 10 : index
    %393 = memref.load %arg8[%c0_202, %c10_203] : memref<4x32xf32, #tpu.memory_space<smem>>
    %394 = vector.broadcast %393 : f32 to vector<8x128xf32>
    %395 = arith.mulf %394, %392 : vector<8x128xf32>
    %396 = arith.addf %363, %395 : vector<8x128xf32>
    %c1_204 = arith.constant 1 : index
    %c10_205 = arith.constant 10 : index
    %397 = memref.load %arg8[%c1_204, %c10_205] : memref<4x32xf32, #tpu.memory_space<smem>>
    %398 = vector.broadcast %397 : f32 to vector<8x128xf32>
    %399 = arith.mulf %398, %392 : vector<8x128xf32>
    %400 = arith.addf %367, %399 : vector<8x128xf32>
    %c2_206 = arith.constant 2 : index
    %c10_207 = arith.constant 10 : index
    %401 = memref.load %arg8[%c2_206, %c10_207] : memref<4x32xf32, #tpu.memory_space<smem>>
    %402 = vector.broadcast %401 : f32 to vector<8x128xf32>
    %403 = arith.mulf %402, %392 : vector<8x128xf32>
    %404 = arith.addf %371, %403 : vector<8x128xf32>
    %c3_208 = arith.constant 3 : index
    %c10_209 = arith.constant 10 : index
    %405 = memref.load %arg8[%c3_208, %c10_209] : memref<4x32xf32, #tpu.memory_space<smem>>
    %406 = vector.broadcast %405 : f32 to vector<8x128xf32>
    %407 = arith.mulf %406, %392 : vector<8x128xf32>
    %408 = arith.addf %375, %407 : vector<8x128xf32>
    %c0_210 = arith.constant 0 : index
    %c11 = arith.constant 11 : index
    %409 = memref.load %arg7[%c0_210, %c11] : memref<4x32xf32, #tpu.memory_space<smem>>
    %410 = vector.broadcast %409 : f32 to vector<8x128xf32>
    %411 = arith.mulf %410, %14 : vector<8x128xf32>
    %c1_211 = arith.constant 1 : index
    %c11_212 = arith.constant 11 : index
    %412 = memref.load %arg7[%c1_211, %c11_212] : memref<4x32xf32, #tpu.memory_space<smem>>
    %413 = vector.broadcast %412 : f32 to vector<8x128xf32>
    %414 = arith.mulf %413, %23 : vector<8x128xf32>
    %415 = arith.addf %411, %414 : vector<8x128xf32>
    %c2_213 = arith.constant 2 : index
    %c11_214 = arith.constant 11 : index
    %416 = memref.load %arg7[%c2_213, %c11_214] : memref<4x32xf32, #tpu.memory_space<smem>>
    %417 = vector.broadcast %416 : f32 to vector<8x128xf32>
    %418 = arith.mulf %417, %32 : vector<8x128xf32>
    %419 = arith.addf %415, %418 : vector<8x128xf32>
    %c3_215 = arith.constant 3 : index
    %c11_216 = arith.constant 11 : index
    %420 = memref.load %arg7[%c3_215, %c11_216] : memref<4x32xf32, #tpu.memory_space<smem>>
    %421 = vector.broadcast %420 : f32 to vector<8x128xf32>
    %422 = arith.mulf %421, %41 : vector<8x128xf32>
    %423 = arith.addf %419, %422 : vector<8x128xf32>
    %cst_217 = arith.constant 0.000000e+00 : f32
    %424 = vector.broadcast %cst_217 : f32 to vector<8x128xf32>
    %425 = arith.maximumf %423, %424 : vector<8x128xf32>
    %c0_218 = arith.constant 0 : index
    %c11_219 = arith.constant 11 : index
    %426 = memref.load %arg8[%c0_218, %c11_219] : memref<4x32xf32, #tpu.memory_space<smem>>
    %427 = vector.broadcast %426 : f32 to vector<8x128xf32>
    %428 = arith.mulf %427, %425 : vector<8x128xf32>
    %429 = arith.addf %396, %428 : vector<8x128xf32>
    %c1_220 = arith.constant 1 : index
    %c11_221 = arith.constant 11 : index
    %430 = memref.load %arg8[%c1_220, %c11_221] : memref<4x32xf32, #tpu.memory_space<smem>>
    %431 = vector.broadcast %430 : f32 to vector<8x128xf32>
    %432 = arith.mulf %431, %425 : vector<8x128xf32>
    %433 = arith.addf %400, %432 : vector<8x128xf32>
    %c2_222 = arith.constant 2 : index
    %c11_223 = arith.constant 11 : index
    %434 = memref.load %arg8[%c2_222, %c11_223] : memref<4x32xf32, #tpu.memory_space<smem>>
    %435 = vector.broadcast %434 : f32 to vector<8x128xf32>
    %436 = arith.mulf %435, %425 : vector<8x128xf32>
    %437 = arith.addf %404, %436 : vector<8x128xf32>
    %c3_224 = arith.constant 3 : index
    %c11_225 = arith.constant 11 : index
    %438 = memref.load %arg8[%c3_224, %c11_225] : memref<4x32xf32, #tpu.memory_space<smem>>
    %439 = vector.broadcast %438 : f32 to vector<8x128xf32>
    %440 = arith.mulf %439, %425 : vector<8x128xf32>
    %441 = arith.addf %408, %440 : vector<8x128xf32>
    %c0_226 = arith.constant 0 : index
    %c12 = arith.constant 12 : index
    %442 = memref.load %arg7[%c0_226, %c12] : memref<4x32xf32, #tpu.memory_space<smem>>
    %443 = vector.broadcast %442 : f32 to vector<8x128xf32>
    %444 = arith.mulf %443, %14 : vector<8x128xf32>
    %c1_227 = arith.constant 1 : index
    %c12_228 = arith.constant 12 : index
    %445 = memref.load %arg7[%c1_227, %c12_228] : memref<4x32xf32, #tpu.memory_space<smem>>
    %446 = vector.broadcast %445 : f32 to vector<8x128xf32>
    %447 = arith.mulf %446, %23 : vector<8x128xf32>
    %448 = arith.addf %444, %447 : vector<8x128xf32>
    %c2_229 = arith.constant 2 : index
    %c12_230 = arith.constant 12 : index
    %449 = memref.load %arg7[%c2_229, %c12_230] : memref<4x32xf32, #tpu.memory_space<smem>>
    %450 = vector.broadcast %449 : f32 to vector<8x128xf32>
    %451 = arith.mulf %450, %32 : vector<8x128xf32>
    %452 = arith.addf %448, %451 : vector<8x128xf32>
    %c3_231 = arith.constant 3 : index
    %c12_232 = arith.constant 12 : index
    %453 = memref.load %arg7[%c3_231, %c12_232] : memref<4x32xf32, #tpu.memory_space<smem>>
    %454 = vector.broadcast %453 : f32 to vector<8x128xf32>
    %455 = arith.mulf %454, %41 : vector<8x128xf32>
    %456 = arith.addf %452, %455 : vector<8x128xf32>
    %cst_233 = arith.constant 0.000000e+00 : f32
    %457 = vector.broadcast %cst_233 : f32 to vector<8x128xf32>
    %458 = arith.maximumf %456, %457 : vector<8x128xf32>
    %c0_234 = arith.constant 0 : index
    %c12_235 = arith.constant 12 : index
    %459 = memref.load %arg8[%c0_234, %c12_235] : memref<4x32xf32, #tpu.memory_space<smem>>
    %460 = vector.broadcast %459 : f32 to vector<8x128xf32>
    %461 = arith.mulf %460, %458 : vector<8x128xf32>
    %462 = arith.addf %429, %461 : vector<8x128xf32>
    %c1_236 = arith.constant 1 : index
    %c12_237 = arith.constant 12 : index
    %463 = memref.load %arg8[%c1_236, %c12_237] : memref<4x32xf32, #tpu.memory_space<smem>>
    %464 = vector.broadcast %463 : f32 to vector<8x128xf32>
    %465 = arith.mulf %464, %458 : vector<8x128xf32>
    %466 = arith.addf %433, %465 : vector<8x128xf32>
    %c2_238 = arith.constant 2 : index
    %c12_239 = arith.constant 12 : index
    %467 = memref.load %arg8[%c2_238, %c12_239] : memref<4x32xf32, #tpu.memory_space<smem>>
    %468 = vector.broadcast %467 : f32 to vector<8x128xf32>
    %469 = arith.mulf %468, %458 : vector<8x128xf32>
    %470 = arith.addf %437, %469 : vector<8x128xf32>
    %c3_240 = arith.constant 3 : index
    %c12_241 = arith.constant 12 : index
    %471 = memref.load %arg8[%c3_240, %c12_241] : memref<4x32xf32, #tpu.memory_space<smem>>
    %472 = vector.broadcast %471 : f32 to vector<8x128xf32>
    %473 = arith.mulf %472, %458 : vector<8x128xf32>
    %474 = arith.addf %441, %473 : vector<8x128xf32>
    %c0_242 = arith.constant 0 : index
    %c13 = arith.constant 13 : index
    %475 = memref.load %arg7[%c0_242, %c13] : memref<4x32xf32, #tpu.memory_space<smem>>
    %476 = vector.broadcast %475 : f32 to vector<8x128xf32>
    %477 = arith.mulf %476, %14 : vector<8x128xf32>
    %c1_243 = arith.constant 1 : index
    %c13_244 = arith.constant 13 : index
    %478 = memref.load %arg7[%c1_243, %c13_244] : memref<4x32xf32, #tpu.memory_space<smem>>
    %479 = vector.broadcast %478 : f32 to vector<8x128xf32>
    %480 = arith.mulf %479, %23 : vector<8x128xf32>
    %481 = arith.addf %477, %480 : vector<8x128xf32>
    %c2_245 = arith.constant 2 : index
    %c13_246 = arith.constant 13 : index
    %482 = memref.load %arg7[%c2_245, %c13_246] : memref<4x32xf32, #tpu.memory_space<smem>>
    %483 = vector.broadcast %482 : f32 to vector<8x128xf32>
    %484 = arith.mulf %483, %32 : vector<8x128xf32>
    %485 = arith.addf %481, %484 : vector<8x128xf32>
    %c3_247 = arith.constant 3 : index
    %c13_248 = arith.constant 13 : index
    %486 = memref.load %arg7[%c3_247, %c13_248] : memref<4x32xf32, #tpu.memory_space<smem>>
    %487 = vector.broadcast %486 : f32 to vector<8x128xf32>
    %488 = arith.mulf %487, %41 : vector<8x128xf32>
    %489 = arith.addf %485, %488 : vector<8x128xf32>
    %cst_249 = arith.constant 0.000000e+00 : f32
    %490 = vector.broadcast %cst_249 : f32 to vector<8x128xf32>
    %491 = arith.maximumf %489, %490 : vector<8x128xf32>
    %c0_250 = arith.constant 0 : index
    %c13_251 = arith.constant 13 : index
    %492 = memref.load %arg8[%c0_250, %c13_251] : memref<4x32xf32, #tpu.memory_space<smem>>
    %493 = vector.broadcast %492 : f32 to vector<8x128xf32>
    %494 = arith.mulf %493, %491 : vector<8x128xf32>
    %495 = arith.addf %462, %494 : vector<8x128xf32>
    %c1_252 = arith.constant 1 : index
    %c13_253 = arith.constant 13 : index
    %496 = memref.load %arg8[%c1_252, %c13_253] : memref<4x32xf32, #tpu.memory_space<smem>>
    %497 = vector.broadcast %496 : f32 to vector<8x128xf32>
    %498 = arith.mulf %497, %491 : vector<8x128xf32>
    %499 = arith.addf %466, %498 : vector<8x128xf32>
    %c2_254 = arith.constant 2 : index
    %c13_255 = arith.constant 13 : index
    %500 = memref.load %arg8[%c2_254, %c13_255] : memref<4x32xf32, #tpu.memory_space<smem>>
    %501 = vector.broadcast %500 : f32 to vector<8x128xf32>
    %502 = arith.mulf %501, %491 : vector<8x128xf32>
    %503 = arith.addf %470, %502 : vector<8x128xf32>
    %c3_256 = arith.constant 3 : index
    %c13_257 = arith.constant 13 : index
    %504 = memref.load %arg8[%c3_256, %c13_257] : memref<4x32xf32, #tpu.memory_space<smem>>
    %505 = vector.broadcast %504 : f32 to vector<8x128xf32>
    %506 = arith.mulf %505, %491 : vector<8x128xf32>
    %507 = arith.addf %474, %506 : vector<8x128xf32>
    %c0_258 = arith.constant 0 : index
    %c14 = arith.constant 14 : index
    %508 = memref.load %arg7[%c0_258, %c14] : memref<4x32xf32, #tpu.memory_space<smem>>
    %509 = vector.broadcast %508 : f32 to vector<8x128xf32>
    %510 = arith.mulf %509, %14 : vector<8x128xf32>
    %c1_259 = arith.constant 1 : index
    %c14_260 = arith.constant 14 : index
    %511 = memref.load %arg7[%c1_259, %c14_260] : memref<4x32xf32, #tpu.memory_space<smem>>
    %512 = vector.broadcast %511 : f32 to vector<8x128xf32>
    %513 = arith.mulf %512, %23 : vector<8x128xf32>
    %514 = arith.addf %510, %513 : vector<8x128xf32>
    %c2_261 = arith.constant 2 : index
    %c14_262 = arith.constant 14 : index
    %515 = memref.load %arg7[%c2_261, %c14_262] : memref<4x32xf32, #tpu.memory_space<smem>>
    %516 = vector.broadcast %515 : f32 to vector<8x128xf32>
    %517 = arith.mulf %516, %32 : vector<8x128xf32>
    %518 = arith.addf %514, %517 : vector<8x128xf32>
    %c3_263 = arith.constant 3 : index
    %c14_264 = arith.constant 14 : index
    %519 = memref.load %arg7[%c3_263, %c14_264] : memref<4x32xf32, #tpu.memory_space<smem>>
    %520 = vector.broadcast %519 : f32 to vector<8x128xf32>
    %521 = arith.mulf %520, %41 : vector<8x128xf32>
    %522 = arith.addf %518, %521 : vector<8x128xf32>
    %cst_265 = arith.constant 0.000000e+00 : f32
    %523 = vector.broadcast %cst_265 : f32 to vector<8x128xf32>
    %524 = arith.maximumf %522, %523 : vector<8x128xf32>
    %c0_266 = arith.constant 0 : index
    %c14_267 = arith.constant 14 : index
    %525 = memref.load %arg8[%c0_266, %c14_267] : memref<4x32xf32, #tpu.memory_space<smem>>
    %526 = vector.broadcast %525 : f32 to vector<8x128xf32>
    %527 = arith.mulf %526, %524 : vector<8x128xf32>
    %528 = arith.addf %495, %527 : vector<8x128xf32>
    %c1_268 = arith.constant 1 : index
    %c14_269 = arith.constant 14 : index
    %529 = memref.load %arg8[%c1_268, %c14_269] : memref<4x32xf32, #tpu.memory_space<smem>>
    %530 = vector.broadcast %529 : f32 to vector<8x128xf32>
    %531 = arith.mulf %530, %524 : vector<8x128xf32>
    %532 = arith.addf %499, %531 : vector<8x128xf32>
    %c2_270 = arith.constant 2 : index
    %c14_271 = arith.constant 14 : index
    %533 = memref.load %arg8[%c2_270, %c14_271] : memref<4x32xf32, #tpu.memory_space<smem>>
    %534 = vector.broadcast %533 : f32 to vector<8x128xf32>
    %535 = arith.mulf %534, %524 : vector<8x128xf32>
    %536 = arith.addf %503, %535 : vector<8x128xf32>
    %c3_272 = arith.constant 3 : index
    %c14_273 = arith.constant 14 : index
    %537 = memref.load %arg8[%c3_272, %c14_273] : memref<4x32xf32, #tpu.memory_space<smem>>
    %538 = vector.broadcast %537 : f32 to vector<8x128xf32>
    %539 = arith.mulf %538, %524 : vector<8x128xf32>
    %540 = arith.addf %507, %539 : vector<8x128xf32>
    %c0_274 = arith.constant 0 : index
    %c15 = arith.constant 15 : index
    %541 = memref.load %arg7[%c0_274, %c15] : memref<4x32xf32, #tpu.memory_space<smem>>
    %542 = vector.broadcast %541 : f32 to vector<8x128xf32>
    %543 = arith.mulf %542, %14 : vector<8x128xf32>
    %c1_275 = arith.constant 1 : index
    %c15_276 = arith.constant 15 : index
    %544 = memref.load %arg7[%c1_275, %c15_276] : memref<4x32xf32, #tpu.memory_space<smem>>
    %545 = vector.broadcast %544 : f32 to vector<8x128xf32>
    %546 = arith.mulf %545, %23 : vector<8x128xf32>
    %547 = arith.addf %543, %546 : vector<8x128xf32>
    %c2_277 = arith.constant 2 : index
    %c15_278 = arith.constant 15 : index
    %548 = memref.load %arg7[%c2_277, %c15_278] : memref<4x32xf32, #tpu.memory_space<smem>>
    %549 = vector.broadcast %548 : f32 to vector<8x128xf32>
    %550 = arith.mulf %549, %32 : vector<8x128xf32>
    %551 = arith.addf %547, %550 : vector<8x128xf32>
    %c3_279 = arith.constant 3 : index
    %c15_280 = arith.constant 15 : index
    %552 = memref.load %arg7[%c3_279, %c15_280] : memref<4x32xf32, #tpu.memory_space<smem>>
    %553 = vector.broadcast %552 : f32 to vector<8x128xf32>
    %554 = arith.mulf %553, %41 : vector<8x128xf32>
    %555 = arith.addf %551, %554 : vector<8x128xf32>
    %cst_281 = arith.constant 0.000000e+00 : f32
    %556 = vector.broadcast %cst_281 : f32 to vector<8x128xf32>
    %557 = arith.maximumf %555, %556 : vector<8x128xf32>
    %c0_282 = arith.constant 0 : index
    %c15_283 = arith.constant 15 : index
    %558 = memref.load %arg8[%c0_282, %c15_283] : memref<4x32xf32, #tpu.memory_space<smem>>
    %559 = vector.broadcast %558 : f32 to vector<8x128xf32>
    %560 = arith.mulf %559, %557 : vector<8x128xf32>
    %561 = arith.addf %528, %560 : vector<8x128xf32>
    %c1_284 = arith.constant 1 : index
    %c15_285 = arith.constant 15 : index
    %562 = memref.load %arg8[%c1_284, %c15_285] : memref<4x32xf32, #tpu.memory_space<smem>>
    %563 = vector.broadcast %562 : f32 to vector<8x128xf32>
    %564 = arith.mulf %563, %557 : vector<8x128xf32>
    %565 = arith.addf %532, %564 : vector<8x128xf32>
    %c2_286 = arith.constant 2 : index
    %c15_287 = arith.constant 15 : index
    %566 = memref.load %arg8[%c2_286, %c15_287] : memref<4x32xf32, #tpu.memory_space<smem>>
    %567 = vector.broadcast %566 : f32 to vector<8x128xf32>
    %568 = arith.mulf %567, %557 : vector<8x128xf32>
    %569 = arith.addf %536, %568 : vector<8x128xf32>
    %c3_288 = arith.constant 3 : index
    %c15_289 = arith.constant 15 : index
    %570 = memref.load %arg8[%c3_288, %c15_289] : memref<4x32xf32, #tpu.memory_space<smem>>
    %571 = vector.broadcast %570 : f32 to vector<8x128xf32>
    %572 = arith.mulf %571, %557 : vector<8x128xf32>
    %573 = arith.addf %540, %572 : vector<8x128xf32>
    %c0_290 = arith.constant 0 : index
    %c16 = arith.constant 16 : index
    %574 = memref.load %arg7[%c0_290, %c16] : memref<4x32xf32, #tpu.memory_space<smem>>
    %575 = vector.broadcast %574 : f32 to vector<8x128xf32>
    %576 = arith.mulf %575, %14 : vector<8x128xf32>
    %c1_291 = arith.constant 1 : index
    %c16_292 = arith.constant 16 : index
    %577 = memref.load %arg7[%c1_291, %c16_292] : memref<4x32xf32, #tpu.memory_space<smem>>
    %578 = vector.broadcast %577 : f32 to vector<8x128xf32>
    %579 = arith.mulf %578, %23 : vector<8x128xf32>
    %580 = arith.addf %576, %579 : vector<8x128xf32>
    %c2_293 = arith.constant 2 : index
    %c16_294 = arith.constant 16 : index
    %581 = memref.load %arg7[%c2_293, %c16_294] : memref<4x32xf32, #tpu.memory_space<smem>>
    %582 = vector.broadcast %581 : f32 to vector<8x128xf32>
    %583 = arith.mulf %582, %32 : vector<8x128xf32>
    %584 = arith.addf %580, %583 : vector<8x128xf32>
    %c3_295 = arith.constant 3 : index
    %c16_296 = arith.constant 16 : index
    %585 = memref.load %arg7[%c3_295, %c16_296] : memref<4x32xf32, #tpu.memory_space<smem>>
    %586 = vector.broadcast %585 : f32 to vector<8x128xf32>
    %587 = arith.mulf %586, %41 : vector<8x128xf32>
    %588 = arith.addf %584, %587 : vector<8x128xf32>
    %cst_297 = arith.constant 0.000000e+00 : f32
    %589 = vector.broadcast %cst_297 : f32 to vector<8x128xf32>
    %590 = arith.maximumf %588, %589 : vector<8x128xf32>
    %c0_298 = arith.constant 0 : index
    %c16_299 = arith.constant 16 : index
    %591 = memref.load %arg8[%c0_298, %c16_299] : memref<4x32xf32, #tpu.memory_space<smem>>
    %592 = vector.broadcast %591 : f32 to vector<8x128xf32>
    %593 = arith.mulf %592, %590 : vector<8x128xf32>
    %594 = arith.addf %561, %593 : vector<8x128xf32>
    %c1_300 = arith.constant 1 : index
    %c16_301 = arith.constant 16 : index
    %595 = memref.load %arg8[%c1_300, %c16_301] : memref<4x32xf32, #tpu.memory_space<smem>>
    %596 = vector.broadcast %595 : f32 to vector<8x128xf32>
    %597 = arith.mulf %596, %590 : vector<8x128xf32>
    %598 = arith.addf %565, %597 : vector<8x128xf32>
    %c2_302 = arith.constant 2 : index
    %c16_303 = arith.constant 16 : index
    %599 = memref.load %arg8[%c2_302, %c16_303] : memref<4x32xf32, #tpu.memory_space<smem>>
    %600 = vector.broadcast %599 : f32 to vector<8x128xf32>
    %601 = arith.mulf %600, %590 : vector<8x128xf32>
    %602 = arith.addf %569, %601 : vector<8x128xf32>
    %c3_304 = arith.constant 3 : index
    %c16_305 = arith.constant 16 : index
    %603 = memref.load %arg8[%c3_304, %c16_305] : memref<4x32xf32, #tpu.memory_space<smem>>
    %604 = vector.broadcast %603 : f32 to vector<8x128xf32>
    %605 = arith.mulf %604, %590 : vector<8x128xf32>
    %606 = arith.addf %573, %605 : vector<8x128xf32>
    %c0_306 = arith.constant 0 : index
    %c17 = arith.constant 17 : index
    %607 = memref.load %arg7[%c0_306, %c17] : memref<4x32xf32, #tpu.memory_space<smem>>
    %608 = vector.broadcast %607 : f32 to vector<8x128xf32>
    %609 = arith.mulf %608, %14 : vector<8x128xf32>
    %c1_307 = arith.constant 1 : index
    %c17_308 = arith.constant 17 : index
    %610 = memref.load %arg7[%c1_307, %c17_308] : memref<4x32xf32, #tpu.memory_space<smem>>
    %611 = vector.broadcast %610 : f32 to vector<8x128xf32>
    %612 = arith.mulf %611, %23 : vector<8x128xf32>
    %613 = arith.addf %609, %612 : vector<8x128xf32>
    %c2_309 = arith.constant 2 : index
    %c17_310 = arith.constant 17 : index
    %614 = memref.load %arg7[%c2_309, %c17_310] : memref<4x32xf32, #tpu.memory_space<smem>>
    %615 = vector.broadcast %614 : f32 to vector<8x128xf32>
    %616 = arith.mulf %615, %32 : vector<8x128xf32>
    %617 = arith.addf %613, %616 : vector<8x128xf32>
    %c3_311 = arith.constant 3 : index
    %c17_312 = arith.constant 17 : index
    %618 = memref.load %arg7[%c3_311, %c17_312] : memref<4x32xf32, #tpu.memory_space<smem>>
    %619 = vector.broadcast %618 : f32 to vector<8x128xf32>
    %620 = arith.mulf %619, %41 : vector<8x128xf32>
    %621 = arith.addf %617, %620 : vector<8x128xf32>
    %cst_313 = arith.constant 0.000000e+00 : f32
    %622 = vector.broadcast %cst_313 : f32 to vector<8x128xf32>
    %623 = arith.maximumf %621, %622 : vector<8x128xf32>
    %c0_314 = arith.constant 0 : index
    %c17_315 = arith.constant 17 : index
    %624 = memref.load %arg8[%c0_314, %c17_315] : memref<4x32xf32, #tpu.memory_space<smem>>
    %625 = vector.broadcast %624 : f32 to vector<8x128xf32>
    %626 = arith.mulf %625, %623 : vector<8x128xf32>
    %627 = arith.addf %594, %626 : vector<8x128xf32>
    %c1_316 = arith.constant 1 : index
    %c17_317 = arith.constant 17 : index
    %628 = memref.load %arg8[%c1_316, %c17_317] : memref<4x32xf32, #tpu.memory_space<smem>>
    %629 = vector.broadcast %628 : f32 to vector<8x128xf32>
    %630 = arith.mulf %629, %623 : vector<8x128xf32>
    %631 = arith.addf %598, %630 : vector<8x128xf32>
    %c2_318 = arith.constant 2 : index
    %c17_319 = arith.constant 17 : index
    %632 = memref.load %arg8[%c2_318, %c17_319] : memref<4x32xf32, #tpu.memory_space<smem>>
    %633 = vector.broadcast %632 : f32 to vector<8x128xf32>
    %634 = arith.mulf %633, %623 : vector<8x128xf32>
    %635 = arith.addf %602, %634 : vector<8x128xf32>
    %c3_320 = arith.constant 3 : index
    %c17_321 = arith.constant 17 : index
    %636 = memref.load %arg8[%c3_320, %c17_321] : memref<4x32xf32, #tpu.memory_space<smem>>
    %637 = vector.broadcast %636 : f32 to vector<8x128xf32>
    %638 = arith.mulf %637, %623 : vector<8x128xf32>
    %639 = arith.addf %606, %638 : vector<8x128xf32>
    %c0_322 = arith.constant 0 : index
    %c18 = arith.constant 18 : index
    %640 = memref.load %arg7[%c0_322, %c18] : memref<4x32xf32, #tpu.memory_space<smem>>
    %641 = vector.broadcast %640 : f32 to vector<8x128xf32>
    %642 = arith.mulf %641, %14 : vector<8x128xf32>
    %c1_323 = arith.constant 1 : index
    %c18_324 = arith.constant 18 : index
    %643 = memref.load %arg7[%c1_323, %c18_324] : memref<4x32xf32, #tpu.memory_space<smem>>
    %644 = vector.broadcast %643 : f32 to vector<8x128xf32>
    %645 = arith.mulf %644, %23 : vector<8x128xf32>
    %646 = arith.addf %642, %645 : vector<8x128xf32>
    %c2_325 = arith.constant 2 : index
    %c18_326 = arith.constant 18 : index
    %647 = memref.load %arg7[%c2_325, %c18_326] : memref<4x32xf32, #tpu.memory_space<smem>>
    %648 = vector.broadcast %647 : f32 to vector<8x128xf32>
    %649 = arith.mulf %648, %32 : vector<8x128xf32>
    %650 = arith.addf %646, %649 : vector<8x128xf32>
    %c3_327 = arith.constant 3 : index
    %c18_328 = arith.constant 18 : index
    %651 = memref.load %arg7[%c3_327, %c18_328] : memref<4x32xf32, #tpu.memory_space<smem>>
    %652 = vector.broadcast %651 : f32 to vector<8x128xf32>
    %653 = arith.mulf %652, %41 : vector<8x128xf32>
    %654 = arith.addf %650, %653 : vector<8x128xf32>
    %cst_329 = arith.constant 0.000000e+00 : f32
    %655 = vector.broadcast %cst_329 : f32 to vector<8x128xf32>
    %656 = arith.maximumf %654, %655 : vector<8x128xf32>
    %c0_330 = arith.constant 0 : index
    %c18_331 = arith.constant 18 : index
    %657 = memref.load %arg8[%c0_330, %c18_331] : memref<4x32xf32, #tpu.memory_space<smem>>
    %658 = vector.broadcast %657 : f32 to vector<8x128xf32>
    %659 = arith.mulf %658, %656 : vector<8x128xf32>
    %660 = arith.addf %627, %659 : vector<8x128xf32>
    %c1_332 = arith.constant 1 : index
    %c18_333 = arith.constant 18 : index
    %661 = memref.load %arg8[%c1_332, %c18_333] : memref<4x32xf32, #tpu.memory_space<smem>>
    %662 = vector.broadcast %661 : f32 to vector<8x128xf32>
    %663 = arith.mulf %662, %656 : vector<8x128xf32>
    %664 = arith.addf %631, %663 : vector<8x128xf32>
    %c2_334 = arith.constant 2 : index
    %c18_335 = arith.constant 18 : index
    %665 = memref.load %arg8[%c2_334, %c18_335] : memref<4x32xf32, #tpu.memory_space<smem>>
    %666 = vector.broadcast %665 : f32 to vector<8x128xf32>
    %667 = arith.mulf %666, %656 : vector<8x128xf32>
    %668 = arith.addf %635, %667 : vector<8x128xf32>
    %c3_336 = arith.constant 3 : index
    %c18_337 = arith.constant 18 : index
    %669 = memref.load %arg8[%c3_336, %c18_337] : memref<4x32xf32, #tpu.memory_space<smem>>
    %670 = vector.broadcast %669 : f32 to vector<8x128xf32>
    %671 = arith.mulf %670, %656 : vector<8x128xf32>
    %672 = arith.addf %639, %671 : vector<8x128xf32>
    %c0_338 = arith.constant 0 : index
    %c19 = arith.constant 19 : index
    %673 = memref.load %arg7[%c0_338, %c19] : memref<4x32xf32, #tpu.memory_space<smem>>
    %674 = vector.broadcast %673 : f32 to vector<8x128xf32>
    %675 = arith.mulf %674, %14 : vector<8x128xf32>
    %c1_339 = arith.constant 1 : index
    %c19_340 = arith.constant 19 : index
    %676 = memref.load %arg7[%c1_339, %c19_340] : memref<4x32xf32, #tpu.memory_space<smem>>
    %677 = vector.broadcast %676 : f32 to vector<8x128xf32>
    %678 = arith.mulf %677, %23 : vector<8x128xf32>
    %679 = arith.addf %675, %678 : vector<8x128xf32>
    %c2_341 = arith.constant 2 : index
    %c19_342 = arith.constant 19 : index
    %680 = memref.load %arg7[%c2_341, %c19_342] : memref<4x32xf32, #tpu.memory_space<smem>>
    %681 = vector.broadcast %680 : f32 to vector<8x128xf32>
    %682 = arith.mulf %681, %32 : vector<8x128xf32>
    %683 = arith.addf %679, %682 : vector<8x128xf32>
    %c3_343 = arith.constant 3 : index
    %c19_344 = arith.constant 19 : index
    %684 = memref.load %arg7[%c3_343, %c19_344] : memref<4x32xf32, #tpu.memory_space<smem>>
    %685 = vector.broadcast %684 : f32 to vector<8x128xf32>
    %686 = arith.mulf %685, %41 : vector<8x128xf32>
    %687 = arith.addf %683, %686 : vector<8x128xf32>
    %cst_345 = arith.constant 0.000000e+00 : f32
    %688 = vector.broadcast %cst_345 : f32 to vector<8x128xf32>
    %689 = arith.maximumf %687, %688 : vector<8x128xf32>
    %c0_346 = arith.constant 0 : index
    %c19_347 = arith.constant 19 : index
    %690 = memref.load %arg8[%c0_346, %c19_347] : memref<4x32xf32, #tpu.memory_space<smem>>
    %691 = vector.broadcast %690 : f32 to vector<8x128xf32>
    %692 = arith.mulf %691, %689 : vector<8x128xf32>
    %693 = arith.addf %660, %692 : vector<8x128xf32>
    %c1_348 = arith.constant 1 : index
    %c19_349 = arith.constant 19 : index
    %694 = memref.load %arg8[%c1_348, %c19_349] : memref<4x32xf32, #tpu.memory_space<smem>>
    %695 = vector.broadcast %694 : f32 to vector<8x128xf32>
    %696 = arith.mulf %695, %689 : vector<8x128xf32>
    %697 = arith.addf %664, %696 : vector<8x128xf32>
    %c2_350 = arith.constant 2 : index
    %c19_351 = arith.constant 19 : index
    %698 = memref.load %arg8[%c2_350, %c19_351] : memref<4x32xf32, #tpu.memory_space<smem>>
    %699 = vector.broadcast %698 : f32 to vector<8x128xf32>
    %700 = arith.mulf %699, %689 : vector<8x128xf32>
    %701 = arith.addf %668, %700 : vector<8x128xf32>
    %c3_352 = arith.constant 3 : index
    %c19_353 = arith.constant 19 : index
    %702 = memref.load %arg8[%c3_352, %c19_353] : memref<4x32xf32, #tpu.memory_space<smem>>
    %703 = vector.broadcast %702 : f32 to vector<8x128xf32>
    %704 = arith.mulf %703, %689 : vector<8x128xf32>
    %705 = arith.addf %672, %704 : vector<8x128xf32>
    %c0_354 = arith.constant 0 : index
    %c20 = arith.constant 20 : index
    %706 = memref.load %arg7[%c0_354, %c20] : memref<4x32xf32, #tpu.memory_space<smem>>
    %707 = vector.broadcast %706 : f32 to vector<8x128xf32>
    %708 = arith.mulf %707, %14 : vector<8x128xf32>
    %c1_355 = arith.constant 1 : index
    %c20_356 = arith.constant 20 : index
    %709 = memref.load %arg7[%c1_355, %c20_356] : memref<4x32xf32, #tpu.memory_space<smem>>
    %710 = vector.broadcast %709 : f32 to vector<8x128xf32>
    %711 = arith.mulf %710, %23 : vector<8x128xf32>
    %712 = arith.addf %708, %711 : vector<8x128xf32>
    %c2_357 = arith.constant 2 : index
    %c20_358 = arith.constant 20 : index
    %713 = memref.load %arg7[%c2_357, %c20_358] : memref<4x32xf32, #tpu.memory_space<smem>>
    %714 = vector.broadcast %713 : f32 to vector<8x128xf32>
    %715 = arith.mulf %714, %32 : vector<8x128xf32>
    %716 = arith.addf %712, %715 : vector<8x128xf32>
    %c3_359 = arith.constant 3 : index
    %c20_360 = arith.constant 20 : index
    %717 = memref.load %arg7[%c3_359, %c20_360] : memref<4x32xf32, #tpu.memory_space<smem>>
    %718 = vector.broadcast %717 : f32 to vector<8x128xf32>
    %719 = arith.mulf %718, %41 : vector<8x128xf32>
    %720 = arith.addf %716, %719 : vector<8x128xf32>
    %cst_361 = arith.constant 0.000000e+00 : f32
    %721 = vector.broadcast %cst_361 : f32 to vector<8x128xf32>
    %722 = arith.maximumf %720, %721 : vector<8x128xf32>
    %c0_362 = arith.constant 0 : index
    %c20_363 = arith.constant 20 : index
    %723 = memref.load %arg8[%c0_362, %c20_363] : memref<4x32xf32, #tpu.memory_space<smem>>
    %724 = vector.broadcast %723 : f32 to vector<8x128xf32>
    %725 = arith.mulf %724, %722 : vector<8x128xf32>
    %726 = arith.addf %693, %725 : vector<8x128xf32>
    %c1_364 = arith.constant 1 : index
    %c20_365 = arith.constant 20 : index
    %727 = memref.load %arg8[%c1_364, %c20_365] : memref<4x32xf32, #tpu.memory_space<smem>>
    %728 = vector.broadcast %727 : f32 to vector<8x128xf32>
    %729 = arith.mulf %728, %722 : vector<8x128xf32>
    %730 = arith.addf %697, %729 : vector<8x128xf32>
    %c2_366 = arith.constant 2 : index
    %c20_367 = arith.constant 20 : index
    %731 = memref.load %arg8[%c2_366, %c20_367] : memref<4x32xf32, #tpu.memory_space<smem>>
    %732 = vector.broadcast %731 : f32 to vector<8x128xf32>
    %733 = arith.mulf %732, %722 : vector<8x128xf32>
    %734 = arith.addf %701, %733 : vector<8x128xf32>
    %c3_368 = arith.constant 3 : index
    %c20_369 = arith.constant 20 : index
    %735 = memref.load %arg8[%c3_368, %c20_369] : memref<4x32xf32, #tpu.memory_space<smem>>
    %736 = vector.broadcast %735 : f32 to vector<8x128xf32>
    %737 = arith.mulf %736, %722 : vector<8x128xf32>
    %738 = arith.addf %705, %737 : vector<8x128xf32>
    %c0_370 = arith.constant 0 : index
    %c21 = arith.constant 21 : index
    %739 = memref.load %arg7[%c0_370, %c21] : memref<4x32xf32, #tpu.memory_space<smem>>
    %740 = vector.broadcast %739 : f32 to vector<8x128xf32>
    %741 = arith.mulf %740, %14 : vector<8x128xf32>
    %c1_371 = arith.constant 1 : index
    %c21_372 = arith.constant 21 : index
    %742 = memref.load %arg7[%c1_371, %c21_372] : memref<4x32xf32, #tpu.memory_space<smem>>
    %743 = vector.broadcast %742 : f32 to vector<8x128xf32>
    %744 = arith.mulf %743, %23 : vector<8x128xf32>
    %745 = arith.addf %741, %744 : vector<8x128xf32>
    %c2_373 = arith.constant 2 : index
    %c21_374 = arith.constant 21 : index
    %746 = memref.load %arg7[%c2_373, %c21_374] : memref<4x32xf32, #tpu.memory_space<smem>>
    %747 = vector.broadcast %746 : f32 to vector<8x128xf32>
    %748 = arith.mulf %747, %32 : vector<8x128xf32>
    %749 = arith.addf %745, %748 : vector<8x128xf32>
    %c3_375 = arith.constant 3 : index
    %c21_376 = arith.constant 21 : index
    %750 = memref.load %arg7[%c3_375, %c21_376] : memref<4x32xf32, #tpu.memory_space<smem>>
    %751 = vector.broadcast %750 : f32 to vector<8x128xf32>
    %752 = arith.mulf %751, %41 : vector<8x128xf32>
    %753 = arith.addf %749, %752 : vector<8x128xf32>
    %cst_377 = arith.constant 0.000000e+00 : f32
    %754 = vector.broadcast %cst_377 : f32 to vector<8x128xf32>
    %755 = arith.maximumf %753, %754 : vector<8x128xf32>
    %c0_378 = arith.constant 0 : index
    %c21_379 = arith.constant 21 : index
    %756 = memref.load %arg8[%c0_378, %c21_379] : memref<4x32xf32, #tpu.memory_space<smem>>
    %757 = vector.broadcast %756 : f32 to vector<8x128xf32>
    %758 = arith.mulf %757, %755 : vector<8x128xf32>
    %759 = arith.addf %726, %758 : vector<8x128xf32>
    %c1_380 = arith.constant 1 : index
    %c21_381 = arith.constant 21 : index
    %760 = memref.load %arg8[%c1_380, %c21_381] : memref<4x32xf32, #tpu.memory_space<smem>>
    %761 = vector.broadcast %760 : f32 to vector<8x128xf32>
    %762 = arith.mulf %761, %755 : vector<8x128xf32>
    %763 = arith.addf %730, %762 : vector<8x128xf32>
    %c2_382 = arith.constant 2 : index
    %c21_383 = arith.constant 21 : index
    %764 = memref.load %arg8[%c2_382, %c21_383] : memref<4x32xf32, #tpu.memory_space<smem>>
    %765 = vector.broadcast %764 : f32 to vector<8x128xf32>
    %766 = arith.mulf %765, %755 : vector<8x128xf32>
    %767 = arith.addf %734, %766 : vector<8x128xf32>
    %c3_384 = arith.constant 3 : index
    %c21_385 = arith.constant 21 : index
    %768 = memref.load %arg8[%c3_384, %c21_385] : memref<4x32xf32, #tpu.memory_space<smem>>
    %769 = vector.broadcast %768 : f32 to vector<8x128xf32>
    %770 = arith.mulf %769, %755 : vector<8x128xf32>
    %771 = arith.addf %738, %770 : vector<8x128xf32>
    %c0_386 = arith.constant 0 : index
    %c22 = arith.constant 22 : index
    %772 = memref.load %arg7[%c0_386, %c22] : memref<4x32xf32, #tpu.memory_space<smem>>
    %773 = vector.broadcast %772 : f32 to vector<8x128xf32>
    %774 = arith.mulf %773, %14 : vector<8x128xf32>
    %c1_387 = arith.constant 1 : index
    %c22_388 = arith.constant 22 : index
    %775 = memref.load %arg7[%c1_387, %c22_388] : memref<4x32xf32, #tpu.memory_space<smem>>
    %776 = vector.broadcast %775 : f32 to vector<8x128xf32>
    %777 = arith.mulf %776, %23 : vector<8x128xf32>
    %778 = arith.addf %774, %777 : vector<8x128xf32>
    %c2_389 = arith.constant 2 : index
    %c22_390 = arith.constant 22 : index
    %779 = memref.load %arg7[%c2_389, %c22_390] : memref<4x32xf32, #tpu.memory_space<smem>>
    %780 = vector.broadcast %779 : f32 to vector<8x128xf32>
    %781 = arith.mulf %780, %32 : vector<8x128xf32>
    %782 = arith.addf %778, %781 : vector<8x128xf32>
    %c3_391 = arith.constant 3 : index
    %c22_392 = arith.constant 22 : index
    %783 = memref.load %arg7[%c3_391, %c22_392] : memref<4x32xf32, #tpu.memory_space<smem>>
    %784 = vector.broadcast %783 : f32 to vector<8x128xf32>
    %785 = arith.mulf %784, %41 : vector<8x128xf32>
    %786 = arith.addf %782, %785 : vector<8x128xf32>
    %cst_393 = arith.constant 0.000000e+00 : f32
    %787 = vector.broadcast %cst_393 : f32 to vector<8x128xf32>
    %788 = arith.maximumf %786, %787 : vector<8x128xf32>
    %c0_394 = arith.constant 0 : index
    %c22_395 = arith.constant 22 : index
    %789 = memref.load %arg8[%c0_394, %c22_395] : memref<4x32xf32, #tpu.memory_space<smem>>
    %790 = vector.broadcast %789 : f32 to vector<8x128xf32>
    %791 = arith.mulf %790, %788 : vector<8x128xf32>
    %792 = arith.addf %759, %791 : vector<8x128xf32>
    %c1_396 = arith.constant 1 : index
    %c22_397 = arith.constant 22 : index
    %793 = memref.load %arg8[%c1_396, %c22_397] : memref<4x32xf32, #tpu.memory_space<smem>>
    %794 = vector.broadcast %793 : f32 to vector<8x128xf32>
    %795 = arith.mulf %794, %788 : vector<8x128xf32>
    %796 = arith.addf %763, %795 : vector<8x128xf32>
    %c2_398 = arith.constant 2 : index
    %c22_399 = arith.constant 22 : index
    %797 = memref.load %arg8[%c2_398, %c22_399] : memref<4x32xf32, #tpu.memory_space<smem>>
    %798 = vector.broadcast %797 : f32 to vector<8x128xf32>
    %799 = arith.mulf %798, %788 : vector<8x128xf32>
    %800 = arith.addf %767, %799 : vector<8x128xf32>
    %c3_400 = arith.constant 3 : index
    %c22_401 = arith.constant 22 : index
    %801 = memref.load %arg8[%c3_400, %c22_401] : memref<4x32xf32, #tpu.memory_space<smem>>
    %802 = vector.broadcast %801 : f32 to vector<8x128xf32>
    %803 = arith.mulf %802, %788 : vector<8x128xf32>
    %804 = arith.addf %771, %803 : vector<8x128xf32>
    %c0_402 = arith.constant 0 : index
    %c23 = arith.constant 23 : index
    %805 = memref.load %arg7[%c0_402, %c23] : memref<4x32xf32, #tpu.memory_space<smem>>
    %806 = vector.broadcast %805 : f32 to vector<8x128xf32>
    %807 = arith.mulf %806, %14 : vector<8x128xf32>
    %c1_403 = arith.constant 1 : index
    %c23_404 = arith.constant 23 : index
    %808 = memref.load %arg7[%c1_403, %c23_404] : memref<4x32xf32, #tpu.memory_space<smem>>
    %809 = vector.broadcast %808 : f32 to vector<8x128xf32>
    %810 = arith.mulf %809, %23 : vector<8x128xf32>
    %811 = arith.addf %807, %810 : vector<8x128xf32>
    %c2_405 = arith.constant 2 : index
    %c23_406 = arith.constant 23 : index
    %812 = memref.load %arg7[%c2_405, %c23_406] : memref<4x32xf32, #tpu.memory_space<smem>>
    %813 = vector.broadcast %812 : f32 to vector<8x128xf32>
    %814 = arith.mulf %813, %32 : vector<8x128xf32>
    %815 = arith.addf %811, %814 : vector<8x128xf32>
    %c3_407 = arith.constant 3 : index
    %c23_408 = arith.constant 23 : index
    %816 = memref.load %arg7[%c3_407, %c23_408] : memref<4x32xf32, #tpu.memory_space<smem>>
    %817 = vector.broadcast %816 : f32 to vector<8x128xf32>
    %818 = arith.mulf %817, %41 : vector<8x128xf32>
    %819 = arith.addf %815, %818 : vector<8x128xf32>
    %cst_409 = arith.constant 0.000000e+00 : f32
    %820 = vector.broadcast %cst_409 : f32 to vector<8x128xf32>
    %821 = arith.maximumf %819, %820 : vector<8x128xf32>
    %c0_410 = arith.constant 0 : index
    %c23_411 = arith.constant 23 : index
    %822 = memref.load %arg8[%c0_410, %c23_411] : memref<4x32xf32, #tpu.memory_space<smem>>
    %823 = vector.broadcast %822 : f32 to vector<8x128xf32>
    %824 = arith.mulf %823, %821 : vector<8x128xf32>
    %825 = arith.addf %792, %824 : vector<8x128xf32>
    %c1_412 = arith.constant 1 : index
    %c23_413 = arith.constant 23 : index
    %826 = memref.load %arg8[%c1_412, %c23_413] : memref<4x32xf32, #tpu.memory_space<smem>>
    %827 = vector.broadcast %826 : f32 to vector<8x128xf32>
    %828 = arith.mulf %827, %821 : vector<8x128xf32>
    %829 = arith.addf %796, %828 : vector<8x128xf32>
    %c2_414 = arith.constant 2 : index
    %c23_415 = arith.constant 23 : index
    %830 = memref.load %arg8[%c2_414, %c23_415] : memref<4x32xf32, #tpu.memory_space<smem>>
    %831 = vector.broadcast %830 : f32 to vector<8x128xf32>
    %832 = arith.mulf %831, %821 : vector<8x128xf32>
    %833 = arith.addf %800, %832 : vector<8x128xf32>
    %c3_416 = arith.constant 3 : index
    %c23_417 = arith.constant 23 : index
    %834 = memref.load %arg8[%c3_416, %c23_417] : memref<4x32xf32, #tpu.memory_space<smem>>
    %835 = vector.broadcast %834 : f32 to vector<8x128xf32>
    %836 = arith.mulf %835, %821 : vector<8x128xf32>
    %837 = arith.addf %804, %836 : vector<8x128xf32>
    %c0_418 = arith.constant 0 : index
    %c24 = arith.constant 24 : index
    %838 = memref.load %arg7[%c0_418, %c24] : memref<4x32xf32, #tpu.memory_space<smem>>
    %839 = vector.broadcast %838 : f32 to vector<8x128xf32>
    %840 = arith.mulf %839, %14 : vector<8x128xf32>
    %c1_419 = arith.constant 1 : index
    %c24_420 = arith.constant 24 : index
    %841 = memref.load %arg7[%c1_419, %c24_420] : memref<4x32xf32, #tpu.memory_space<smem>>
    %842 = vector.broadcast %841 : f32 to vector<8x128xf32>
    %843 = arith.mulf %842, %23 : vector<8x128xf32>
    %844 = arith.addf %840, %843 : vector<8x128xf32>
    %c2_421 = arith.constant 2 : index
    %c24_422 = arith.constant 24 : index
    %845 = memref.load %arg7[%c2_421, %c24_422] : memref<4x32xf32, #tpu.memory_space<smem>>
    %846 = vector.broadcast %845 : f32 to vector<8x128xf32>
    %847 = arith.mulf %846, %32 : vector<8x128xf32>
    %848 = arith.addf %844, %847 : vector<8x128xf32>
    %c3_423 = arith.constant 3 : index
    %c24_424 = arith.constant 24 : index
    %849 = memref.load %arg7[%c3_423, %c24_424] : memref<4x32xf32, #tpu.memory_space<smem>>
    %850 = vector.broadcast %849 : f32 to vector<8x128xf32>
    %851 = arith.mulf %850, %41 : vector<8x128xf32>
    %852 = arith.addf %848, %851 : vector<8x128xf32>
    %cst_425 = arith.constant 0.000000e+00 : f32
    %853 = vector.broadcast %cst_425 : f32 to vector<8x128xf32>
    %854 = arith.maximumf %852, %853 : vector<8x128xf32>
    %c0_426 = arith.constant 0 : index
    %c24_427 = arith.constant 24 : index
    %855 = memref.load %arg8[%c0_426, %c24_427] : memref<4x32xf32, #tpu.memory_space<smem>>
    %856 = vector.broadcast %855 : f32 to vector<8x128xf32>
    %857 = arith.mulf %856, %854 : vector<8x128xf32>
    %858 = arith.addf %825, %857 : vector<8x128xf32>
    %c1_428 = arith.constant 1 : index
    %c24_429 = arith.constant 24 : index
    %859 = memref.load %arg8[%c1_428, %c24_429] : memref<4x32xf32, #tpu.memory_space<smem>>
    %860 = vector.broadcast %859 : f32 to vector<8x128xf32>
    %861 = arith.mulf %860, %854 : vector<8x128xf32>
    %862 = arith.addf %829, %861 : vector<8x128xf32>
    %c2_430 = arith.constant 2 : index
    %c24_431 = arith.constant 24 : index
    %863 = memref.load %arg8[%c2_430, %c24_431] : memref<4x32xf32, #tpu.memory_space<smem>>
    %864 = vector.broadcast %863 : f32 to vector<8x128xf32>
    %865 = arith.mulf %864, %854 : vector<8x128xf32>
    %866 = arith.addf %833, %865 : vector<8x128xf32>
    %c3_432 = arith.constant 3 : index
    %c24_433 = arith.constant 24 : index
    %867 = memref.load %arg8[%c3_432, %c24_433] : memref<4x32xf32, #tpu.memory_space<smem>>
    %868 = vector.broadcast %867 : f32 to vector<8x128xf32>
    %869 = arith.mulf %868, %854 : vector<8x128xf32>
    %870 = arith.addf %837, %869 : vector<8x128xf32>
    %c0_434 = arith.constant 0 : index
    %c25 = arith.constant 25 : index
    %871 = memref.load %arg7[%c0_434, %c25] : memref<4x32xf32, #tpu.memory_space<smem>>
    %872 = vector.broadcast %871 : f32 to vector<8x128xf32>
    %873 = arith.mulf %872, %14 : vector<8x128xf32>
    %c1_435 = arith.constant 1 : index
    %c25_436 = arith.constant 25 : index
    %874 = memref.load %arg7[%c1_435, %c25_436] : memref<4x32xf32, #tpu.memory_space<smem>>
    %875 = vector.broadcast %874 : f32 to vector<8x128xf32>
    %876 = arith.mulf %875, %23 : vector<8x128xf32>
    %877 = arith.addf %873, %876 : vector<8x128xf32>
    %c2_437 = arith.constant 2 : index
    %c25_438 = arith.constant 25 : index
    %878 = memref.load %arg7[%c2_437, %c25_438] : memref<4x32xf32, #tpu.memory_space<smem>>
    %879 = vector.broadcast %878 : f32 to vector<8x128xf32>
    %880 = arith.mulf %879, %32 : vector<8x128xf32>
    %881 = arith.addf %877, %880 : vector<8x128xf32>
    %c3_439 = arith.constant 3 : index
    %c25_440 = arith.constant 25 : index
    %882 = memref.load %arg7[%c3_439, %c25_440] : memref<4x32xf32, #tpu.memory_space<smem>>
    %883 = vector.broadcast %882 : f32 to vector<8x128xf32>
    %884 = arith.mulf %883, %41 : vector<8x128xf32>
    %885 = arith.addf %881, %884 : vector<8x128xf32>
    %cst_441 = arith.constant 0.000000e+00 : f32
    %886 = vector.broadcast %cst_441 : f32 to vector<8x128xf32>
    %887 = arith.maximumf %885, %886 : vector<8x128xf32>
    %c0_442 = arith.constant 0 : index
    %c25_443 = arith.constant 25 : index
    %888 = memref.load %arg8[%c0_442, %c25_443] : memref<4x32xf32, #tpu.memory_space<smem>>
    %889 = vector.broadcast %888 : f32 to vector<8x128xf32>
    %890 = arith.mulf %889, %887 : vector<8x128xf32>
    %891 = arith.addf %858, %890 : vector<8x128xf32>
    %c1_444 = arith.constant 1 : index
    %c25_445 = arith.constant 25 : index
    %892 = memref.load %arg8[%c1_444, %c25_445] : memref<4x32xf32, #tpu.memory_space<smem>>
    %893 = vector.broadcast %892 : f32 to vector<8x128xf32>
    %894 = arith.mulf %893, %887 : vector<8x128xf32>
    %895 = arith.addf %862, %894 : vector<8x128xf32>
    %c2_446 = arith.constant 2 : index
    %c25_447 = arith.constant 25 : index
    %896 = memref.load %arg8[%c2_446, %c25_447] : memref<4x32xf32, #tpu.memory_space<smem>>
    %897 = vector.broadcast %896 : f32 to vector<8x128xf32>
    %898 = arith.mulf %897, %887 : vector<8x128xf32>
    %899 = arith.addf %866, %898 : vector<8x128xf32>
    %c3_448 = arith.constant 3 : index
    %c25_449 = arith.constant 25 : index
    %900 = memref.load %arg8[%c3_448, %c25_449] : memref<4x32xf32, #tpu.memory_space<smem>>
    %901 = vector.broadcast %900 : f32 to vector<8x128xf32>
    %902 = arith.mulf %901, %887 : vector<8x128xf32>
    %903 = arith.addf %870, %902 : vector<8x128xf32>
    %c0_450 = arith.constant 0 : index
    %c26 = arith.constant 26 : index
    %904 = memref.load %arg7[%c0_450, %c26] : memref<4x32xf32, #tpu.memory_space<smem>>
    %905 = vector.broadcast %904 : f32 to vector<8x128xf32>
    %906 = arith.mulf %905, %14 : vector<8x128xf32>
    %c1_451 = arith.constant 1 : index
    %c26_452 = arith.constant 26 : index
    %907 = memref.load %arg7[%c1_451, %c26_452] : memref<4x32xf32, #tpu.memory_space<smem>>
    %908 = vector.broadcast %907 : f32 to vector<8x128xf32>
    %909 = arith.mulf %908, %23 : vector<8x128xf32>
    %910 = arith.addf %906, %909 : vector<8x128xf32>
    %c2_453 = arith.constant 2 : index
    %c26_454 = arith.constant 26 : index
    %911 = memref.load %arg7[%c2_453, %c26_454] : memref<4x32xf32, #tpu.memory_space<smem>>
    %912 = vector.broadcast %911 : f32 to vector<8x128xf32>
    %913 = arith.mulf %912, %32 : vector<8x128xf32>
    %914 = arith.addf %910, %913 : vector<8x128xf32>
    %c3_455 = arith.constant 3 : index
    %c26_456 = arith.constant 26 : index
    %915 = memref.load %arg7[%c3_455, %c26_456] : memref<4x32xf32, #tpu.memory_space<smem>>
    %916 = vector.broadcast %915 : f32 to vector<8x128xf32>
    %917 = arith.mulf %916, %41 : vector<8x128xf32>
    %918 = arith.addf %914, %917 : vector<8x128xf32>
    %cst_457 = arith.constant 0.000000e+00 : f32
    %919 = vector.broadcast %cst_457 : f32 to vector<8x128xf32>
    %920 = arith.maximumf %918, %919 : vector<8x128xf32>
    %c0_458 = arith.constant 0 : index
    %c26_459 = arith.constant 26 : index
    %921 = memref.load %arg8[%c0_458, %c26_459] : memref<4x32xf32, #tpu.memory_space<smem>>
    %922 = vector.broadcast %921 : f32 to vector<8x128xf32>
    %923 = arith.mulf %922, %920 : vector<8x128xf32>
    %924 = arith.addf %891, %923 : vector<8x128xf32>
    %c1_460 = arith.constant 1 : index
    %c26_461 = arith.constant 26 : index
    %925 = memref.load %arg8[%c1_460, %c26_461] : memref<4x32xf32, #tpu.memory_space<smem>>
    %926 = vector.broadcast %925 : f32 to vector<8x128xf32>
    %927 = arith.mulf %926, %920 : vector<8x128xf32>
    %928 = arith.addf %895, %927 : vector<8x128xf32>
    %c2_462 = arith.constant 2 : index
    %c26_463 = arith.constant 26 : index
    %929 = memref.load %arg8[%c2_462, %c26_463] : memref<4x32xf32, #tpu.memory_space<smem>>
    %930 = vector.broadcast %929 : f32 to vector<8x128xf32>
    %931 = arith.mulf %930, %920 : vector<8x128xf32>
    %932 = arith.addf %899, %931 : vector<8x128xf32>
    %c3_464 = arith.constant 3 : index
    %c26_465 = arith.constant 26 : index
    %933 = memref.load %arg8[%c3_464, %c26_465] : memref<4x32xf32, #tpu.memory_space<smem>>
    %934 = vector.broadcast %933 : f32 to vector<8x128xf32>
    %935 = arith.mulf %934, %920 : vector<8x128xf32>
    %936 = arith.addf %903, %935 : vector<8x128xf32>
    %c0_466 = arith.constant 0 : index
    %c27 = arith.constant 27 : index
    %937 = memref.load %arg7[%c0_466, %c27] : memref<4x32xf32, #tpu.memory_space<smem>>
    %938 = vector.broadcast %937 : f32 to vector<8x128xf32>
    %939 = arith.mulf %938, %14 : vector<8x128xf32>
    %c1_467 = arith.constant 1 : index
    %c27_468 = arith.constant 27 : index
    %940 = memref.load %arg7[%c1_467, %c27_468] : memref<4x32xf32, #tpu.memory_space<smem>>
    %941 = vector.broadcast %940 : f32 to vector<8x128xf32>
    %942 = arith.mulf %941, %23 : vector<8x128xf32>
    %943 = arith.addf %939, %942 : vector<8x128xf32>
    %c2_469 = arith.constant 2 : index
    %c27_470 = arith.constant 27 : index
    %944 = memref.load %arg7[%c2_469, %c27_470] : memref<4x32xf32, #tpu.memory_space<smem>>
    %945 = vector.broadcast %944 : f32 to vector<8x128xf32>
    %946 = arith.mulf %945, %32 : vector<8x128xf32>
    %947 = arith.addf %943, %946 : vector<8x128xf32>
    %c3_471 = arith.constant 3 : index
    %c27_472 = arith.constant 27 : index
    %948 = memref.load %arg7[%c3_471, %c27_472] : memref<4x32xf32, #tpu.memory_space<smem>>
    %949 = vector.broadcast %948 : f32 to vector<8x128xf32>
    %950 = arith.mulf %949, %41 : vector<8x128xf32>
    %951 = arith.addf %947, %950 : vector<8x128xf32>
    %cst_473 = arith.constant 0.000000e+00 : f32
    %952 = vector.broadcast %cst_473 : f32 to vector<8x128xf32>
    %953 = arith.maximumf %951, %952 : vector<8x128xf32>
    %c0_474 = arith.constant 0 : index
    %c27_475 = arith.constant 27 : index
    %954 = memref.load %arg8[%c0_474, %c27_475] : memref<4x32xf32, #tpu.memory_space<smem>>
    %955 = vector.broadcast %954 : f32 to vector<8x128xf32>
    %956 = arith.mulf %955, %953 : vector<8x128xf32>
    %957 = arith.addf %924, %956 : vector<8x128xf32>
    %c1_476 = arith.constant 1 : index
    %c27_477 = arith.constant 27 : index
    %958 = memref.load %arg8[%c1_476, %c27_477] : memref<4x32xf32, #tpu.memory_space<smem>>
    %959 = vector.broadcast %958 : f32 to vector<8x128xf32>
    %960 = arith.mulf %959, %953 : vector<8x128xf32>
    %961 = arith.addf %928, %960 : vector<8x128xf32>
    %c2_478 = arith.constant 2 : index
    %c27_479 = arith.constant 27 : index
    %962 = memref.load %arg8[%c2_478, %c27_479] : memref<4x32xf32, #tpu.memory_space<smem>>
    %963 = vector.broadcast %962 : f32 to vector<8x128xf32>
    %964 = arith.mulf %963, %953 : vector<8x128xf32>
    %965 = arith.addf %932, %964 : vector<8x128xf32>
    %c3_480 = arith.constant 3 : index
    %c27_481 = arith.constant 27 : index
    %966 = memref.load %arg8[%c3_480, %c27_481] : memref<4x32xf32, #tpu.memory_space<smem>>
    %967 = vector.broadcast %966 : f32 to vector<8x128xf32>
    %968 = arith.mulf %967, %953 : vector<8x128xf32>
    %969 = arith.addf %936, %968 : vector<8x128xf32>
    %c0_482 = arith.constant 0 : index
    %c28 = arith.constant 28 : index
    %970 = memref.load %arg7[%c0_482, %c28] : memref<4x32xf32, #tpu.memory_space<smem>>
    %971 = vector.broadcast %970 : f32 to vector<8x128xf32>
    %972 = arith.mulf %971, %14 : vector<8x128xf32>
    %c1_483 = arith.constant 1 : index
    %c28_484 = arith.constant 28 : index
    %973 = memref.load %arg7[%c1_483, %c28_484] : memref<4x32xf32, #tpu.memory_space<smem>>
    %974 = vector.broadcast %973 : f32 to vector<8x128xf32>
    %975 = arith.mulf %974, %23 : vector<8x128xf32>
    %976 = arith.addf %972, %975 : vector<8x128xf32>
    %c2_485 = arith.constant 2 : index
    %c28_486 = arith.constant 28 : index
    %977 = memref.load %arg7[%c2_485, %c28_486] : memref<4x32xf32, #tpu.memory_space<smem>>
    %978 = vector.broadcast %977 : f32 to vector<8x128xf32>
    %979 = arith.mulf %978, %32 : vector<8x128xf32>
    %980 = arith.addf %976, %979 : vector<8x128xf32>
    %c3_487 = arith.constant 3 : index
    %c28_488 = arith.constant 28 : index
    %981 = memref.load %arg7[%c3_487, %c28_488] : memref<4x32xf32, #tpu.memory_space<smem>>
    %982 = vector.broadcast %981 : f32 to vector<8x128xf32>
    %983 = arith.mulf %982, %41 : vector<8x128xf32>
    %984 = arith.addf %980, %983 : vector<8x128xf32>
    %cst_489 = arith.constant 0.000000e+00 : f32
    %985 = vector.broadcast %cst_489 : f32 to vector<8x128xf32>
    %986 = arith.maximumf %984, %985 : vector<8x128xf32>
    %c0_490 = arith.constant 0 : index
    %c28_491 = arith.constant 28 : index
    %987 = memref.load %arg8[%c0_490, %c28_491] : memref<4x32xf32, #tpu.memory_space<smem>>
    %988 = vector.broadcast %987 : f32 to vector<8x128xf32>
    %989 = arith.mulf %988, %986 : vector<8x128xf32>
    %990 = arith.addf %957, %989 : vector<8x128xf32>
    %c1_492 = arith.constant 1 : index
    %c28_493 = arith.constant 28 : index
    %991 = memref.load %arg8[%c1_492, %c28_493] : memref<4x32xf32, #tpu.memory_space<smem>>
    %992 = vector.broadcast %991 : f32 to vector<8x128xf32>
    %993 = arith.mulf %992, %986 : vector<8x128xf32>
    %994 = arith.addf %961, %993 : vector<8x128xf32>
    %c2_494 = arith.constant 2 : index
    %c28_495 = arith.constant 28 : index
    %995 = memref.load %arg8[%c2_494, %c28_495] : memref<4x32xf32, #tpu.memory_space<smem>>
    %996 = vector.broadcast %995 : f32 to vector<8x128xf32>
    %997 = arith.mulf %996, %986 : vector<8x128xf32>
    %998 = arith.addf %965, %997 : vector<8x128xf32>
    %c3_496 = arith.constant 3 : index
    %c28_497 = arith.constant 28 : index
    %999 = memref.load %arg8[%c3_496, %c28_497] : memref<4x32xf32, #tpu.memory_space<smem>>
    %1000 = vector.broadcast %999 : f32 to vector<8x128xf32>
    %1001 = arith.mulf %1000, %986 : vector<8x128xf32>
    %1002 = arith.addf %969, %1001 : vector<8x128xf32>
    %c0_498 = arith.constant 0 : index
    %c29 = arith.constant 29 : index
    %1003 = memref.load %arg7[%c0_498, %c29] : memref<4x32xf32, #tpu.memory_space<smem>>
    %1004 = vector.broadcast %1003 : f32 to vector<8x128xf32>
    %1005 = arith.mulf %1004, %14 : vector<8x128xf32>
    %c1_499 = arith.constant 1 : index
    %c29_500 = arith.constant 29 : index
    %1006 = memref.load %arg7[%c1_499, %c29_500] : memref<4x32xf32, #tpu.memory_space<smem>>
    %1007 = vector.broadcast %1006 : f32 to vector<8x128xf32>
    %1008 = arith.mulf %1007, %23 : vector<8x128xf32>
    %1009 = arith.addf %1005, %1008 : vector<8x128xf32>
    %c2_501 = arith.constant 2 : index
    %c29_502 = arith.constant 29 : index
    %1010 = memref.load %arg7[%c2_501, %c29_502] : memref<4x32xf32, #tpu.memory_space<smem>>
    %1011 = vector.broadcast %1010 : f32 to vector<8x128xf32>
    %1012 = arith.mulf %1011, %32 : vector<8x128xf32>
    %1013 = arith.addf %1009, %1012 : vector<8x128xf32>
    %c3_503 = arith.constant 3 : index
    %c29_504 = arith.constant 29 : index
    %1014 = memref.load %arg7[%c3_503, %c29_504] : memref<4x32xf32, #tpu.memory_space<smem>>
    %1015 = vector.broadcast %1014 : f32 to vector<8x128xf32>
    %1016 = arith.mulf %1015, %41 : vector<8x128xf32>
    %1017 = arith.addf %1013, %1016 : vector<8x128xf32>
    %cst_505 = arith.constant 0.000000e+00 : f32
    %1018 = vector.broadcast %cst_505 : f32 to vector<8x128xf32>
    %1019 = arith.maximumf %1017, %1018 : vector<8x128xf32>
    %c0_506 = arith.constant 0 : index
    %c29_507 = arith.constant 29 : index
    %1020 = memref.load %arg8[%c0_506, %c29_507] : memref<4x32xf32, #tpu.memory_space<smem>>
    %1021 = vector.broadcast %1020 : f32 to vector<8x128xf32>
    %1022 = arith.mulf %1021, %1019 : vector<8x128xf32>
    %1023 = arith.addf %990, %1022 : vector<8x128xf32>
    %c1_508 = arith.constant 1 : index
    %c29_509 = arith.constant 29 : index
    %1024 = memref.load %arg8[%c1_508, %c29_509] : memref<4x32xf32, #tpu.memory_space<smem>>
    %1025 = vector.broadcast %1024 : f32 to vector<8x128xf32>
    %1026 = arith.mulf %1025, %1019 : vector<8x128xf32>
    %1027 = arith.addf %994, %1026 : vector<8x128xf32>
    %c2_510 = arith.constant 2 : index
    %c29_511 = arith.constant 29 : index
    %1028 = memref.load %arg8[%c2_510, %c29_511] : memref<4x32xf32, #tpu.memory_space<smem>>
    %1029 = vector.broadcast %1028 : f32 to vector<8x128xf32>
    %1030 = arith.mulf %1029, %1019 : vector<8x128xf32>
    %1031 = arith.addf %998, %1030 : vector<8x128xf32>
    %c3_512 = arith.constant 3 : index
    %c29_513 = arith.constant 29 : index
    %1032 = memref.load %arg8[%c3_512, %c29_513] : memref<4x32xf32, #tpu.memory_space<smem>>
    %1033 = vector.broadcast %1032 : f32 to vector<8x128xf32>
    %1034 = arith.mulf %1033, %1019 : vector<8x128xf32>
    %1035 = arith.addf %1002, %1034 : vector<8x128xf32>
    %c0_514 = arith.constant 0 : index
    %c30 = arith.constant 30 : index
    %1036 = memref.load %arg7[%c0_514, %c30] : memref<4x32xf32, #tpu.memory_space<smem>>
    %1037 = vector.broadcast %1036 : f32 to vector<8x128xf32>
    %1038 = arith.mulf %1037, %14 : vector<8x128xf32>
    %c1_515 = arith.constant 1 : index
    %c30_516 = arith.constant 30 : index
    %1039 = memref.load %arg7[%c1_515, %c30_516] : memref<4x32xf32, #tpu.memory_space<smem>>
    %1040 = vector.broadcast %1039 : f32 to vector<8x128xf32>
    %1041 = arith.mulf %1040, %23 : vector<8x128xf32>
    %1042 = arith.addf %1038, %1041 : vector<8x128xf32>
    %c2_517 = arith.constant 2 : index
    %c30_518 = arith.constant 30 : index
    %1043 = memref.load %arg7[%c2_517, %c30_518] : memref<4x32xf32, #tpu.memory_space<smem>>
    %1044 = vector.broadcast %1043 : f32 to vector<8x128xf32>
    %1045 = arith.mulf %1044, %32 : vector<8x128xf32>
    %1046 = arith.addf %1042, %1045 : vector<8x128xf32>
    %c3_519 = arith.constant 3 : index
    %c30_520 = arith.constant 30 : index
    %1047 = memref.load %arg7[%c3_519, %c30_520] : memref<4x32xf32, #tpu.memory_space<smem>>
    %1048 = vector.broadcast %1047 : f32 to vector<8x128xf32>
    %1049 = arith.mulf %1048, %41 : vector<8x128xf32>
    %1050 = arith.addf %1046, %1049 : vector<8x128xf32>
    %cst_521 = arith.constant 0.000000e+00 : f32
    %1051 = vector.broadcast %cst_521 : f32 to vector<8x128xf32>
    %1052 = arith.maximumf %1050, %1051 : vector<8x128xf32>
    %c0_522 = arith.constant 0 : index
    %c30_523 = arith.constant 30 : index
    %1053 = memref.load %arg8[%c0_522, %c30_523] : memref<4x32xf32, #tpu.memory_space<smem>>
    %1054 = vector.broadcast %1053 : f32 to vector<8x128xf32>
    %1055 = arith.mulf %1054, %1052 : vector<8x128xf32>
    %1056 = arith.addf %1023, %1055 : vector<8x128xf32>
    %c1_524 = arith.constant 1 : index
    %c30_525 = arith.constant 30 : index
    %1057 = memref.load %arg8[%c1_524, %c30_525] : memref<4x32xf32, #tpu.memory_space<smem>>
    %1058 = vector.broadcast %1057 : f32 to vector<8x128xf32>
    %1059 = arith.mulf %1058, %1052 : vector<8x128xf32>
    %1060 = arith.addf %1027, %1059 : vector<8x128xf32>
    %c2_526 = arith.constant 2 : index
    %c30_527 = arith.constant 30 : index
    %1061 = memref.load %arg8[%c2_526, %c30_527] : memref<4x32xf32, #tpu.memory_space<smem>>
    %1062 = vector.broadcast %1061 : f32 to vector<8x128xf32>
    %1063 = arith.mulf %1062, %1052 : vector<8x128xf32>
    %1064 = arith.addf %1031, %1063 : vector<8x128xf32>
    %c3_528 = arith.constant 3 : index
    %c30_529 = arith.constant 30 : index
    %1065 = memref.load %arg8[%c3_528, %c30_529] : memref<4x32xf32, #tpu.memory_space<smem>>
    %1066 = vector.broadcast %1065 : f32 to vector<8x128xf32>
    %1067 = arith.mulf %1066, %1052 : vector<8x128xf32>
    %1068 = arith.addf %1035, %1067 : vector<8x128xf32>
    %c0_530 = arith.constant 0 : index
    %c31 = arith.constant 31 : index
    %1069 = memref.load %arg7[%c0_530, %c31] : memref<4x32xf32, #tpu.memory_space<smem>>
    %1070 = vector.broadcast %1069 : f32 to vector<8x128xf32>
    %1071 = arith.mulf %1070, %14 : vector<8x128xf32>
    %c1_531 = arith.constant 1 : index
    %c31_532 = arith.constant 31 : index
    %1072 = memref.load %arg7[%c1_531, %c31_532] : memref<4x32xf32, #tpu.memory_space<smem>>
    %1073 = vector.broadcast %1072 : f32 to vector<8x128xf32>
    %1074 = arith.mulf %1073, %23 : vector<8x128xf32>
    %1075 = arith.addf %1071, %1074 : vector<8x128xf32>
    %c2_533 = arith.constant 2 : index
    %c31_534 = arith.constant 31 : index
    %1076 = memref.load %arg7[%c2_533, %c31_534] : memref<4x32xf32, #tpu.memory_space<smem>>
    %1077 = vector.broadcast %1076 : f32 to vector<8x128xf32>
    %1078 = arith.mulf %1077, %32 : vector<8x128xf32>
    %1079 = arith.addf %1075, %1078 : vector<8x128xf32>
    %c3_535 = arith.constant 3 : index
    %c31_536 = arith.constant 31 : index
    %1080 = memref.load %arg7[%c3_535, %c31_536] : memref<4x32xf32, #tpu.memory_space<smem>>
    %1081 = vector.broadcast %1080 : f32 to vector<8x128xf32>
    %1082 = arith.mulf %1081, %41 : vector<8x128xf32>
    %1083 = arith.addf %1079, %1082 : vector<8x128xf32>
    %cst_537 = arith.constant 0.000000e+00 : f32
    %1084 = vector.broadcast %cst_537 : f32 to vector<8x128xf32>
    %1085 = arith.maximumf %1083, %1084 : vector<8x128xf32>
    %c0_538 = arith.constant 0 : index
    %c31_539 = arith.constant 31 : index
    %1086 = memref.load %arg8[%c0_538, %c31_539] : memref<4x32xf32, #tpu.memory_space<smem>>
    %1087 = vector.broadcast %1086 : f32 to vector<8x128xf32>
    %1088 = arith.mulf %1087, %1085 : vector<8x128xf32>
    %1089 = arith.addf %1056, %1088 : vector<8x128xf32>
    %c1_540 = arith.constant 1 : index
    %c31_541 = arith.constant 31 : index
    %1090 = memref.load %arg8[%c1_540, %c31_541] : memref<4x32xf32, #tpu.memory_space<smem>>
    %1091 = vector.broadcast %1090 : f32 to vector<8x128xf32>
    %1092 = arith.mulf %1091, %1085 : vector<8x128xf32>
    %1093 = arith.addf %1060, %1092 : vector<8x128xf32>
    %c2_542 = arith.constant 2 : index
    %c31_543 = arith.constant 31 : index
    %1094 = memref.load %arg8[%c2_542, %c31_543] : memref<4x32xf32, #tpu.memory_space<smem>>
    %1095 = vector.broadcast %1094 : f32 to vector<8x128xf32>
    %1096 = arith.mulf %1095, %1085 : vector<8x128xf32>
    %1097 = arith.addf %1064, %1096 : vector<8x128xf32>
    %c3_544 = arith.constant 3 : index
    %c31_545 = arith.constant 31 : index
    %1098 = memref.load %arg8[%c3_544, %c31_545] : memref<4x32xf32, #tpu.memory_space<smem>>
    %1099 = vector.broadcast %1098 : f32 to vector<8x128xf32>
    %1100 = arith.mulf %1099, %1085 : vector<8x128xf32>
    %1101 = arith.addf %1068, %1100 : vector<8x128xf32>
    %c0_546 = arith.constant 0 : index
    %c0_547 = arith.constant 0 : index
    %1102 = memref.load %arg6[%c0_546, %c0_547] : memref<4x4xf32, #tpu.memory_space<smem>>
    %c0_548 = arith.constant 0 : index
    %c0_549 = arith.constant 0 : index
    %1103 = arith.index_cast %5 : i32 to index
    %c0_550 = arith.constant 0 : index
    %1104 = vector.load %arg4[%c0_548, %c0_549, %1103, %c0_550] : memref<1x4x8x128xf32, #tpu.memory_space<vmem>>, vector<1x1x8x128xf32>
    %1105 = vector.shape_cast %1104 : vector<1x1x8x128xf32> to vector<8x128xf32>
    %1106 = vector.broadcast %1102 : f32 to vector<8x128xf32>
    %1107 = arith.mulf %1106, %1105 : vector<8x128xf32>
    %c1_551 = arith.constant 1 : index
    %c0_552 = arith.constant 0 : index
    %1108 = memref.load %arg6[%c1_551, %c0_552] : memref<4x4xf32, #tpu.memory_space<smem>>
    %c0_553 = arith.constant 0 : index
    %c1_554 = arith.constant 1 : index
    %1109 = arith.index_cast %5 : i32 to index
    %c0_555 = arith.constant 0 : index
    %1110 = vector.load %arg4[%c0_553, %c1_554, %1109, %c0_555] : memref<1x4x8x128xf32, #tpu.memory_space<vmem>>, vector<1x1x8x128xf32>
    %1111 = vector.shape_cast %1110 : vector<1x1x8x128xf32> to vector<8x128xf32>
    %1112 = vector.broadcast %1108 : f32 to vector<8x128xf32>
    %1113 = arith.mulf %1112, %1111 : vector<8x128xf32>
    %1114 = arith.addf %1107, %1113 : vector<8x128xf32>
    %c2_556 = arith.constant 2 : index
    %c0_557 = arith.constant 0 : index
    %1115 = memref.load %arg6[%c2_556, %c0_557] : memref<4x4xf32, #tpu.memory_space<smem>>
    %c0_558 = arith.constant 0 : index
    %c2_559 = arith.constant 2 : index
    %1116 = arith.index_cast %5 : i32 to index
    %c0_560 = arith.constant 0 : index
    %1117 = vector.load %arg4[%c0_558, %c2_559, %1116, %c0_560] : memref<1x4x8x128xf32, #tpu.memory_space<vmem>>, vector<1x1x8x128xf32>
    %1118 = vector.shape_cast %1117 : vector<1x1x8x128xf32> to vector<8x128xf32>
    %1119 = vector.broadcast %1115 : f32 to vector<8x128xf32>
    %1120 = arith.mulf %1119, %1118 : vector<8x128xf32>
    %1121 = arith.addf %1114, %1120 : vector<8x128xf32>
    %c3_561 = arith.constant 3 : index
    %c0_562 = arith.constant 0 : index
    %1122 = memref.load %arg6[%c3_561, %c0_562] : memref<4x4xf32, #tpu.memory_space<smem>>
    %c0_563 = arith.constant 0 : index
    %c3_564 = arith.constant 3 : index
    %1123 = arith.index_cast %5 : i32 to index
    %c0_565 = arith.constant 0 : index
    %1124 = vector.load %arg4[%c0_563, %c3_564, %1123, %c0_565] : memref<1x4x8x128xf32, #tpu.memory_space<vmem>>, vector<1x1x8x128xf32>
    %1125 = vector.shape_cast %1124 : vector<1x1x8x128xf32> to vector<8x128xf32>
    %1126 = vector.broadcast %1122 : f32 to vector<8x128xf32>
    %1127 = arith.mulf %1126, %1125 : vector<8x128xf32>
    %1128 = arith.addf %1121, %1127 : vector<8x128xf32>
    %c0_566 = arith.constant 0 : index
    %c0_567 = arith.constant 0 : index
    %1129 = arith.index_cast %5 : i32 to index
    %c0_568 = arith.constant 0 : index
    %1130 = vector.load %arg5[%c0_566, %c0_567, %1129, %c0_568] : memref<1x4x8x128xf32, #tpu.memory_space<vmem>>, vector<1x1x8x128xf32>
    %1131 = vector.shape_cast %1130 : vector<1x1x8x128xf32> to vector<8x128xf32>
    %1132 = arith.subf %1089, %1128 : vector<8x128xf32>
    %1133 = arith.mulf %1131, %1132 : vector<8x128xf32>
    %c0_569 = arith.constant 0 : index
    %c0_570 = arith.constant 0 : index
    %1134 = arith.index_cast %5 : i32 to index
    %c0_571 = arith.constant 0 : index
    %1135 = vector.load %arg3[%c0_569, %c0_570, %1134, %c0_571] : memref<1x4x8x128xf32, #tpu.memory_space<vmem>>, vector<1x1x8x128xf32>
    %1136 = vector.shape_cast %1135 : vector<1x1x8x128xf32> to vector<8x128xf32>
    %1137 = arith.subf %1128, %1136 : vector<8x128xf32>
    %1138 = arith.mulf %1137, %1137 : vector<8x128xf32>
    %c0_572 = arith.constant 0 : index
    %c1_573 = arith.constant 1 : index
    %1139 = memref.load %arg6[%c0_572, %c1_573] : memref<4x4xf32, #tpu.memory_space<smem>>
    %c0_574 = arith.constant 0 : index
    %c0_575 = arith.constant 0 : index
    %1140 = arith.index_cast %5 : i32 to index
    %c0_576 = arith.constant 0 : index
    %1141 = vector.load %arg4[%c0_574, %c0_575, %1140, %c0_576] : memref<1x4x8x128xf32, #tpu.memory_space<vmem>>, vector<1x1x8x128xf32>
    %1142 = vector.shape_cast %1141 : vector<1x1x8x128xf32> to vector<8x128xf32>
    %1143 = vector.broadcast %1139 : f32 to vector<8x128xf32>
    %1144 = arith.mulf %1143, %1142 : vector<8x128xf32>
    %c1_577 = arith.constant 1 : index
    %c1_578 = arith.constant 1 : index
    %1145 = memref.load %arg6[%c1_577, %c1_578] : memref<4x4xf32, #tpu.memory_space<smem>>
    %c0_579 = arith.constant 0 : index
    %c1_580 = arith.constant 1 : index
    %1146 = arith.index_cast %5 : i32 to index
    %c0_581 = arith.constant 0 : index
    %1147 = vector.load %arg4[%c0_579, %c1_580, %1146, %c0_581] : memref<1x4x8x128xf32, #tpu.memory_space<vmem>>, vector<1x1x8x128xf32>
    %1148 = vector.shape_cast %1147 : vector<1x1x8x128xf32> to vector<8x128xf32>
    %1149 = vector.broadcast %1145 : f32 to vector<8x128xf32>
    %1150 = arith.mulf %1149, %1148 : vector<8x128xf32>
    %1151 = arith.addf %1144, %1150 : vector<8x128xf32>
    %c2_582 = arith.constant 2 : index
    %c1_583 = arith.constant 1 : index
    %1152 = memref.load %arg6[%c2_582, %c1_583] : memref<4x4xf32, #tpu.memory_space<smem>>
    %c0_584 = arith.constant 0 : index
    %c2_585 = arith.constant 2 : index
    %1153 = arith.index_cast %5 : i32 to index
    %c0_586 = arith.constant 0 : index
    %1154 = vector.load %arg4[%c0_584, %c2_585, %1153, %c0_586] : memref<1x4x8x128xf32, #tpu.memory_space<vmem>>, vector<1x1x8x128xf32>
    %1155 = vector.shape_cast %1154 : vector<1x1x8x128xf32> to vector<8x128xf32>
    %1156 = vector.broadcast %1152 : f32 to vector<8x128xf32>
    %1157 = arith.mulf %1156, %1155 : vector<8x128xf32>
    %1158 = arith.addf %1151, %1157 : vector<8x128xf32>
    %c3_587 = arith.constant 3 : index
    %c1_588 = arith.constant 1 : index
    %1159 = memref.load %arg6[%c3_587, %c1_588] : memref<4x4xf32, #tpu.memory_space<smem>>
    %c0_589 = arith.constant 0 : index
    %c3_590 = arith.constant 3 : index
    %1160 = arith.index_cast %5 : i32 to index
    %c0_591 = arith.constant 0 : index
    %1161 = vector.load %arg4[%c0_589, %c3_590, %1160, %c0_591] : memref<1x4x8x128xf32, #tpu.memory_space<vmem>>, vector<1x1x8x128xf32>
    %1162 = vector.shape_cast %1161 : vector<1x1x8x128xf32> to vector<8x128xf32>
    %1163 = vector.broadcast %1159 : f32 to vector<8x128xf32>
    %1164 = arith.mulf %1163, %1162 : vector<8x128xf32>
    %1165 = arith.addf %1158, %1164 : vector<8x128xf32>
    %c0_592 = arith.constant 0 : index
    %c1_593 = arith.constant 1 : index
    %1166 = arith.index_cast %5 : i32 to index
    %c0_594 = arith.constant 0 : index
    %1167 = vector.load %arg5[%c0_592, %c1_593, %1166, %c0_594] : memref<1x4x8x128xf32, #tpu.memory_space<vmem>>, vector<1x1x8x128xf32>
    %1168 = vector.shape_cast %1167 : vector<1x1x8x128xf32> to vector<8x128xf32>
    %1169 = arith.subf %1093, %1165 : vector<8x128xf32>
    %1170 = arith.mulf %1168, %1169 : vector<8x128xf32>
    %c0_595 = arith.constant 0 : index
    %c1_596 = arith.constant 1 : index
    %1171 = arith.index_cast %5 : i32 to index
    %c0_597 = arith.constant 0 : index
    %1172 = vector.load %arg3[%c0_595, %c1_596, %1171, %c0_597] : memref<1x4x8x128xf32, #tpu.memory_space<vmem>>, vector<1x1x8x128xf32>
    %1173 = vector.shape_cast %1172 : vector<1x1x8x128xf32> to vector<8x128xf32>
    %1174 = arith.subf %1165, %1173 : vector<8x128xf32>
    %1175 = arith.addf %1133, %1170 : vector<8x128xf32>
    %1176 = arith.mulf %1174, %1174 : vector<8x128xf32>
    %1177 = arith.addf %1138, %1176 : vector<8x128xf32>
    %c0_598 = arith.constant 0 : index
    %c2_599 = arith.constant 2 : index
    %1178 = memref.load %arg6[%c0_598, %c2_599] : memref<4x4xf32, #tpu.memory_space<smem>>
    %c0_600 = arith.constant 0 : index
    %c0_601 = arith.constant 0 : index
    %1179 = arith.index_cast %5 : i32 to index
    %c0_602 = arith.constant 0 : index
    %1180 = vector.load %arg4[%c0_600, %c0_601, %1179, %c0_602] : memref<1x4x8x128xf32, #tpu.memory_space<vmem>>, vector<1x1x8x128xf32>
    %1181 = vector.shape_cast %1180 : vector<1x1x8x128xf32> to vector<8x128xf32>
    %1182 = vector.broadcast %1178 : f32 to vector<8x128xf32>
    %1183 = arith.mulf %1182, %1181 : vector<8x128xf32>
    %c1_603 = arith.constant 1 : index
    %c2_604 = arith.constant 2 : index
    %1184 = memref.load %arg6[%c1_603, %c2_604] : memref<4x4xf32, #tpu.memory_space<smem>>
    %c0_605 = arith.constant 0 : index
    %c1_606 = arith.constant 1 : index
    %1185 = arith.index_cast %5 : i32 to index
    %c0_607 = arith.constant 0 : index
    %1186 = vector.load %arg4[%c0_605, %c1_606, %1185, %c0_607] : memref<1x4x8x128xf32, #tpu.memory_space<vmem>>, vector<1x1x8x128xf32>
    %1187 = vector.shape_cast %1186 : vector<1x1x8x128xf32> to vector<8x128xf32>
    %1188 = vector.broadcast %1184 : f32 to vector<8x128xf32>
    %1189 = arith.mulf %1188, %1187 : vector<8x128xf32>
    %1190 = arith.addf %1183, %1189 : vector<8x128xf32>
    %c2_608 = arith.constant 2 : index
    %c2_609 = arith.constant 2 : index
    %1191 = memref.load %arg6[%c2_608, %c2_609] : memref<4x4xf32, #tpu.memory_space<smem>>
    %c0_610 = arith.constant 0 : index
    %c2_611 = arith.constant 2 : index
    %1192 = arith.index_cast %5 : i32 to index
    %c0_612 = arith.constant 0 : index
    %1193 = vector.load %arg4[%c0_610, %c2_611, %1192, %c0_612] : memref<1x4x8x128xf32, #tpu.memory_space<vmem>>, vector<1x1x8x128xf32>
    %1194 = vector.shape_cast %1193 : vector<1x1x8x128xf32> to vector<8x128xf32>
    %1195 = vector.broadcast %1191 : f32 to vector<8x128xf32>
    %1196 = arith.mulf %1195, %1194 : vector<8x128xf32>
    %1197 = arith.addf %1190, %1196 : vector<8x128xf32>
    %c3_613 = arith.constant 3 : index
    %c2_614 = arith.constant 2 : index
    %1198 = memref.load %arg6[%c3_613, %c2_614] : memref<4x4xf32, #tpu.memory_space<smem>>
    %c0_615 = arith.constant 0 : index
    %c3_616 = arith.constant 3 : index
    %1199 = arith.index_cast %5 : i32 to index
    %c0_617 = arith.constant 0 : index
    %1200 = vector.load %arg4[%c0_615, %c3_616, %1199, %c0_617] : memref<1x4x8x128xf32, #tpu.memory_space<vmem>>, vector<1x1x8x128xf32>
    %1201 = vector.shape_cast %1200 : vector<1x1x8x128xf32> to vector<8x128xf32>
    %1202 = vector.broadcast %1198 : f32 to vector<8x128xf32>
    %1203 = arith.mulf %1202, %1201 : vector<8x128xf32>
    %1204 = arith.addf %1197, %1203 : vector<8x128xf32>
    %c0_618 = arith.constant 0 : index
    %c2_619 = arith.constant 2 : index
    %1205 = arith.index_cast %5 : i32 to index
    %c0_620 = arith.constant 0 : index
    %1206 = vector.load %arg5[%c0_618, %c2_619, %1205, %c0_620] : memref<1x4x8x128xf32, #tpu.memory_space<vmem>>, vector<1x1x8x128xf32>
    %1207 = vector.shape_cast %1206 : vector<1x1x8x128xf32> to vector<8x128xf32>
    %1208 = arith.subf %1097, %1204 : vector<8x128xf32>
    %1209 = arith.mulf %1207, %1208 : vector<8x128xf32>
    %c0_621 = arith.constant 0 : index
    %c2_622 = arith.constant 2 : index
    %1210 = arith.index_cast %5 : i32 to index
    %c0_623 = arith.constant 0 : index
    %1211 = vector.load %arg3[%c0_621, %c2_622, %1210, %c0_623] : memref<1x4x8x128xf32, #tpu.memory_space<vmem>>, vector<1x1x8x128xf32>
    %1212 = vector.shape_cast %1211 : vector<1x1x8x128xf32> to vector<8x128xf32>
    %1213 = arith.subf %1204, %1212 : vector<8x128xf32>
    %1214 = arith.addf %1175, %1209 : vector<8x128xf32>
    %1215 = arith.mulf %1213, %1213 : vector<8x128xf32>
    %1216 = arith.addf %1177, %1215 : vector<8x128xf32>
    %c0_624 = arith.constant 0 : index
    %c3_625 = arith.constant 3 : index
    %1217 = memref.load %arg6[%c0_624, %c3_625] : memref<4x4xf32, #tpu.memory_space<smem>>
    %c0_626 = arith.constant 0 : index
    %c0_627 = arith.constant 0 : index
    %1218 = arith.index_cast %5 : i32 to index
    %c0_628 = arith.constant 0 : index
    %1219 = vector.load %arg4[%c0_626, %c0_627, %1218, %c0_628] : memref<1x4x8x128xf32, #tpu.memory_space<vmem>>, vector<1x1x8x128xf32>
    %1220 = vector.shape_cast %1219 : vector<1x1x8x128xf32> to vector<8x128xf32>
    %1221 = vector.broadcast %1217 : f32 to vector<8x128xf32>
    %1222 = arith.mulf %1221, %1220 : vector<8x128xf32>
    %c1_629 = arith.constant 1 : index
    %c3_630 = arith.constant 3 : index
    %1223 = memref.load %arg6[%c1_629, %c3_630] : memref<4x4xf32, #tpu.memory_space<smem>>
    %c0_631 = arith.constant 0 : index
    %c1_632 = arith.constant 1 : index
    %1224 = arith.index_cast %5 : i32 to index
    %c0_633 = arith.constant 0 : index
    %1225 = vector.load %arg4[%c0_631, %c1_632, %1224, %c0_633] : memref<1x4x8x128xf32, #tpu.memory_space<vmem>>, vector<1x1x8x128xf32>
    %1226 = vector.shape_cast %1225 : vector<1x1x8x128xf32> to vector<8x128xf32>
    %1227 = vector.broadcast %1223 : f32 to vector<8x128xf32>
    %1228 = arith.mulf %1227, %1226 : vector<8x128xf32>
    %1229 = arith.addf %1222, %1228 : vector<8x128xf32>
    %c2_634 = arith.constant 2 : index
    %c3_635 = arith.constant 3 : index
    %1230 = memref.load %arg6[%c2_634, %c3_635] : memref<4x4xf32, #tpu.memory_space<smem>>
    %c0_636 = arith.constant 0 : index
    %c2_637 = arith.constant 2 : index
    %1231 = arith.index_cast %5 : i32 to index
    %c0_638 = arith.constant 0 : index
    %1232 = vector.load %arg4[%c0_636, %c2_637, %1231, %c0_638] : memref<1x4x8x128xf32, #tpu.memory_space<vmem>>, vector<1x1x8x128xf32>
    %1233 = vector.shape_cast %1232 : vector<1x1x8x128xf32> to vector<8x128xf32>
    %1234 = vector.broadcast %1230 : f32 to vector<8x128xf32>
    %1235 = arith.mulf %1234, %1233 : vector<8x128xf32>
    %1236 = arith.addf %1229, %1235 : vector<8x128xf32>
    %c3_639 = arith.constant 3 : index
    %c3_640 = arith.constant 3 : index
    %1237 = memref.load %arg6[%c3_639, %c3_640] : memref<4x4xf32, #tpu.memory_space<smem>>
    %c0_641 = arith.constant 0 : index
    %c3_642 = arith.constant 3 : index
    %1238 = arith.index_cast %5 : i32 to index
    %c0_643 = arith.constant 0 : index
    %1239 = vector.load %arg4[%c0_641, %c3_642, %1238, %c0_643] : memref<1x4x8x128xf32, #tpu.memory_space<vmem>>, vector<1x1x8x128xf32>
    %1240 = vector.shape_cast %1239 : vector<1x1x8x128xf32> to vector<8x128xf32>
    %1241 = vector.broadcast %1237 : f32 to vector<8x128xf32>
    %1242 = arith.mulf %1241, %1240 : vector<8x128xf32>
    %1243 = arith.addf %1236, %1242 : vector<8x128xf32>
    %c0_644 = arith.constant 0 : index
    %c3_645 = arith.constant 3 : index
    %1244 = arith.index_cast %5 : i32 to index
    %c0_646 = arith.constant 0 : index
    %1245 = vector.load %arg5[%c0_644, %c3_645, %1244, %c0_646] : memref<1x4x8x128xf32, #tpu.memory_space<vmem>>, vector<1x1x8x128xf32>
    %1246 = vector.shape_cast %1245 : vector<1x1x8x128xf32> to vector<8x128xf32>
    %1247 = arith.subf %1101, %1243 : vector<8x128xf32>
    %1248 = arith.mulf %1246, %1247 : vector<8x128xf32>
    %c0_647 = arith.constant 0 : index
    %c3_648 = arith.constant 3 : index
    %1249 = arith.index_cast %5 : i32 to index
    %c0_649 = arith.constant 0 : index
    %1250 = vector.load %arg3[%c0_647, %c3_648, %1249, %c0_649] : memref<1x4x8x128xf32, #tpu.memory_space<vmem>>, vector<1x1x8x128xf32>
    %1251 = vector.shape_cast %1250 : vector<1x1x8x128xf32> to vector<8x128xf32>
    %1252 = arith.subf %1243, %1251 : vector<8x128xf32>
    %1253 = arith.addf %1214, %1248 : vector<8x128xf32>
    %1254 = arith.mulf %1252, %1252 : vector<8x128xf32>
    %1255 = arith.addf %1216, %1254 : vector<8x128xf32>
    %1256 = arith.addf %3, %1253 : vector<8x128xf32>
    %1257 = arith.addf %3, %1255 : vector<8x128xf32>
    %c1_i32 = arith.constant 1 : i32
    %c0_650 = arith.constant 0 : index
    %c0_651 = arith.constant 0 : index
    %c0_652 = arith.constant 0 : index
    %1258 = vector.load %arg9[%c0_650, %c0_651, %c0_652] : memref<1x8x128xf32, #tpu.memory_space<vmem>>, vector<1x8x128xf32>
    %1259 = vector.shape_cast %1258 : vector<1x8x128xf32> to vector<8x128xf32>
    %1260 = arith.addf %1259, %1256 : vector<8x128xf32>
    %c0_653 = arith.constant 0 : index
    %c0_654 = arith.constant 0 : index
    %c0_655 = arith.constant 0 : index
    %1261 = vector.load %arg9[%c0_653, %c0_654, %c0_655] : memref<1x8x128xf32, #tpu.memory_space<vmem>>, vector<1x8x128xf32>
    %1262 = vector.shape_cast %1261 : vector<1x8x128xf32> to vector<8x128xf32>
    %1263 = vector.shape_cast %1260 : vector<8x128xf32> to vector<1x8x128xf32>
    tpu.vector_store %arg9[%c0_653, %c0_654, %c0_655], %1263 {strides = array<i32>} : memref<1x8x128xf32, #tpu.memory_space<vmem>>, vector<1x8x128xf32>,
    %c0_656 = arith.constant 0 : index
    %c0_657 = arith.constant 0 : index
    %c0_658 = arith.constant 0 : index
    %1264 = vector.load %arg10[%c0_656, %c0_657, %c0_658] : memref<1x8x128xf32, #tpu.memory_space<vmem>>, vector<1x8x128xf32>
    %1265 = vector.shape_cast %1264 : vector<1x8x128xf32> to vector<8x128xf32>
    %1266 = arith.addf %1265, %1257 : vector<8x128xf32>
    %c0_659 = arith.constant 0 : index
    %c0_660 = arith.constant 0 : index
    %c0_661 = arith.constant 0 : index
    %1267 = vector.load %arg10[%c0_659, %c0_660, %c0_661] : memref<1x8x128xf32, #tpu.memory_space<vmem>>, vector<1x8x128xf32>
    %1268 = vector.shape_cast %1267 : vector<1x8x128xf32> to vector<8x128xf32>
    %1269 = vector.shape_cast %1266 : vector<8x128xf32> to vector<1x8x128xf32>
    tpu.vector_store %arg10[%c0_659, %c0_660, %c0_661], %1269 {strides = array<i32>} : memref<1x8x128xf32, #tpu.memory_space<vmem>>, vector<1x8x128xf32>,
    return
  }
  func.func @transform_0(%arg0: i32, %arg1: i32, %arg2: i32) -> (i32, i32, i32, i32) {
    %c1_i32 = arith.constant 1 : i32
    %0 = arith.muli %arg1, %c1_i32 : i32
    %1 = arith.addi %0, %arg2 : i32
    %c0_i32 = arith.constant 0 : i32
    %c0_i32_0 = arith.constant 0 : i32
    %c0_i32_1 = arith.constant 0 : i32
    return %arg0, %c0_i32, %1, %c0_i32_0 : i32, i32, i32, i32
  }
  func.func @transform_1(%arg0: i32, %arg1: i32, %arg2: i32) -> (i32, i32, i32, i32) {
    %c1_i32 = arith.constant 1 : i32
    %0 = arith.muli %arg1, %c1_i32 : i32
    %1 = arith.addi %0, %arg2 : i32
    %c0_i32 = arith.constant 0 : i32
    %c0_i32_0 = arith.constant 0 : i32
    %c0_i32_1 = arith.constant 0 : i32
    return %arg0, %c0_i32, %1, %c0_i32_0 : i32, i32, i32, i32
  }
  func.func @transform_2(%arg0: i32, %arg1: i32, %arg2: i32) -> (i32, i32, i32, i32) {
    %c1_i32 = arith.constant 1 : i32
    %0 = arith.muli %arg1, %c1_i32 : i32
    %1 = arith.addi %0, %arg2 : i32
    %c0_i32 = arith.constant 0 : i32
    %c0_i32_0 = arith.constant 0 : i32
    %c0_i32_1 = arith.constant 0 : i32
    return %arg0, %c0_i32, %1, %c0_i32_0 : i32, i32, i32, i32
  }
  func.func @transform_3(%arg0: i32, %arg1: i32, %arg2: i32) -> (i32, i32) {
    %c0_i32 = arith.constant 0 : i32
    %c0_i32_0 = arith.constant 0 : i32
    %c0_i32_1 = arith.constant 0 : i32
    return %c0_i32, %c0_i32_0 : i32, i32
  }
  func.func @transform_4(%arg0: i32, %arg1: i32, %arg2: i32) -> (i32, i32) {
    %c0_i32 = arith.constant 0 : i32
    %c0_i32_0 = arith.constant 0 : i32
    %c0_i32_1 = arith.constant 0 : i32
    return %c0_i32, %c0_i32_0 : i32, i32
  }
  func.func @transform_5(%arg0: i32, %arg1: i32, %arg2: i32) -> (i32, i32) {
    %c0_i32 = arith.constant 0 : i32
    %c0_i32_0 = arith.constant 0 : i32
    %c0_i32_1 = arith.constant 0 : i32
    return %c0_i32, %c0_i32_0 : i32, i32
  }
  func.func @transform_6(%arg0: i32, %arg1: i32, %arg2: i32) -> (i32, i32, i32) {
    %c1_i32 = arith.constant 1 : i32
    %0 = arith.muli %arg0, %c1_i32 : i32
    %1 = arith.addi %0, %arg1 : i32
    %c0_i32 = arith.constant 0 : i32
    %c0_i32_0 = arith.constant 0 : i32
    %c0_i32_1 = arith.constant 0 : i32
    return %1, %c0_i32, %c0_i32_0 : i32, i32, i32
  }
  func.func @transform_7(%arg0: i32, %arg1: i32, %arg2: i32) -> (i32, i32, i32) {
    %c1_i32 = arith.constant 1 : i32
    %0 = arith.muli %arg0, %c1_i32 : i32
    %1 = arith.addi %0, %arg1 : i32
    %c0_i32 = arith.constant 0 : i32
    %c0_i32_0 = arith.constant 0 : i32
    %c0_i32_1 = arith.constant 0 : i32
    return %1, %c0_i32, %c0_i32_0 : i32, i32, i32
  }
}

</mosaic_0001>

<llo_original>
// kernel: tpu_custom_call.1
$region0: #{tpu_custom_call.1}
  #allocation0 [shape = 'u32[]', space=smem, size = 0x4, offset = 0x4, fixed_abs, tag = 'smem constant byte address 0x4 - core index']
  #allocation1 [shape = 'u32[72,128]{1,0:T(1,128)}', space=vmem, size = 0x9000, scoped, tag = 'internal scratch']
  %s0 = inlined_call_operand.hbm [shape: f32[2,4,8,128], index: 0, kind: input, shape index: {}]
  %s1 = inlined_call_operand.hbm [shape: f32[2,4,8,128], index: 1, kind: input, shape index: {}]
  %s2 = inlined_call_operand.hbm [shape: f32[2,4,8,128], index: 2, kind: input, shape index: {}]
  %s3 = inlined_call_operand.hbm [shape: f32[4,4], index: 3, kind: input, shape index: {}]
  %s4 = inlined_call_operand.hbm [shape: f32[4,32], index: 4, kind: input, shape index: {}]
  %s5 = inlined_call_operand.vmem [shape: f32[4,32], index: 5, kind: input, shape index: {}]
  %s6 = inlined_call_operand.hbm [shape: f32[2,8,128], index: 6, kind: output, shape index: {0}]
  %s7 = inlined_call_operand.hbm [shape: f32[2,8,128], index: 7, kind: output, shape index: {1}]
  %8 = xla_tuple %s6, %s7
  %s9 = sld [smem:[#allocation0]]
  $region93: #{tpu_custom_call.1} parent=0
    _
  %s11 = ssub.s32 1, %s9
  %s12 = scalar_select 0, %s11, %s9
  $region1: #{tpu_custom_call.1} parent=0
    #allocation2 [shape = 'u8[32768]{0}', space=vmem, size = 0x8000, scoped, tag = 'input window, operand 0']
    #allocation3 [shape = 's32[2]{0}', space=sflag, size = 0x8, scoped, tag = 'scoped memory for tpu_custom_call.1']
    #allocation4 [shape = 's32[2]{0}', space=sflag, size = 0x8, scoped, tag = 'scoped memory for tpu_custom_call.1']
    #allocation5 [shape = 's32[2]{0}', space=sflag, size = 0x8, scoped, tag = 'scoped memory for tpu_custom_call.1']
    #allocation6 [shape = 's32[2]{0}', space=sflag, size = 0x8, scoped, tag = 'scoped memory for tpu_custom_call.1']
    #allocation7 [shape = 'u8[32768]{0}', space=vmem, size = 0x8000, scoped, tag = 'input window, operand 1']
    #allocation8 [shape = 's32[2]{0}', space=sflag, size = 0x8, scoped, tag = 'scoped memory for tpu_custom_call.1']
    #allocation9 [shape = 'u8[32768]{0}', space=vmem, size = 0x8000, scoped, tag = 'input window, operand 2']
    #allocation10 [shape = 'u8[2048]{0}', space=smem, size = 0x800, scoped, tag = 'input window, operand 3, single buffered']
    #allocation11 [shape = 'u8[2048]{0}', space=smem, size = 0x800, scoped, tag = 'input window, operand 4, single buffered']
    #allocation12 [shape = 's32[1]{0}', space=sflag, size = 0x4, scoped, tag = 'scoped memory for tpu_custom_call.1']
    #allocation13 [shape = 'u8[2048]{0}', space=smem, size = 0x800, scoped, tag = 'input window, operand 5, single buffered']
    #allocation14 [shape = 'u8[8192]{0}', space=vmem, size = 0x2000, scoped, tag = 'output window, operand 0']
    #allocation15 [shape = 'u8[8192]{0}', space=vmem, size = 0x2000, scoped, tag = 'output window, operand 1']
    #allocation16 [shape = 's32[2]{0}', space=sflag, size = 0x8, scoped, tag = 'scoped memory for tpu_custom_call.1']
    %13 = vsyncpa [#allocation3], 0
    %s14 = scalar_lea.sflag [#allocation3], 1
    %15 = vsyncpa %s14, 0
    %16 = vsyncpa [#allocation8], 0
    %s17 = scalar_lea.sflag [#allocation8], 1
    %18 = vsyncpa %s17, 0
    %19 = vsyncpa [#allocation5], 0
    %20 = vsyncpa [#allocation12], 0
    %21 = vsyncpa [#allocation6], 0
    %22 = vsyncpa [#allocation4], 0
    %s23 = scalar_lea.sflag [#allocation4], 1
    %24 = vsyncpa %s23, 0
    %25 = vsyncpa [#allocation16], 0
    %s26 = scalar_lea.sflag [#allocation16], 1
    %27 = vsyncpa %s26, 0
    loop: start=0, step=1, limit=4
    $region2: #{tpu_custom_call.1} parent=1 // loop_pre_header
      _
    $region3: #{tpu_custom_call.1} parent=1 // loop_header
      %s29 = sphi 0, %s33
      %p30 = scmp.ge.s32.totalorder %s29, 4
      %s36 = sphi 0, %s55
      %s37 = sphi 0, %s51
      %s38 = sphi 0, %s47
      %s39 = sphi 0, %s36
      %s40 = sphi 0, %s37
      %s41 = sphi 0, %s38
      %s42 = sphi 0, %s39
      %s43 = sphi 0, %s40
      %s44 = sphi 0, %s41
      %s62 = sphi 0, %s64
      %s65 = sphi 0, %s62
      %s66 = sphi 0, %s65
      %s82 = sphi 0, %s66
      %s92 = sphi 0, %s94
      %s95 = sphi 0, %s92
      %s96 = sphi 0, %s95
      %s112 = sphi 0, %s96
      %s122 = sphi 0, %s124
      %s125 = sphi 0, %s122
      %s126 = sphi 0, %s125
      %s142 = sphi 0, %s126
      %s146 = sphi 0, %s146
      %s148 = sphi 0, %s146
      %s149 = sphi 0, %s148
      %s163 = sphi 0, %s149
      %s167 = sphi 0, %s167
      %s169 = sphi 0, %s167
      %s170 = sphi 0, %s169
      %s184 = sphi 0, %s170
      %s188 = sphi 0, %s188
      %s190 = sphi 0, %s188
      %s191 = sphi 0, %s190
      %s205 = sphi 0, %s191
      %s213 = sphi 0, %s215
      %s216 = sphi 0, %s213
      %s217 = sphi 0, %s216
      %s233 = sphi 0, %s217
      %s241 = sphi 0, %s243
      %s244 = sphi 0, %s241
      %s245 = sphi 0, %s244
      %s261 = sphi 0, %s245
    $region4: #{tpu_custom_call.1} parent=1 // loop_header_branch
      %32 = sbr.rel (%p30) target = $region8
    $region5: #{tpu_custom_call.1} parent=1 // loop_body
      %s34 = ssub.s32 %s29, 1
      %s35 = ssub.s32 %s29, 2
      %s45 = sadd.s32 1, %s38
      %p46 = scmp.ge.s32.totalorder %s45, 1
      %s47 = scalar_select %p46, 0, %s45
      %s48 = sadd.s32 1, %s37
      %s49 = scalar_select %p46, %s48, %s37
      %p50 = scmp.ge.s32.totalorder %s49, 1
      %s51 = scalar_select %p50, 0, %s49
      %s52 = sadd.s32 1, %s36
      %s53 = scalar_select %p50, %s52, %s36
      %p54 = scmp.ge.s32.totalorder %s53, 2
      %s55 = scalar_select %p54, 0, %s53
      %s56 = sadd.s32 %s37, %s38
      %s57 = sadd.s32 %s51, %s47
      %s58 = ssub.s32 %s36, %s55
      %s59 = ssub.s32 %s56, %s57
      %s60 = sor.u32 %s58, %s59
      %p61 = scmp.eq.s32.totalorder %s60, 0
      %s63 = sadd.s32 %s62, 1
      %s64 = scalar_select %p61, %s62, %s63
      %p67 = pneg %p61
      %p68 = scmp.eq.s32.totalorder %s29, 1
      %p69 = por %p67, %p68
      %p70 = scmp.ne.s32.totalorder %s62, %s65
      %p71 = scmp.eq.s32.totalorder %s29, 0
      %p72 = por %p70, %p71
      %p73 = scmp.ne.s32.totalorder %s62, %s65
      %p74 = scmp.eq.s32.totalorder %s34, 1
      %p75 = por %p73, %p74
      %p76 = scmp.ne.s32.totalorder %s65, %s66
      %p77 = scmp.eq.s32.totalorder %s34, 0
      %p78 = por %p76, %p77
      %p79 = scmp.ne.s32.totalorder %s65, %s66
      %p80 = scmp.eq.s32.totalorder %s35, 1
      %p81 = por %p79, %p80
      %p83 = scmp.ne.s32.totalorder %s66, %s82
      %p84 = scmp.eq.s32.totalorder %s35, 0
      %p85 = por %p83, %p84
      %s86 = sadd.s32 %s37, %s38
      %s87 = sadd.s32 %s51, %s47
      %s88 = ssub.s32 %s36, %s55
      %s89 = ssub.s32 %s86, %s87
      %s90 = sor.u32 %s88, %s89
      %p91 = scmp.eq.s32.totalorder %s90, 0
      %s93 = sadd.s32 %s92, 1
      %s94 = scalar_select %p91, %s92, %s93
      %p97 = pneg %p91
      %p98 = scmp.eq.s32.totalorder %s29, 1
      %p99 = por %p97, %p98
      %p100 = scmp.ne.s32.totalorder %s92, %s95
      %p101 = scmp.eq.s32.totalorder %s29, 0
      %p102 = por %p100, %p101
      %p103 = scmp.ne.s32.totalorder %s92, %s95
      %p104 = scmp.eq.s32.totalorder %s34, 1
      %p105 = por %p103, %p104
      %p106 = scmp.ne.s32.totalorder %s95, %s96
      %p107 = scmp.eq.s32.totalorder %s34, 0
      %p108 = por %p106, %p107
      %p109 = scmp.ne.s32.totalorder %s95, %s96
      %p110 = scmp.eq.s32.totalorder %s35, 1
      %p111 = por %p109, %p110
      %p113 = scmp.ne.s32.totalorder %s96, %s112
      %p114 = scmp.eq.s32.totalorder %s35, 0
      %p115 = por %p113, %p114
      %s116 = sadd.s32 %s37, %s38
      %s117 = sadd.s32 %s51, %s47
      %s118 = ssub.s32 %s36, %s55
      %s119 = ssub.s32 %s116, %s117
      %s120 = sor.u32 %s118, %s119
      %p121 = scmp.eq.s32.totalorder %s120, 0
      %s123 = sadd.s32 %s122, 1
      %s124 = scalar_select %p121, %s122, %s123
      %p127 = pneg %p121
      %p128 = scmp.eq.s32.totalorder %s29, 1
      %p129 = por %p127, %p128
      %p130 = scmp.ne.s32.totalorder %s122, %s125
      %p131 = scmp.eq.s32.totalorder %s29, 0
      %p132 = por %p130, %p131
      %p133 = scmp.ne.s32.totalorder %s122, %s125
      %p134 = scmp.eq.s32.totalorder %s34, 1
      %p135 = por %p133, %p134
      %p136 = scmp.ne.s32.totalorder %s125, %s126
      %p137 = scmp.eq.s32.totalorder %s34, 0
      %p138 = por %p136, %p137
      %p139 = scmp.ne.s32.totalorder %s125, %s126
      %p140 = scmp.eq.s32.totalorder %s35, 1
      %p141 = por %p139, %p140
      %p143 = scmp.ne.s32.totalorder %s126, %s142
      %p144 = scmp.eq.s32.totalorder %s35, 0
      %p145 = por %p143, %p144
      %s147 = sadd.s32 %s146, 1
      %p150 = scmp.eq.s32.totalorder %s29, 1
      %p151 = scmp.ne.s32.totalorder %s146, %s148
      %p152 = scmp.eq.s32.totalorder %s29, 0
      %p153 = por %p151, %p152
      %p154 = scmp.ne.s32.totalorder %s146, %s148
      %p155 = scmp.eq.s32.totalorder %s34, 1
      %p156 = por %p154, %p155
      %p157 = scmp.ne.s32.totalorder %s148, %s149
      %p158 = scmp.eq.s32.totalorder %s34, 0
      %p159 = por %p157, %p158
      %p160 = scmp.ne.s32.totalorder %s148, %s149
      %p161 = scmp.eq.s32.totalorder %s35, 1
      %p162 = por %p160, %p161
      %p164 = scmp.ne.s32.totalorder %s149, %s163
      %p165 = scmp.eq.s32.totalorder %s35, 0
      %p166 = por %p164, %p165
      %s168 = sadd.s32 %s167, 1
      %p171 = scmp.eq.s32.totalorder %s29, 1
      %p172 = scmp.ne.s32.totalorder %s167, %s169
      %p173 = scmp.eq.s32.totalorder %s29, 0
      %p174 = por %p172, %p173
      %p175 = scmp.ne.s32.totalorder %s167, %s169
      %p176 = scmp.eq.s32.totalorder %s34, 1
      %p177 = por %p175, %p176
      %p178 = scmp.ne.s32.totalorder %s169, %s170
      %p179 = scmp.eq.s32.totalorder %s34, 0
      %p180 = por %p178, %p179
      %p181 = scmp.ne.s32.totalorder %s169, %s170
      %p182 = scmp.eq.s32.totalorder %s35, 1
      %p183 = por %p181, %p182
      %p185 = scmp.ne.s32.totalorder %s170, %s184
      %p186 = scmp.eq.s32.totalorder %s35, 0
      %p187 = por %p185, %p186
      %s189 = sadd.s32 %s188, 1
      %p192 = scmp.eq.s32.totalorder %s29, 1
      %p193 = scmp.ne.s32.totalorder %s188, %s190
      %p194 = scmp.eq.s32.totalorder %s29, 0
      %p195 = por %p193, %p194
      %p196 = scmp.ne.s32.totalorder %s188, %s190
      %p197 = scmp.eq.s32.totalorder %s34, 1
      %p198 = por %p196, %p197
      %p199 = scmp.ne.s32.totalorder %s190, %s191
      %p200 = scmp.eq.s32.totalorder %s34, 0
      %p201 = por %p199, %p200
      %p202 = scmp.ne.s32.totalorder %s190, %s191
      %p203 = scmp.eq.s32.totalorder %s35, 1
      %p204 = por %p202, %p203
      %p206 = scmp.ne.s32.totalorder %s191, %s205
      %p207 = scmp.eq.s32.totalorder %s35, 0
      %p208 = por %p206, %p207
      %s209 = sadd.s32 %s36, %s37
      %s210 = sadd.s32 %s55, %s51
      %s211 = ssub.s32 %s209, %s210
      %p212 = scmp.eq.s32.totalorder %s211, 0
      %s214 = sadd.s32 %s213, 1
      %s215 = scalar_select %p212, %s213, %s214
      %p218 = pneg %p212
      %p219 = scmp.eq.s32.totalorder %s29, 1
      %p220 = por %p218, %p219
      %p221 = scmp.ne.s32.totalorder %s213, %s216
      %p222 = scmp.eq.s32.totalorder %s29, 0
      %p223 = por %p221, %p222
      %p224 = scmp.ne.s32.totalorder %s213, %s216
      %p225 = scmp.eq.s32.totalorder %s34, 1
      %p226 = por %p224, %p225
      %p227 = scmp.ne.s32.totalorder %s216, %s217
      %p228 = scmp.eq.s32.totalorder %s34, 0
      %p229 = por %p227, %p228
      %p230 = scmp.ne.s32.totalorder %s216, %s217
      %p231 = scmp.eq.s32.totalorder %s35, 1
      %p232 = por %p230, %p231
      %p234 = scmp.ne.s32.totalorder %s217, %s233
      %p235 = scmp.eq.s32.totalorder %s35, 0
      %p236 = por %p234, %p235
      %s237 = sadd.s32 %s36, %s37
      %s238 = sadd.s32 %s55, %s51
      %s239 = ssub.s32 %s237, %s238
      %p240 = scmp.eq.s32.totalorder %s239, 0
      %s242 = sadd.s32 %s241, 1
      %s243 = scalar_select %p240, %s241, %s242
      %p246 = pneg %p240
      %p247 = scmp.eq.s32.totalorder %s29, 1
      %p248 = por %p246, %p247
      %p249 = scmp.ne.s32.totalorder %s241, %s244
      %p250 = scmp.eq.s32.totalorder %s29, 0
      %p251 = por %p249, %p250
      %p252 = scmp.ne.s32.totalorder %s241, %s244
      %p253 = scmp.eq.s32.totalorder %s34, 1
      %p254 = por %p252, %p253
      %p255 = scmp.ne.s32.totalorder %s244, %s245
      %p256 = scmp.eq.s32.totalorder %s34, 0
      %p257 = por %p255, %p256
      %p258 = scmp.ne.s32.totalorder %s244, %s245
      %p259 = scmp.eq.s32.totalorder %s35, 1
      %p260 = por %p258, %p259
      %p262 = scmp.ne.s32.totalorder %s245, %s261
      %p263 = scmp.eq.s32.totalorder %s35, 0
      %p264 = por %p262, %p263
      %p265 = scmp.le.s32.totalorder 1, %s29
      %p266 = scmp.lt.s32.totalorder %s29, 3
      %p267 = pnand %p265, %p266
      %p268 = pneg %p267
      // Predicated region
      $region9: #{tpu_custom_call.1} parent=5 // pred_check
        _
      $region10: #{tpu_custom_call.1} parent=5 // pred_check_branch
        %270 = sbr.rel (%p267) target = $region12
      $region11: #{tpu_custom_call.1} parent=5 // pred_region
        %s271 = ssub.s32 %s29, 1
        // Predicated region
        $region13: #{tpu_custom_call.1} parent=11 // pred_check
          %p272 = pneg %p159
        $region14: #{tpu_custom_call.1} parent=11 // pred_check_branch
          %274 = sbr.rel (%p272) target = $region16
        $region15: #{tpu_custom_call.1} parent=11 // pred_region
          %276 = vsyncadd [#allocation5], 0
          %s278 = sshll.u32 %s3, 4
          %s279 = int_to_ptr.hbm [resolvable:$true] %s278
          %281 = dma.hbm_to_smem %s279, 64, [#allocation10], [#allocation5]
        $region16: #{tpu_custom_call.1} parent=11 // pred_fallthru
          _
        // Predicated region
        $region17: #{tpu_custom_call.1} parent=11 // pred_check
          %p282 = pneg %p180
        $region18: #{tpu_custom_call.1} parent=11 // pred_check_branch
          %284 = sbr.rel (%p282) target = $region20
        $region19: #{tpu_custom_call.1} parent=11 // pred_region
          %286 = vsyncadd [#allocation12], 0
          %s288 = sshll.u32 %s4, 4
          %s289 = int_to_ptr.hbm [resolvable:$true] %s288
          %291 = dma.hbm_to_smem %s289, 64, [#allocation11], [#allocation12]
        $region20: #{tpu_custom_call.1} parent=11 // pred_fallthru
          _
        // Predicated region
        $region21: #{tpu_custom_call.1} parent=11 // pred_check
          %p292 = pneg %p201
        $region22: #{tpu_custom_call.1} parent=11 // pred_check_branch
          %294 = sbr.rel (%p292) target = $region24
        $region23: #{tpu_custom_call.1} parent=11 // pred_region
          %296 = vsyncadd [#allocation6], 0
          %s298 = sshll.u32 %s5, 4
          %s299 = int_to_ptr.vmem [resolvable:$true] %s298
          %301 = dma.vmem_to_smem %s299, 64, [#allocation13], [#allocation6]
        $region24: #{tpu_custom_call.1} parent=11 // pred_fallthru
          _
      $region12: #{tpu_custom_call.1} parent=5 // pred_fallthru
        _
      %p302 = scmp.lt.s32.totalorder %s29, 2
      // Predicated region
      $region25: #{tpu_custom_call.1} parent=5 // pred_check
        %p303 = pneg %p302
      $region26: #{tpu_custom_call.1} parent=5 // pred_check_branch
        %305 = sbr.rel (%p303) target = $region28
      $region27: #{tpu_custom_call.1} parent=5 // pred_region
        // Predicated region
        $region29: #{tpu_custom_call.1} parent=27 // pred_check
          %p306 = pneg %p72
        $region30: #{tpu_custom_call.1} parent=27 // pred_check_branch
          %308 = sbr.rel (%p306) target = $region32
        $region31: #{tpu_custom_call.1} parent=27 // pred_region
          %s309 = sand.u32 %s62, 1
          %s310 = scalar_lea.sflag [#allocation3], %s309
          %s311 = sand.u32 %s62, 1
          %s312 = smul.addr %s311, 32
          %s313 = scalar_lea.vmem [#allocation2], %s312
          %s314 = sadd.s32 %s37, %s38
          %316 = vsyncadd %s310, 0
          %s317 = smul.addr %s36, 4
          %s318 = sadd.s32 %s314, %s317
          %s319 = smul.addr %s318, 8
          %s320 = scalar_lea.hbm %s0, %s319
          %s321 = sshll.u32 %s320, 4
          %s322 = int_to_ptr.hbm [resolvable:$true] %s321
          %s323 = sshll.u32 %s313, 4
          %s324 = int_to_ptr.vmem [resolvable:$true] %s323
          %329 = dma.hbm_to_vmem [thread:$0]  %s322, 512, %s324, %s310, 128, 128, 8
        $region32: #{tpu_custom_call.1} parent=27 // pred_fallthru
          _
        // Predicated region
        $region33: #{tpu_custom_call.1} parent=27 // pred_check
          %p330 = pneg %p102
        $region34: #{tpu_custom_call.1} parent=27 // pred_check_branch
          %332 = sbr.rel (%p330) target = $region36
        $region35: #{tpu_custom_call.1} parent=27 // pred_region
          %s333 = sand.u32 %s29, 1
          %s334 = scalar_lea.sflag [#allocation8], %s333
          %s335 = sand.u32 %s92, 1
          %s336 = smul.addr %s335, 32
          %s337 = scalar_lea.vmem [#allocation7], %s336
          %s338 = sadd.s32 %s37, %s38
          %340 = vsyncadd %s334, 0
          %s341 = smul.addr %s36, 4
          %s342 = sadd.s32 %s338, %s341
          %s343 = smul.addr %s342, 8
          %s344 = scalar_lea.hbm %s1, %s343
          %s345 = sshll.u32 %s344, 4
          %s346 = int_to_ptr.hbm [resolvable:$true] %s345
          %s347 = sshll.u32 %s337, 4
          %s348 = int_to_ptr.vmem [resolvable:$true] %s347
          %353 = dma.hbm_to_vmem [thread:$0]  %s346, 512, %s348, %s334, 128, 128, 8
        $region36: #{tpu_custom_call.1} parent=27 // pred_fallthru
          _
        // Predicated region
        $region37: #{tpu_custom_call.1} parent=27 // pred_check
          %p354 = pneg %p132
        $region38: #{tpu_custom_call.1} parent=27 // pred_check_branch
          %356 = sbr.rel (%p354) target = $region40
        $region39: #{tpu_custom_call.1} parent=27 // pred_region
          %s357 = sand.u32 %s29, 1
          %s358 = scalar_lea.sflag [#allocation8], %s357
          %s359 = sand.u32 %s122, 1
          %s360 = smul.addr %s359, 32
          %s361 = scalar_lea.vmem [#allocation9], %s360
          %s362 = sadd.s32 %s37, %s38
          %364 = vsyncadd %s358, 0
          %s365 = smul.addr %s36, 4
          %s366 = sadd.s32 %s362, %s365
          %s367 = smul.addr %s366, 8
          %s368 = scalar_lea.hbm %s2, %s367
          %s369 = sshll.u32 %s368, 4
          %s370 = int_to_ptr.hbm [resolvable:$true] %s369
          %s371 = sshll.u32 %s361, 4
          %s372 = int_to_ptr.vmem [resolvable:$true] %s371
          %377 = dma.hbm_to_vmem [thread:$0]  %s370, 512, %s372, %s358, 128, 128, 8
        $region40: #{tpu_custom_call.1} parent=27 // pred_fallthru
          _
      $region28: #{tpu_custom_call.1} parent=5 // pred_fallthru
        _
      %p378 = scmp.le.s32.totalorder 1, %s29
      %p379 = scmp.lt.s32.totalorder %s29, 3
      %p380 = pnand %p378, %p379
      %p381 = pneg %p380
      // Predicated region
      $region41: #{tpu_custom_call.1} parent=5 // pred_check
        _
      $region42: #{tpu_custom_call.1} parent=5 // pred_check_branch
        %383 = sbr.rel (%p380) target = $region44
      $region43: #{tpu_custom_call.1} parent=5 // pred_region
        %s384 = ssub.s32 %s29, 1
        %s385 = sand.u32 %s65, 1
        %s386 = scalar_lea.sflag [#allocation3], %s385
        %s387 = sand.u32 %s65, 1
        %s388 = smul.addr %s387, 32
        %s389 = scalar_lea.vmem [#allocation2], %s388
        // Predicated region
        $region45: #{tpu_custom_call.1} parent=43 // pred_check
          %p390 = pneg %p78
        $region46: #{tpu_custom_call.1} parent=43 // pred_check_branch
          %392 = sbr.rel (%p390) target = $region48
        $region47: #{tpu_custom_call.1} parent=43 // pred_region
          %394 = dma.done %s386, 512
        $region48: #{tpu_custom_call.1} parent=43 // pred_fallthru
          _
        %s395 = sand.u32 %s34, 1
        %s396 = scalar_lea.sflag [#allocation8], %s395
        %s397 = sand.u32 %s95, 1
        %s398 = smul.addr %s397, 32
        %s399 = scalar_lea.vmem [#allocation7], %s398
        // Predicated region
        $region49: #{tpu_custom_call.1} parent=43 // pred_check
          %p400 = pneg %p108
        $region50: #{tpu_custom_call.1} parent=43 // pred_check_branch
          %402 = sbr.rel (%p400) target = $region52
        $region51: #{tpu_custom_call.1} parent=43 // pred_region
          %404 = dma.done %s396, 512
        $region52: #{tpu_custom_call.1} parent=43 // pred_fallthru
          _
        %s405 = sand.u32 %s34, 1
        %s406 = scalar_lea.sflag [#allocation8], %s405
        %s407 = sand.u32 %s125, 1
        %s408 = smul.addr %s407, 32
        %s409 = scalar_lea.vmem [#allocation9], %s408
        // Predicated region
        $region53: #{tpu_custom_call.1} parent=43 // pred_check
          %p410 = pneg %p138
        $region54: #{tpu_custom_call.1} parent=43 // pred_check_branch
          %412 = sbr.rel (%p410) target = $region56
        $region55: #{tpu_custom_call.1} parent=43 // pred_region
          %414 = dma.done %s406, 512
        $region56: #{tpu_custom_call.1} parent=43 // pred_fallthru
          _
        // Predicated region
        $region57: #{tpu_custom_call.1} parent=43 // pred_check
          %p415 = pneg %p159
        $region58: #{tpu_custom_call.1} parent=43 // pred_check_branch
          %417 = sbr.rel (%p415) target = $region60
        $region59: #{tpu_custom_call.1} parent=43 // pred_region
          %419 = dma.done [#allocation5], 64
        $region60: #{tpu_custom_call.1} parent=43 // pred_fallthru
          _
        // Predicated region
        $region61: #{tpu_custom_call.1} parent=43 // pred_check
          %p420 = pneg %p180
        $region62: #{tpu_custom_call.1} parent=43 // pred_check_branch
          %422 = sbr.rel (%p420) target = $region64
        $region63: #{tpu_custom_call.1} parent=43 // pred_region
          %424 = dma.done [#allocation12], 64
        $region64: #{tpu_custom_call.1} parent=43 // pred_fallthru
          _
        // Predicated region
        $region65: #{tpu_custom_call.1} parent=43 // pred_check
          %p425 = pneg %p201
        $region66: #{tpu_custom_call.1} parent=43 // pred_check_branch
          %427 = sbr.rel (%p425) target = $region68
        $region67: #{tpu_custom_call.1} parent=43 // pred_region
          %429 = dma.done [#allocation6], 64
        $region68: #{tpu_custom_call.1} parent=43 // pred_fallthru
          _
        %430 = sfence
        %s431 = sand.u32 %s65, 1
        %s432 = scalar_lea.sflag [#allocation3], %s431
        %s433 = sand.u32 %s65, 1
        %s434 = smul.addr %s433, 32
        %s435 = scalar_lea.vmem [#allocation2], %s434
        %p436 = pneg %p78
        %p437 = pneg %p75
        %s438 = sand.u32 %s34, 1
        %s439 = scalar_lea.sflag [#allocation8], %s438
        %s440 = sand.u32 %s95, 1
        %s441 = smul.addr %s440, 32
        %s442 = scalar_lea.vmem [#allocation7], %s441
        %p443 = pneg %p108
        %p444 = pneg %p105
        %s445 = sand.u32 %s34, 1
        %s446 = scalar_lea.sflag [#allocation8], %s445
        %s447 = sand.u32 %s125, 1
        %s448 = smul.addr %s447, 32
        %s449 = scalar_lea.vmem [#allocation9], %s448
        %p450 = pneg %p138
        %p451 = pneg %p135
        %p452 = pneg %p159
        %p453 = pneg %p156
        %p454 = pneg %p180
        %p455 = pneg %p177
        %p456 = pneg %p201
        %p457 = pneg %p198
        %p458 = pneg %p229
        %p459 = pneg %p226
        %s460 = sand.u32 %s216, 1
        %s461 = scalar_lea.sflag [#allocation4], %s460
        %s462 = sand.u32 %s216, 1
        %s463 = smul.addr %s462, 8
        %s464 = scalar_lea.vmem [#allocation14], %s463
        %p465 = pneg %p257
        %p466 = pneg %p254
        %s467 = sand.u32 %s244, 1
        %s468 = scalar_lea.sflag [#allocation16], %s467
        %s469 = sand.u32 %s244, 1
        %s470 = smul.addr %s469, 8
        %s471 = scalar_lea.vmem [#allocation15], %s470
        %s472 = sadd.s32 %s40, %s41
        %s473 = sadd.s32 %s40, %s41
        %s474 = sadd.s32 %s40, %s41
        %s475 = sadd.s32 %s39, %s40
        %s476 = sadd.s32 %s39, %s40
        %p477 = scmp.eq.s32.totalorder %s41, 0
        // Predicated region
        $region69: #{tpu_custom_call.1} parent=43 // pred_check
          %p478 = pneg %p477
        $region70: #{tpu_custom_call.1} parent=43 // pred_check_branch
          %480 = sbr.rel (%p478) target = $region72
        $region71: #{tpu_custom_call.1} parent=43 // pred_region
          %481 = vst [vmem:[%s464] sm:$0xff] 0.0
          %482 = vst [vmem:[%s471] sm:$0xff] 0.0
        $region72: #{tpu_custom_call.1} parent=43 // pred_fallthru
          _
        %v483 = vld [vmem:[%s389] sm:$0xff]
        %v484 = vld [vmem:[%s409] sm:$0xff]
        %v485 = vmul.f32 %v484, 0.01
        %v486 = vadd.f32 %v483, %v485
        %s487 = sadd.s32 0, 8
        %s488 = scalar_lea.vmem %s389, %s487 [#allocation2]
        %v489 = vld [vmem:[%s488] sm:$0xff]
        %s490 = scalar_lea.vmem %s409, %s487 [#allocation9]
        %v491 = vld [vmem:[%s490] sm:$0xff]
        %v492 = vmul.f32 %v491, 0.01
        %v493 = vadd.f32 %v489, %v492
        %s494 = sadd.s32 0, 16
        %s495 = scalar_lea.vmem %s389, %s494 [#allocation2]
        %v496 = vld [vmem:[%s495] sm:$0xff]
        %s497 = scalar_lea.vmem %s409, %s494 [#allocation9]
        %v498 = vld [vmem:[%s497] sm:$0xff]
        %v499 = vmul.f32 %v498, 0.01
        %v500 = vadd.f32 %v496, %v499
        %s501 = sadd.s32 0, 24
        %s502 = scalar_lea.vmem %s389, %s501 [#allocation2]
        %v503 = vld [vmem:[%s502] sm:$0xff]
        %s504 = scalar_lea.vmem %s409, %s501 [#allocation9]
        %v505 = vld [vmem:[%s504] sm:$0xff]
        %v506 = vmul.f32 %v505, 0.01
        %v507 = vadd.f32 %v503, %v506
        %s508 = sld [smem:[#allocation11]]
        %v509 = vstv %s508
        %v510 = vmul.f32 %v509, %v486
        %s511 = sld [smem:[#allocation11 + $0x80]]
        %v512 = vstv %s511
        %v513 = vmul.f32 %v512, %v493
        %v514 = vadd.f32 %v510, %v513
        %s515 = sld [smem:[#allocation11 + $0x100]]
        %v516 = vstv %s515
        %v517 = vmul.f32 %v516, %v500
        %v518 = vadd.f32 %v514, %v517
        %s519 = sld [smem:[#allocation11 + $0x180]]
        %v520 = vstv %s519
        %v521 = vmul.f32 %v520, %v507
        %v522 = vadd.f32 %v518, %v521
        %v523 = vmax.f32 %v522, 0.0
        %s524 = sld [smem:[#allocation13]]
        %v525 = vstv %s524
        %v526 = vmul.f32 %v525, %v523
        %v527 = vadd.f32 %v526, 0.0
        %s528 = sld [smem:[#allocation13 + $0x80]]
        %v529 = vstv %s528
        %v530 = vmul.f32 %v529, %v523
        %v531 = vadd.f32 %v530, 0.0
        %s532 = sld [smem:[#allocation13 + $0x100]]
        %v533 = vstv %s532
        %v534 = vmul.f32 %v533, %v523
        %v535 = vadd.f32 %v534, 0.0
        %s536 = sld [smem:[#allocation13 + $0x180]]
        %v537 = vstv %s536
        %v538 = vmul.f32 %v537, %v523
        %v539 = vadd.f32 %v538, 0.0
        %s540 = sld [smem:[#allocation11 + $0x1]]
        %v541 = vstv %s540
        %v542 = vmul.f32 %v541, %v486
        %s543 = sld [smem:[#allocation11 + $0x81]]
        %v544 = vstv %s543
        %v545 = vmul.f32 %v544, %v493
        %v546 = vadd.f32 %v542, %v545
        %s547 = sld [smem:[#allocation11 + $0x101]]
        %v548 = vstv %s547
        %v549 = vmul.f32 %v548, %v500
        %v550 = vadd.f32 %v546, %v549
        %s551 = sld [smem:[#allocation11 + $0x181]]
        %v552 = vstv %s551
        %v553 = vmul.f32 %v552, %v507
        %v554 = vadd.f32 %v550, %v553
        %v555 = vmax.f32 %v554, 0.0
        %s556 = sld [smem:[#allocation13 + $0x1]]
        %v557 = vstv %s556
        %v558 = vmul.f32 %v557, %v555
        %v559 = vadd.f32 %v527, %v558
        %s560 = sld [smem:[#allocation13 + $0x81]]
        %v561 = vstv %s560
        %v562 = vmul.f32 %v561, %v555
        %v563 = vadd.f32 %v531, %v562
        %s564 = sld [smem:[#allocation13 + $0x101]]
        %v565 = vstv %s564
        %v566 = vmul.f32 %v565, %v555
        %v567 = vadd.f32 %v535, %v566
        %s568 = sld [smem:[#allocation13 + $0x181]]
        %v569 = vstv %s568
        %v570 = vmul.f32 %v569, %v555
        %v571 = vadd.f32 %v539, %v570
        %s572 = sld [smem:[#allocation11 + $0x2]]
        %v573 = vstv %s572
        %v574 = vmul.f32 %v573, %v486
        %s575 = sld [smem:[#allocation11 + $0x82]]
        %v576 = vstv %s575
        %v577 = vmul.f32 %v576, %v493
        %v578 = vadd.f32 %v574, %v577
        %s579 = sld [smem:[#allocation11 + $0x102]]
        %v580 = vstv %s579
        %v581 = vmul.f32 %v580, %v500
        %v582 = vadd.f32 %v578, %v581
        %s583 = sld [smem:[#allocation11 + $0x182]]
        %v584 = vstv %s583
        %v585 = vmul.f32 %v584, %v507
        %v586 = vadd.f32 %v582, %v585
        %v587 = vmax.f32 %v586, 0.0
        %s588 = sld [smem:[#allocation13 + $0x2]]
        %v589 = vstv %s588
        %v590 = vmul.f32 %v589, %v587
        %v591 = vadd.f32 %v559, %v590
        %s592 = sld [smem:[#allocation13 + $0x82]]
        %v593 = vstv %s592
        %v594 = vmul.f32 %v593, %v587
        %v595 = vadd.f32 %v563, %v594
        %s596 = sld [smem:[#allocation13 + $0x102]]
        %v597 = vstv %s596
        %v598 = vmul.f32 %v597, %v587
        %v599 = vadd.f32 %v567, %v598
        %s600 = sld [smem:[#allocation13 + $0x182]]
        %v601 = vstv %s600
        %v602 = vmul.f32 %v601, %v587
        %v603 = vadd.f32 %v571, %v602
        %s604 = sld [smem:[#allocation11 + $0x3]]
        %v605 = vstv %s604
        %v606 = vmul.f32 %v605, %v486
        %s607 = sld [smem:[#allocation11 + $0x83]]
        %v608 = vstv %s607
        %v609 = vmul.f32 %v608, %v493
        %v610 = vadd.f32 %v606, %v609
        %s611 = sld [smem:[#allocation11 + $0x103]]
        %v612 = vstv %s611
        %v613 = vmul.f32 %v612, %v500
        %v614 = vadd.f32 %v610, %v613
        %s615 = sld [smem:[#allocation11 + $0x183]]
        %v616 = vstv %s615
        %v617 = vmul.f32 %v616, %v507
        %v618 = vadd.f32 %v614, %v617
        %v619 = vmax.f32 %v618, 0.0
        %s620 = sld [smem:[#allocation13 + $0x3]]
        %v621 = vstv %s620
        %v622 = vmul.f32 %v621, %v619
        %v623 = vadd.f32 %v591, %v622
        %s624 = sld [smem:[#allocation13 + $0x83]]
        %v625 = vstv %s624
        %v626 = vmul.f32 %v625, %v619
        %v627 = vadd.f32 %v595, %v626
        %s628 = sld [smem:[#allocation13 + $0x103]]
        %v629 = vstv %s628
        %v630 = vmul.f32 %v629, %v619
        %v631 = vadd.f32 %v599, %v630
        %s632 = sld [smem:[#allocation13 + $0x183]]
        %v633 = vstv %s632
        %v634 = vmul.f32 %v633, %v619
        %v635 = vadd.f32 %v603, %v634
        %s636 = sld [smem:[#allocation11 + $0x4]]
        %v637 = vstv %s636
        %v638 = vmul.f32 %v637, %v486
        %s639 = sld [smem:[#allocation11 + $0x84]]
        %v640 = vstv %s639
        %v641 = vmul.f32 %v640, %v493
        %v642 = vadd.f32 %v638, %v641
        %s643 = sld [smem:[#allocation11 + $0x104]]
        %v644 = vstv %s643
        %v645 = vmul.f32 %v644, %v500
        %v646 = vadd.f32 %v642, %v645
        %s647 = sld [smem:[#allocation11 + $0x184]]
        %v648 = vstv %s647
        %v649 = vmul.f32 %v648, %v507
        %v650 = vadd.f32 %v646, %v649
        %v651 = vmax.f32 %v650, 0.0
        %s652 = sld [smem:[#allocation13 + $0x4]]
        %v653 = vstv %s652
        %v654 = vmul.f32 %v653, %v651
        %v655 = vadd.f32 %v623, %v654
        %s656 = sld [smem:[#allocation13 + $0x84]]
        %v657 = vstv %s656
        %v658 = vmul.f32 %v657, %v651
        %v659 = vadd.f32 %v627, %v658
        %s660 = sld [smem:[#allocation13 + $0x104]]
        %v661 = vstv %s660
        %v662 = vmul.f32 %v661, %v651
        %v663 = vadd.f32 %v631, %v662
        %s664 = sld [smem:[#allocation13 + $0x184]]
        %v665 = vstv %s664
        %v666 = vmul.f32 %v665, %v651
        %v667 = vadd.f32 %v635, %v666
        %s668 = sld [smem:[#allocation11 + $0x5]]
        %v669 = vstv %s668
        %v670 = vmul.f32 %v669, %v486
        %s671 = sld [smem:[#allocation11 + $0x85]]
        %v672 = vstv %s671
        %v673 = vmul.f32 %v672, %v493
        %v674 = vadd.f32 %v670, %v673
        %s675 = sld [smem:[#allocation11 + $0x105]]
        %v676 = vstv %s675
        %v677 = vmul.f32 %v676, %v500
        %v678 = vadd.f32 %v674, %v677
        %s679 = sld [smem:[#allocation11 + $0x185]]
        %v680 = vstv %s679
        %v681 = vmul.f32 %v680, %v507
        %v682 = vadd.f32 %v678, %v681
        %v683 = vmax.f32 %v682, 0.0
        %s684 = sld [smem:[#allocation13 + $0x5]]
        %v685 = vstv %s684
        %v686 = vmul.f32 %v685, %v683
        %v687 = vadd.f32 %v655, %v686
        %s688 = sld [smem:[#allocation13 + $0x85]]
        %v689 = vstv %s688
        %v690 = vmul.f32 %v689, %v683
        %v691 = vadd.f32 %v659, %v690
        %s692 = sld [smem:[#allocation13 + $0x105]]
        %v693 = vstv %s692
        %v694 = vmul.f32 %v693, %v683
        %v695 = vadd.f32 %v663, %v694
        %s696 = sld [smem:[#allocation13 + $0x185]]
        %v697 = vstv %s696
        %v698 = vmul.f32 %v697, %v683
        %v699 = vadd.f32 %v667, %v698
        %s700 = sld [smem:[#allocation11 + $0x6]]
        %v701 = vstv %s700
        %v702 = vmul.f32 %v701, %v486
        %s703 = sld [smem:[#allocation11 + $0x86]]
        %v704 = vstv %s703
        %v705 = vmul.f32 %v704, %v493
        %v706 = vadd.f32 %v702, %v705
        %s707 = sld [smem:[#allocation11 + $0x106]]
        %v708 = vstv %s707
        %v709 = vmul.f32 %v708, %v500
        %v710 = vadd.f32 %v706, %v709
        %s711 = sld [smem:[#allocation11 + $0x186]]
        %v712 = vstv %s711
        %v713 = vmul.f32 %v712, %v507
        %v714 = vadd.f32 %v710, %v713
        %v715 = vmax.f32 %v714, 0.0
        %s716 = sld [smem:[#allocation13 + $0x6]]
        %v717 = vstv %s716
        %v718 = vmul.f32 %v717, %v715
        %v719 = vadd.f32 %v687, %v718
        %s720 = sld [smem:[#allocation13 + $0x86]]
        %v721 = vstv %s720
        %v722 = vmul.f32 %v721, %v715
        %v723 = vadd.f32 %v691, %v722
        %s724 = sld [smem:[#allocation13 + $0x106]]
        %v725 = vstv %s724
        %v726 = vmul.f32 %v725, %v715
        %v727 = vadd.f32 %v695, %v726
        %s728 = sld [smem:[#allocation13 + $0x186]]
        %v729 = vstv %s728
        %v730 = vmul.f32 %v729, %v715
        %v731 = vadd.f32 %v699, %v730
        %s732 = sld [smem:[#allocation11 + $0x7]]
        %v733 = vstv %s732
        %v734 = vmul.f32 %v733, %v486
        %s735 = sld [smem:[#allocation11 + $0x87]]
        %v736 = vstv %s735
        %v737 = vmul.f32 %v736, %v493
        %v738 = vadd.f32 %v734, %v737
        %s739 = sld [smem:[#allocation11 + $0x107]]
        %v740 = vstv %s739
        %v741 = vmul.f32 %v740, %v500
        %v742 = vadd.f32 %v738, %v741
        %s743 = sld [smem:[#allocation11 + $0x187]]
        %v744 = vstv %s743
        %v745 = vmul.f32 %v744, %v507
        %v746 = vadd.f32 %v742, %v745
        %v747 = vmax.f32 %v746, 0.0
        %s748 = sld [smem:[#allocation13 + $0x7]]
        %v749 = vstv %s748
        %v750 = vmul.f32 %v749, %v747
        %v751 = vadd.f32 %v719, %v750
        %s752 = sld [smem:[#allocation13 + $0x87]]
        %v753 = vstv %s752
        %v754 = vmul.f32 %v753, %v747
        %v755 = vadd.f32 %v723, %v754
        %s756 = sld [smem:[#allocation13 + $0x107]]
        %v757 = vstv %s756
        %v758 = vmul.f32 %v757, %v747
        %v759 = vadd.f32 %v727, %v758
        %s760 = sld [smem:[#allocation13 + $0x187]]
        %v761 = vstv %s760
        %v762 = vmul.f32 %v761, %v747
        %v763 = vadd.f32 %v731, %v762
        %s764 = sld [smem:[#allocation11 + $0x8]]
        %v765 = vstv %s764
        %v766 = vmul.f32 %v765, %v486
        %s767 = sld [smem:[#allocation11 + $0x88]]
        %v768 = vstv %s767
        %v769 = vmul.f32 %v768, %v493
        %v770 = vadd.f32 %v766, %v769
        %s771 = sld [smem:[#allocation11 + $0x108]]
        %v772 = vstv %s771
        %v773 = vmul.f32 %v772, %v500
        %v774 = vadd.f32 %v770, %v773
        %s775 = sld [smem:[#allocation11 + $0x188]]
        %v776 = vstv %s775
        %v777 = vmul.f32 %v776, %v507
        %v778 = vadd.f32 %v774, %v777
        %v779 = vmax.f32 %v778, 0.0
        %s780 = sld [smem:[#allocation13 + $0x8]]
        %v781 = vstv %s780
        %v782 = vmul.f32 %v781, %v779
        %v783 = vadd.f32 %v751, %v782
        %s784 = sld [smem:[#allocation13 + $0x88]]
        %v785 = vstv %s784
        %v786 = vmul.f32 %v785, %v779
        %v787 = vadd.f32 %v755, %v786
        %s788 = sld [smem:[#allocation13 + $0x108]]
        %v789 = vstv %s788
        %v790 = vmul.f32 %v789, %v779
        %v791 = vadd.f32 %v759, %v790
        %s792 = sld [smem:[#allocation13 + $0x188]]
        %v793 = vstv %s792
        %v794 = vmul.f32 %v793, %v779
        %v795 = vadd.f32 %v763, %v794
        %s796 = sld [smem:[#allocation11 + $0x9]]
        %v797 = vstv %s796
        %v798 = vmul.f32 %v797, %v486
        %s799 = sld [smem:[#allocation11 + $0x89]]
        %v800 = vstv %s799
        %v801 = vmul.f32 %v800, %v493
        %v802 = vadd.f32 %v798, %v801
        %s803 = sld [smem:[#allocation11 + $0x109]]
        %v804 = vstv %s803
        %v805 = vmul.f32 %v804, %v500
        %v806 = vadd.f32 %v802, %v805
        %s807 = sld [smem:[#allocation11 + $0x189]]
        %v808 = vstv %s807
        %v809 = vmul.f32 %v808, %v507
        %v810 = vadd.f32 %v806, %v809
        %v811 = vmax.f32 %v810, 0.0
        %s812 = sld [smem:[#allocation13 + $0x9]]
        %v813 = vstv %s812
        %v814 = vmul.f32 %v813, %v811
        %v815 = vadd.f32 %v783, %v814
        %s816 = sld [smem:[#allocation13 + $0x89]]
        %v817 = vstv %s816
        %v818 = vmul.f32 %v817, %v811
        %v819 = vadd.f32 %v787, %v818
        %s820 = sld [smem:[#allocation13 + $0x109]]
        %v821 = vstv %s820
        %v822 = vmul.f32 %v821, %v811
        %v823 = vadd.f32 %v791, %v822
        %s824 = sld [smem:[#allocation13 + $0x189]]
        %v825 = vstv %s824
        %v826 = vmul.f32 %v825, %v811
        %v827 = vadd.f32 %v795, %v826
        %s828 = sld [smem:[#allocation11 + $0xa]]
        %v829 = vstv %s828
        %v830 = vmul.f32 %v829, %v486
        %s831 = sld [smem:[#allocation11 + $0x8a]]
        %v832 = vstv %s831
        %v833 = vmul.f32 %v832, %v493
        %v834 = vadd.f32 %v830, %v833
        %s835 = sld [smem:[#allocation11 + $0x10a]]
        %v836 = vstv %s835
        %v837 = vmul.f32 %v836, %v500
        %v838 = vadd.f32 %v834, %v837
        %s839 = sld [smem:[#allocation11 + $0x18a]]
        %v840 = vstv %s839
        %v841 = vmul.f32 %v840, %v507
        %v842 = vadd.f32 %v838, %v841
        %v843 = vmax.f32 %v842, 0.0
        %s844 = sld [smem:[#allocation13 + $0xa]]
        %v845 = vstv %s844
        %v846 = vmul.f32 %v845, %v843
        %v847 = vadd.f32 %v815, %v846
        %s848 = sld [smem:[#allocation13 + $0x8a]]
        %v849 = vstv %s848
        %v850 = vmul.f32 %v849, %v843
        %v851 = vadd.f32 %v819, %v850
        %s852 = sld [smem:[#allocation13 + $0x10a]]
        %v853 = vstv %s852
        %v854 = vmul.f32 %v853, %v843
        %v855 = vadd.f32 %v823, %v854
        %s856 = sld [smem:[#allocation13 + $0x18a]]
        %v857 = vstv %s856
        %v858 = vmul.f32 %v857, %v843
        %v859 = vadd.f32 %v827, %v858
        %s860 = sld [smem:[#allocation11 + $0xb]]
        %v861 = vstv %s860
        %v862 = vmul.f32 %v861, %v486
        %s863 = sld [smem:[#allocation11 + $0x8b]]
        %v864 = vstv %s863
        %v865 = vmul.f32 %v864, %v493
        %v866 = vadd.f32 %v862, %v865
        %s867 = sld [smem:[#allocation11 + $0x10b]]
        %v868 = vstv %s867
        %v869 = vmul.f32 %v868, %v500
        %v870 = vadd.f32 %v866, %v869
        %s871 = sld [smem:[#allocation11 + $0x18b]]
        %v872 = vstv %s871
        %v873 = vmul.f32 %v872, %v507
        %v874 = vadd.f32 %v870, %v873
        %v875 = vmax.f32 %v874, 0.0
        %s876 = sld [smem:[#allocation13 + $0xb]]
        %v877 = vstv %s876
        %v878 = vmul.f32 %v877, %v875
        %v879 = vadd.f32 %v847, %v878
        %s880 = sld [smem:[#allocation13 + $0x8b]]
        %v881 = vstv %s880
        %v882 = vmul.f32 %v881, %v875
        %v883 = vadd.f32 %v851, %v882
        %s884 = sld [smem:[#allocation13 + $0x10b]]
        %v885 = vstv %s884
        %v886 = vmul.f32 %v885, %v875
        %v887 = vadd.f32 %v855, %v886
        %s888 = sld [smem:[#allocation13 + $0x18b]]
        %v889 = vstv %s888
        %v890 = vmul.f32 %v889, %v875
        %v891 = vadd.f32 %v859, %v890
        %s892 = sld [smem:[#allocation11 + $0xc]]
        %v893 = vstv %s892
        %v894 = vmul.f32 %v893, %v486
        %s895 = sld [smem:[#allocation11 + $0x8c]]
        %v896 = vstv %s895
        %v897 = vmul.f32 %v896, %v493
        %v898 = vadd.f32 %v894, %v897
        %s899 = sld [smem:[#allocation11 + $0x10c]]
        %v900 = vstv %s899
        %v901 = vmul.f32 %v900, %v500
        %v902 = vadd.f32 %v898, %v901
        %s903 = sld [smem:[#allocation11 + $0x18c]]
        %v904 = vstv %s903
        %v905 = vmul.f32 %v904, %v507
        %v906 = vadd.f32 %v902, %v905
        %v907 = vmax.f32 %v906, 0.0
        %s908 = sld [smem:[#allocation13 + $0xc]]
        %v909 = vstv %s908
        %v910 = vmul.f32 %v909, %v907
        %v911 = vadd.f32 %v879, %v910
        %s912 = sld [smem:[#allocation13 + $0x8c]]
        %v913 = vstv %s912
        %v914 = vmul.f32 %v913, %v907
        %v915 = vadd.f32 %v883, %v914
        %s916 = sld [smem:[#allocation13 + $0x10c]]
        %v917 = vstv %s916
        %v918 = vmul.f32 %v917, %v907
        %v919 = vadd.f32 %v887, %v918
        %s920 = sld [smem:[#allocation13 + $0x18c]]
        %v921 = vstv %s920
        %v922 = vmul.f32 %v921, %v907
        %v923 = vadd.f32 %v891, %v922
        %s924 = sld [smem:[#allocation11 + $0xd]]
        %v925 = vstv %s924
        %v926 = vmul.f32 %v925, %v486
        %s927 = sld [smem:[#allocation11 + $0x8d]]
        %v928 = vstv %s927
        %v929 = vmul.f32 %v928, %v493
        %v930 = vadd.f32 %v926, %v929
        %s931 = sld [smem:[#allocation11 + $0x10d]]
        %v932 = vstv %s931
        %v933 = vmul.f32 %v932, %v500
        %v934 = vadd.f32 %v930, %v933
        %s935 = sld [smem:[#allocation11 + $0x18d]]
        %v936 = vstv %s935
        %v937 = vmul.f32 %v936, %v507
        %v938 = vadd.f32 %v934, %v937
        %v939 = vmax.f32 %v938, 0.0
        %s940 = sld [smem:[#allocation13 + $0xd]]
        %v941 = vstv %s940
        %v942 = vmul.f32 %v941, %v939
        %v943 = vadd.f32 %v911, %v942
        %s944 = sld [smem:[#allocation13 + $0x8d]]
        %v945 = vstv %s944
        %v946 = vmul.f32 %v945, %v939
        %v947 = vadd.f32 %v915, %v946
        %s948 = sld [smem:[#allocation13 + $0x10d]]
        %v949 = vstv %s948
        %v950 = vmul.f32 %v949, %v939
        %v951 = vadd.f32 %v919, %v950
        %s952 = sld [smem:[#allocation13 + $0x18d]]
        %v953 = vstv %s952
        %v954 = vmul.f32 %v953, %v939
        %v955 = vadd.f32 %v923, %v954
        %s956 = sld [smem:[#allocation11 + $0xe]]
        %v957 = vstv %s956
        %v958 = vmul.f32 %v957, %v486
        %s959 = sld [smem:[#allocation11 + $0x8e]]
        %v960 = vstv %s959
        %v961 = vmul.f32 %v960, %v493
        %v962 = vadd.f32 %v958, %v961
        %s963 = sld [smem:[#allocation11 + $0x10e]]
        %v964 = vstv %s963
        %v965 = vmul.f32 %v964, %v500
        %v966 = vadd.f32 %v962, %v965
        %s967 = sld [smem:[#allocation11 + $0x18e]]
        %v968 = vstv %s967
        %v969 = vmul.f32 %v968, %v507
        %v970 = vadd.f32 %v966, %v969
        %v971 = vmax.f32 %v970, 0.0
        %s972 = sld [smem:[#allocation13 + $0xe]]
        %v973 = vstv %s972
        %v974 = vmul.f32 %v973, %v971
        %v975 = vadd.f32 %v943, %v974
        %s976 = sld [smem:[#allocation13 + $0x8e]]
        %v977 = vstv %s976
        %v978 = vmul.f32 %v977, %v971
        %v979 = vadd.f32 %v947, %v978
        %s980 = sld [smem:[#allocation13 + $0x10e]]
        %v981 = vstv %s980
        %v982 = vmul.f32 %v981, %v971
        %v983 = vadd.f32 %v951, %v982
        %s984 = sld [smem:[#allocation13 + $0x18e]]
        %v985 = vstv %s984
        %v986 = vmul.f32 %v985, %v971
        %v987 = vadd.f32 %v955, %v986
        %s988 = sld [smem:[#allocation11 + $0xf]]
        %v989 = vstv %s988
        %v990 = vmul.f32 %v989, %v486
        %s991 = sld [smem:[#allocation11 + $0x8f]]
        %v992 = vstv %s991
        %v993 = vmul.f32 %v992, %v493
        %v994 = vadd.f32 %v990, %v993
        %s995 = sld [smem:[#allocation11 + $0x10f]]
        %v996 = vstv %s995
        %v997 = vmul.f32 %v996, %v500
        %v998 = vadd.f32 %v994, %v997
        %s999 = sld [smem:[#allocation11 + $0x18f]]
        %v1000 = vstv %s999
        %v1001 = vmul.f32 %v1000, %v507
        %v1002 = vadd.f32 %v998, %v1001
        %v1003 = vmax.f32 %v1002, 0.0
        %s1004 = sld [smem:[#allocation13 + $0xf]]
        %v1005 = vstv %s1004
        %v1006 = vmul.f32 %v1005, %v1003
        %v1007 = vadd.f32 %v975, %v1006
        %s1008 = sld [smem:[#allocation13 + $0x8f]]
        %v1009 = vstv %s1008
        %v1010 = vmul.f32 %v1009, %v1003
        %v1011 = vadd.f32 %v979, %v1010
        %s1012 = sld [smem:[#allocation13 + $0x10f]]
        %v1013 = vstv %s1012
        %v1014 = vmul.f32 %v1013, %v1003
        %v1015 = vadd.f32 %v983, %v1014
        %s1016 = sld [smem:[#allocation13 + $0x18f]]
        %v1017 = vstv %s1016
        %v1018 = vmul.f32 %v1017, %v1003
        %v1019 = vadd.f32 %v987, %v1018
        %s1020 = sld [smem:[#allocation11 + $0x10]]
        %v1021 = vstv %s1020
        %v1022 = vmul.f32 %v1021, %v486
        %s1023 = sld [smem:[#allocation11 + $0x90]]
        %v1024 = vstv %s1023
        %v1025 = vmul.f32 %v1024, %v493
        %v1026 = vadd.f32 %v1022, %v1025
        %s1027 = sld [smem:[#allocation11 + $0x110]]
        %v1028 = vstv %s1027
        %v1029 = vmul.f32 %v1028, %v500
        %v1030 = vadd.f32 %v1026, %v1029
        %s1031 = sld [smem:[#allocation11 + $0x190]]
        %v1032 = vstv %s1031
        %v1033 = vmul.f32 %v1032, %v507
        %v1034 = vadd.f32 %v1030, %v1033
        %v1035 = vmax.f32 %v1034, 0.0
        %s1036 = sld [smem:[#allocation13 + $0x10]]
        %v1037 = vstv %s1036
        %v1038 = vmul.f32 %v1037, %v1035
        %v1039 = vadd.f32 %v1007, %v1038
        %s1040 = sld [smem:[#allocation13 + $0x90]]
        %v1041 = vstv %s1040
        %v1042 = vmul.f32 %v1041, %v1035
        %v1043 = vadd.f32 %v1011, %v1042
        %s1044 = sld [smem:[#allocation13 + $0x110]]
        %v1045 = vstv %s1044
        %v1046 = vmul.f32 %v1045, %v1035
        %v1047 = vadd.f32 %v1015, %v1046
        %s1048 = sld [smem:[#allocation13 + $0x190]]
        %v1049 = vstv %s1048
        %v1050 = vmul.f32 %v1049, %v1035
        %v1051 = vadd.f32 %v1019, %v1050
        %s1052 = sld [smem:[#allocation11 + $0x11]]
        %v1053 = vstv %s1052
        %v1054 = vmul.f32 %v1053, %v486
        %s1055 = sld [smem:[#allocation11 + $0x91]]
        %v1056 = vstv %s1055
        %v1057 = vmul.f32 %v1056, %v493
        %v1058 = vadd.f32 %v1054, %v1057
        %s1059 = sld [smem:[#allocation11 + $0x111]]
        %v1060 = vstv %s1059
        %v1061 = vmul.f32 %v1060, %v500
        %v1062 = vadd.f32 %v1058, %v1061
        %s1063 = sld [smem:[#allocation11 + $0x191]]
        %v1064 = vstv %s1063
        %v1065 = vmul.f32 %v1064, %v507
        %v1066 = vadd.f32 %v1062, %v1065
        %v1067 = vmax.f32 %v1066, 0.0
        %s1068 = sld [smem:[#allocation13 + $0x11]]
        %v1069 = vstv %s1068
        %v1070 = vmul.f32 %v1069, %v1067
        %v1071 = vadd.f32 %v1039, %v1070
        %s1072 = sld [smem:[#allocation13 + $0x91]]
        %v1073 = vstv %s1072
        %v1074 = vmul.f32 %v1073, %v1067
        %v1075 = vadd.f32 %v1043, %v1074
        %s1076 = sld [smem:[#allocation13 + $0x111]]
        %v1077 = vstv %s1076
        %v1078 = vmul.f32 %v1077, %v1067
        %v1079 = vadd.f32 %v1047, %v1078
        %s1080 = sld [smem:[#allocation13 + $0x191]]
        %v1081 = vstv %s1080
        %v1082 = vmul.f32 %v1081, %v1067
        %v1083 = vadd.f32 %v1051, %v1082
        %s1084 = sld [smem:[#allocation11 + $0x12]]
        %v1085 = vstv %s1084
        %v1086 = vmul.f32 %v1085, %v486
        %s1087 = sld [smem:[#allocation11 + $0x92]]
        %v1088 = vstv %s1087
        %v1089 = vmul.f32 %v1088, %v493
        %v1090 = vadd.f32 %v1086, %v1089
        %s1091 = sld [smem:[#allocation11 + $0x112]]
        %v1092 = vstv %s1091
        %v1093 = vmul.f32 %v1092, %v500
        %v1094 = vadd.f32 %v1090, %v1093
        %s1095 = sld [smem:[#allocation11 + $0x192]]
        %v1096 = vstv %s1095
        %v1097 = vmul.f32 %v1096, %v507
        %v1098 = vadd.f32 %v1094, %v1097
        %v1099 = vmax.f32 %v1098, 0.0
        %s1100 = sld [smem:[#allocation13 + $0x12]]
        %v1101 = vstv %s1100
        %v1102 = vmul.f32 %v1101, %v1099
        %v1103 = vadd.f32 %v1071, %v1102
        %s1104 = sld [smem:[#allocation13 + $0x92]]
        %v1105 = vstv %s1104
        %v1106 = vmul.f32 %v1105, %v1099
        %v1107 = vadd.f32 %v1075, %v1106
        %s1108 = sld [smem:[#allocation13 + $0x112]]
        %v1109 = vstv %s1108
        %v1110 = vmul.f32 %v1109, %v1099
        %v1111 = vadd.f32 %v1079, %v1110
        %s1112 = sld [smem:[#allocation13 + $0x192]]
        %v1113 = vstv %s1112
        %v1114 = vmul.f32 %v1113, %v1099
        %v1115 = vadd.f32 %v1083, %v1114
        %s1116 = sld [smem:[#allocation11 + $0x13]]
        %v1117 = vstv %s1116
        %v1118 = vmul.f32 %v1117, %v486
        %s1119 = sld [smem:[#allocation11 + $0x93]]
        %v1120 = vstv %s1119
        %v1121 = vmul.f32 %v1120, %v493
        %v1122 = vadd.f32 %v1118, %v1121
        %s1123 = sld [smem:[#allocation11 + $0x113]]
        %v1124 = vstv %s1123
        %v1125 = vmul.f32 %v1124, %v500
        %v1126 = vadd.f32 %v1122, %v1125
        %s1127 = sld [smem:[#allocation11 + $0x193]]
        %v1128 = vstv %s1127
        %v1129 = vmul.f32 %v1128, %v507
        %v1130 = vadd.f32 %v1126, %v1129
        %v1131 = vmax.f32 %v1130, 0.0
        %s1132 = sld [smem:[#allocation13 + $0x13]]
        %v1133 = vstv %s1132
        %v1134 = vmul.f32 %v1133, %v1131
        %v1135 = vadd.f32 %v1103, %v1134
        %s1136 = sld [smem:[#allocation13 + $0x93]]
        %v1137 = vstv %s1136
        %v1138 = vmul.f32 %v1137, %v1131
        %v1139 = vadd.f32 %v1107, %v1138
        %s1140 = sld [smem:[#allocation13 + $0x113]]
        %v1141 = vstv %s1140
        %v1142 = vmul.f32 %v1141, %v1131
        %v1143 = vadd.f32 %v1111, %v1142
        %s1144 = sld [smem:[#allocation13 + $0x193]]
        %v1145 = vstv %s1144
        %v1146 = vmul.f32 %v1145, %v1131
        %v1147 = vadd.f32 %v1115, %v1146
        %s1148 = sld [smem:[#allocation11 + $0x14]]
        %v1149 = vstv %s1148
        %v1150 = vmul.f32 %v1149, %v486
        %s1151 = sld [smem:[#allocation11 + $0x94]]
        %v1152 = vstv %s1151
        %v1153 = vmul.f32 %v1152, %v493
        %v1154 = vadd.f32 %v1150, %v1153
        %s1155 = sld [smem:[#allocation11 + $0x114]]
        %v1156 = vstv %s1155
        %v1157 = vmul.f32 %v1156, %v500
        %v1158 = vadd.f32 %v1154, %v1157
        %s1159 = sld [smem:[#allocation11 + $0x194]]
        %v1160 = vstv %s1159
        %v1161 = vmul.f32 %v1160, %v507
        %v1162 = vadd.f32 %v1158, %v1161
        %v1163 = vmax.f32 %v1162, 0.0
        %s1164 = sld [smem:[#allocation13 + $0x14]]
        %v1165 = vstv %s1164
        %v1166 = vmul.f32 %v1165, %v1163
        %v1167 = vadd.f32 %v1135, %v1166
        %s1168 = sld [smem:[#allocation13 + $0x94]]
        %v1169 = vstv %s1168
        %v1170 = vmul.f32 %v1169, %v1163
        %v1171 = vadd.f32 %v1139, %v1170
        %s1172 = sld [smem:[#allocation13 + $0x114]]
        %v1173 = vstv %s1172
        %v1174 = vmul.f32 %v1173, %v1163
        %v1175 = vadd.f32 %v1143, %v1174
        %s1176 = sld [smem:[#allocation13 + $0x194]]
        %v1177 = vstv %s1176
        %v1178 = vmul.f32 %v1177, %v1163
        %v1179 = vadd.f32 %v1147, %v1178
        %s1180 = sld [smem:[#allocation11 + $0x15]]
        %v1181 = vstv %s1180
        %v1182 = vmul.f32 %v1181, %v486
        %s1183 = sld [smem:[#allocation11 + $0x95]]
        %v1184 = vstv %s1183
        %v1185 = vmul.f32 %v1184, %v493
        %v1186 = vadd.f32 %v1182, %v1185
        %s1187 = sld [smem:[#allocation11 + $0x115]]
        %v1188 = vstv %s1187
        %v1189 = vmul.f32 %v1188, %v500
        %v1190 = vadd.f32 %v1186, %v1189
        %s1191 = sld [smem:[#allocation11 + $0x195]]
        %v1192 = vstv %s1191
        %v1193 = vmul.f32 %v1192, %v507
        %v1194 = vadd.f32 %v1190, %v1193
        %v1195 = vmax.f32 %v1194, 0.0
        %s1196 = sld [smem:[#allocation13 + $0x15]]
        %v1197 = vstv %s1196
        %v1198 = vmul.f32 %v1197, %v1195
        %v1199 = vadd.f32 %v1167, %v1198
        %s1200 = sld [smem:[#allocation13 + $0x95]]
        %v1201 = vstv %s1200
        %v1202 = vmul.f32 %v1201, %v1195
        %v1203 = vadd.f32 %v1171, %v1202
        %s1204 = sld [smem:[#allocation13 + $0x115]]
        %v1205 = vstv %s1204
        %v1206 = vmul.f32 %v1205, %v1195
        %v1207 = vadd.f32 %v1175, %v1206
        %s1208 = sld [smem:[#allocation13 + $0x195]]
        %v1209 = vstv %s1208
        %v1210 = vmul.f32 %v1209, %v1195
        %v1211 = vadd.f32 %v1179, %v1210
        %s1212 = sld [smem:[#allocation11 + $0x16]]
        %v1213 = vstv %s1212
        %v1214 = vmul.f32 %v1213, %v486
        %s1215 = sld [smem:[#allocation11 + $0x96]]
        %v1216 = vstv %s1215
        %v1217 = vmul.f32 %v1216, %v493
        %v1218 = vadd.f32 %v1214, %v1217
        %s1219 = sld [smem:[#allocation11 + $0x116]]
        %v1220 = vstv %s1219
        %v1221 = vmul.f32 %v1220, %v500
        %v1222 = vadd.f32 %v1218, %v1221
        %s1223 = sld [smem:[#allocation11 + $0x196]]
        %v1224 = vstv %s1223
        %v1225 = vmul.f32 %v1224, %v507
        %v1226 = vadd.f32 %v1222, %v1225
        %v1227 = vmax.f32 %v1226, 0.0
        %s1228 = sld [smem:[#allocation13 + $0x16]]
        %v1229 = vstv %s1228
        %v1230 = vmul.f32 %v1229, %v1227
        %v1231 = vadd.f32 %v1199, %v1230
        %s1232 = sld [smem:[#allocation13 + $0x96]]
        %v1233 = vstv %s1232
        %v1234 = vmul.f32 %v1233, %v1227
        %v1235 = vadd.f32 %v1203, %v1234
        %s1236 = sld [smem:[#allocation13 + $0x116]]
        %v1237 = vstv %s1236
        %v1238 = vmul.f32 %v1237, %v1227
        %v1239 = vadd.f32 %v1207, %v1238
        %s1240 = sld [smem:[#allocation13 + $0x196]]
        %v1241 = vstv %s1240
        %v1242 = vmul.f32 %v1241, %v1227
        %v1243 = vadd.f32 %v1211, %v1242
        %s1244 = sld [smem:[#allocation11 + $0x17]]
        %v1245 = vstv %s1244
        %v1246 = vmul.f32 %v1245, %v486
        %s1247 = sld [smem:[#allocation11 + $0x97]]
        %v1248 = vstv %s1247
        %v1249 = vmul.f32 %v1248, %v493
        %v1250 = vadd.f32 %v1246, %v1249
        %s1251 = sld [smem:[#allocation11 + $0x117]]
        %v1252 = vstv %s1251
        %v1253 = vmul.f32 %v1252, %v500
        %v1254 = vadd.f32 %v1250, %v1253
        %s1255 = sld [smem:[#allocation11 + $0x197]]
        %v1256 = vstv %s1255
        %v1257 = vmul.f32 %v1256, %v507
        %v1258 = vadd.f32 %v1254, %v1257
        %v1259 = vmax.f32 %v1258, 0.0
        %s1260 = sld [smem:[#allocation13 + $0x17]]
        %v1261 = vstv %s1260
        %v1262 = vmul.f32 %v1261, %v1259
        %v1263 = vadd.f32 %v1231, %v1262
        %s1264 = sld [smem:[#allocation13 + $0x97]]
        %v1265 = vstv %s1264
        %v1266 = vmul.f32 %v1265, %v1259
        %v1267 = vadd.f32 %v1235, %v1266
        %s1268 = sld [smem:[#allocation13 + $0x117]]
        %v1269 = vstv %s1268
        %v1270 = vmul.f32 %v1269, %v1259
        %v1271 = vadd.f32 %v1239, %v1270
        %s1272 = sld [smem:[#allocation13 + $0x197]]
        %v1273 = vstv %s1272
        %v1274 = vmul.f32 %v1273, %v1259
        %v1275 = vadd.f32 %v1243, %v1274
        %s1276 = sld [smem:[#allocation11 + $0x18]]
        %v1277 = vstv %s1276
        %v1278 = vmul.f32 %v1277, %v486
        %s1279 = sld [smem:[#allocation11 + $0x98]]
        %v1280 = vstv %s1279
        %v1281 = vmul.f32 %v1280, %v493
        %v1282 = vadd.f32 %v1278, %v1281
        %s1283 = sld [smem:[#allocation11 + $0x118]]
        %v1284 = vstv %s1283
        %v1285 = vmul.f32 %v1284, %v500
        %v1286 = vadd.f32 %v1282, %v1285
        %s1287 = sld [smem:[#allocation11 + $0x198]]
        %v1288 = vstv %s1287
        %v1289 = vmul.f32 %v1288, %v507
        %v1290 = vadd.f32 %v1286, %v1289
        %v1291 = vmax.f32 %v1290, 0.0
        %s1292 = sld [smem:[#allocation13 + $0x18]]
        %v1293 = vstv %s1292
        %v1294 = vmul.f32 %v1293, %v1291
        %v1295 = vadd.f32 %v1263, %v1294
        %s1296 = sld [smem:[#allocation13 + $0x98]]
        %v1297 = vstv %s1296
        %v1298 = vmul.f32 %v1297, %v1291
        %v1299 = vadd.f32 %v1267, %v1298
        %s1300 = sld [smem:[#allocation13 + $0x118]]
        %v1301 = vstv %s1300
        %v1302 = vmul.f32 %v1301, %v1291
        %v1303 = vadd.f32 %v1271, %v1302
        %s1304 = sld [smem:[#allocation13 + $0x198]]
        %v1305 = vstv %s1304
        %v1306 = vmul.f32 %v1305, %v1291
        %v1307 = vadd.f32 %v1275, %v1306
        %s1308 = sld [smem:[#allocation11 + $0x19]]
        %v1309 = vstv %s1308
        %v1310 = vmul.f32 %v1309, %v486
        %s1311 = sld [smem:[#allocation11 + $0x99]]
        %v1312 = vstv %s1311
        %v1313 = vmul.f32 %v1312, %v493
        %v1314 = vadd.f32 %v1310, %v1313
        %s1315 = sld [smem:[#allocation11 + $0x119]]
        %v1316 = vstv %s1315
        %v1317 = vmul.f32 %v1316, %v500
        %v1318 = vadd.f32 %v1314, %v1317
        %s1319 = sld [smem:[#allocation11 + $0x199]]
        %v1320 = vstv %s1319
        %v1321 = vmul.f32 %v1320, %v507
        %v1322 = vadd.f32 %v1318, %v1321
        %v1323 = vmax.f32 %v1322, 0.0
        %s1324 = sld [smem:[#allocation13 + $0x19]]
        %v1325 = vstv %s1324
        %v1326 = vmul.f32 %v1325, %v1323
        %v1327 = vadd.f32 %v1295, %v1326
        %s1328 = sld [smem:[#allocation13 + $0x99]]
        %v1329 = vstv %s1328
        %v1330 = vmul.f32 %v1329, %v1323
        %v1331 = vadd.f32 %v1299, %v1330
        %s1332 = sld [smem:[#allocation13 + $0x119]]
        %v1333 = vstv %s1332
        %v1334 = vmul.f32 %v1333, %v1323
        %v1335 = vadd.f32 %v1303, %v1334
        %s1336 = sld [smem:[#allocation13 + $0x199]]
        %v1337 = vstv %s1336
        %v1338 = vmul.f32 %v1337, %v1323
        %v1339 = vadd.f32 %v1307, %v1338
        %s1340 = sld [smem:[#allocation11 + $0x1a]]
        %v1341 = vstv %s1340
        %v1342 = vmul.f32 %v1341, %v486
        %s1343 = sld [smem:[#allocation11 + $0x9a]]
        %v1344 = vstv %s1343
        %v1345 = vmul.f32 %v1344, %v493
        %v1346 = vadd.f32 %v1342, %v1345
        %s1347 = sld [smem:[#allocation11 + $0x11a]]
        %v1348 = vstv %s1347
        %v1349 = vmul.f32 %v1348, %v500
        %v1350 = vadd.f32 %v1346, %v1349
        %s1351 = sld [smem:[#allocation11 + $0x19a]]
        %v1352 = vstv %s1351
        %v1353 = vmul.f32 %v1352, %v507
        %v1354 = vadd.f32 %v1350, %v1353
        %v1355 = vmax.f32 %v1354, 0.0
        %s1356 = sld [smem:[#allocation13 + $0x1a]]
        %v1357 = vstv %s1356
        %v1358 = vmul.f32 %v1357, %v1355
        %v1359 = vadd.f32 %v1327, %v1358
        %s1360 = sld [smem:[#allocation13 + $0x9a]]
        %v1361 = vstv %s1360
        %v1362 = vmul.f32 %v1361, %v1355
        %v1363 = vadd.f32 %v1331, %v1362
        %s1364 = sld [smem:[#allocation13 + $0x11a]]
        %v1365 = vstv %s1364
        %v1366 = vmul.f32 %v1365, %v1355
        %v1367 = vadd.f32 %v1335, %v1366
        %s1368 = sld [smem:[#allocation13 + $0x19a]]
        %v1369 = vstv %s1368
        %v1370 = vmul.f32 %v1369, %v1355
        %v1371 = vadd.f32 %v1339, %v1370
        %s1372 = sld [smem:[#allocation11 + $0x1b]]
        %v1373 = vstv %s1372
        %v1374 = vmul.f32 %v1373, %v486
        %s1375 = sld [smem:[#allocation11 + $0x9b]]
        %v1376 = vstv %s1375
        %v1377 = vmul.f32 %v1376, %v493
        %v1378 = vadd.f32 %v1374, %v1377
        %s1379 = sld [smem:[#allocation11 + $0x11b]]
        %v1380 = vstv %s1379
        %v1381 = vmul.f32 %v1380, %v500
        %v1382 = vadd.f32 %v1378, %v1381
        %s1383 = sld [smem:[#allocation11 + $0x19b]]
        %v1384 = vstv %s1383
        %v1385 = vmul.f32 %v1384, %v507
        %v1386 = vadd.f32 %v1382, %v1385
        %v1387 = vmax.f32 %v1386, 0.0
        %s1388 = sld [smem:[#allocation13 + $0x1b]]
        %v1389 = vstv %s1388
        %v1390 = vmul.f32 %v1389, %v1387
        %v1391 = vadd.f32 %v1359, %v1390
        %s1392 = sld [smem:[#allocation13 + $0x9b]]
        %v1393 = vstv %s1392
        %v1394 = vmul.f32 %v1393, %v1387
        %v1395 = vadd.f32 %v1363, %v1394
        %s1396 = sld [smem:[#allocation13 + $0x11b]]
        %v1397 = vstv %s1396
        %v1398 = vmul.f32 %v1397, %v1387
        %v1399 = vadd.f32 %v1367, %v1398
        %s1400 = sld [smem:[#allocation13 + $0x19b]]
        %v1401 = vstv %s1400
        %v1402 = vmul.f32 %v1401, %v1387
        %v1403 = vadd.f32 %v1371, %v1402
        %s1404 = sld [smem:[#allocation11 + $0x1c]]
        %v1405 = vstv %s1404
        %v1406 = vmul.f32 %v1405, %v486
        %s1407 = sld [smem:[#allocation11 + $0x9c]]
        %v1408 = vstv %s1407
        %v1409 = vmul.f32 %v1408, %v493
        %v1410 = vadd.f32 %v1406, %v1409
        %s1411 = sld [smem:[#allocation11 + $0x11c]]
        %v1412 = vstv %s1411
        %v1413 = vmul.f32 %v1412, %v500
        %v1414 = vadd.f32 %v1410, %v1413
        %s1415 = sld [smem:[#allocation11 + $0x19c]]
        %v1416 = vstv %s1415
        %v1417 = vmul.f32 %v1416, %v507
        %v1418 = vadd.f32 %v1414, %v1417
        %v1419 = vmax.f32 %v1418, 0.0
        %s1420 = sld [smem:[#allocation13 + $0x1c]]
        %v1421 = vstv %s1420
        %v1422 = vmul.f32 %v1421, %v1419
        %v1423 = vadd.f32 %v1391, %v1422
        %s1424 = sld [smem:[#allocation13 + $0x9c]]
        %v1425 = vstv %s1424
        %v1426 = vmul.f32 %v1425, %v1419
        %v1427 = vadd.f32 %v1395, %v1426
        %s1428 = sld [smem:[#allocation13 + $0x11c]]
        %v1429 = vstv %s1428
        %v1430 = vmul.f32 %v1429, %v1419
        %v1431 = vadd.f32 %v1399, %v1430
        %s1432 = sld [smem:[#allocation13 + $0x19c]]
        %v1433 = vstv %s1432
        %v1434 = vmul.f32 %v1433, %v1419
        %v1435 = vadd.f32 %v1403, %v1434
        %s1436 = sld [smem:[#allocation11 + $0x1d]]
        %v1437 = vstv %s1436
        %v1438 = vmul.f32 %v1437, %v486
        %s1439 = sld [smem:[#allocation11 + $0x9d]]
        %v1440 = vstv %s1439
        %v1441 = vmul.f32 %v1440, %v493
        %v1442 = vadd.f32 %v1438, %v1441
        %s1443 = sld [smem:[#allocation11 + $0x11d]]
        %v1444 = vstv %s1443
        %v1445 = vmul.f32 %v1444, %v500
        %v1446 = vadd.f32 %v1442, %v1445
        %s1447 = sld [smem:[#allocation11 + $0x19d]]
        %v1448 = vstv %s1447
        %v1449 = vmul.f32 %v1448, %v507
        %v1450 = vadd.f32 %v1446, %v1449
        %v1451 = vmax.f32 %v1450, 0.0
        %s1452 = sld [smem:[#allocation13 + $0x1d]]
        %v1453 = vstv %s1452
        %v1454 = vmul.f32 %v1453, %v1451
        %v1455 = vadd.f32 %v1423, %v1454
        %s1456 = sld [smem:[#allocation13 + $0x9d]]
        %v1457 = vstv %s1456
        %v1458 = vmul.f32 %v1457, %v1451
        %v1459 = vadd.f32 %v1427, %v1458
        %s1460 = sld [smem:[#allocation13 + $0x11d]]
        %v1461 = vstv %s1460
        %v1462 = vmul.f32 %v1461, %v1451
        %v1463 = vadd.f32 %v1431, %v1462
        %s1464 = sld [smem:[#allocation13 + $0x19d]]
        %v1465 = vstv %s1464
        %v1466 = vmul.f32 %v1465, %v1451
        %v1467 = vadd.f32 %v1435, %v1466
        %s1468 = sld [smem:[#allocation11 + $0x1e]]
        %v1469 = vstv %s1468
        %v1470 = vmul.f32 %v1469, %v486
        %s1471 = sld [smem:[#allocation11 + $0x9e]]
        %v1472 = vstv %s1471
        %v1473 = vmul.f32 %v1472, %v493
        %v1474 = vadd.f32 %v1470, %v1473
        %s1475 = sld [smem:[#allocation11 + $0x11e]]
        %v1476 = vstv %s1475
        %v1477 = vmul.f32 %v1476, %v500
        %v1478 = vadd.f32 %v1474, %v1477
        %s1479 = sld [smem:[#allocation11 + $0x19e]]
        %v1480 = vstv %s1479
        %v1481 = vmul.f32 %v1480, %v507
        %v1482 = vadd.f32 %v1478, %v1481
        %v1483 = vmax.f32 %v1482, 0.0
        %s1484 = sld [smem:[#allocation13 + $0x1e]]
        %v1485 = vstv %s1484
        %v1486 = vmul.f32 %v1485, %v1483
        %v1487 = vadd.f32 %v1455, %v1486
        %s1488 = sld [smem:[#allocation13 + $0x9e]]
        %v1489 = vstv %s1488
        %v1490 = vmul.f32 %v1489, %v1483
        %v1491 = vadd.f32 %v1459, %v1490
        %s1492 = sld [smem:[#allocation13 + $0x11e]]
        %v1493 = vstv %s1492
        %v1494 = vmul.f32 %v1493, %v1483
        %v1495 = vadd.f32 %v1463, %v1494
        %s1496 = sld [smem:[#allocation13 + $0x19e]]
        %v1497 = vstv %s1496
        %v1498 = vmul.f32 %v1497, %v1483
        %v1499 = vadd.f32 %v1467, %v1498
        %s1500 = sld [smem:[#allocation11 + $0x1f]]
        %v1501 = vstv %s1500
        %v1502 = vmul.f32 %v1501, %v486
        %s1503 = sld [smem:[#allocation11 + $0x9f]]
        %v1504 = vstv %s1503
        %v1505 = vmul.f32 %v1504, %v493
        %v1506 = vadd.f32 %v1502, %v1505
        %s1507 = sld [smem:[#allocation11 + $0x11f]]
        %v1508 = vstv %s1507
        %v1509 = vmul.f32 %v1508, %v500
        %v1510 = vadd.f32 %v1506, %v1509
        %s1511 = sld [smem:[#allocation11 + $0x19f]]
        %v1512 = vstv %s1511
        %v1513 = vmul.f32 %v1512, %v507
        %v1514 = vadd.f32 %v1510, %v1513
        %v1515 = vmax.f32 %v1514, 0.0
        %s1516 = sld [smem:[#allocation13 + $0x1f]]
        %v1517 = vstv %s1516
        %v1518 = vmul.f32 %v1517, %v1515
        %v1519 = vadd.f32 %v1487, %v1518
        %s1520 = sld [smem:[#allocation13 + $0x9f]]
        %v1521 = vstv %s1520
        %v1522 = vmul.f32 %v1521, %v1515
        %v1523 = vadd.f32 %v1491, %v1522
        %s1524 = sld [smem:[#allocation13 + $0x11f]]
        %v1525 = vstv %s1524
        %v1526 = vmul.f32 %v1525, %v1515
        %v1527 = vadd.f32 %v1495, %v1526
        %s1528 = sld [smem:[#allocation13 + $0x19f]]
        %v1529 = vstv %s1528
        %v1530 = vmul.f32 %v1529, %v1515
        %v1531 = vadd.f32 %v1499, %v1530
        %s1532 = sld [smem:[#allocation10]]
        %v1533 = vld [vmem:[%s399] sm:$0xff]
        %v1534 = vstv %s1532
        %v1535 = vmul.f32 %v1534, %v1533
        %s1536 = sld [smem:[#allocation10 + $0x80]]
        %s1537 = scalar_lea.vmem %s399, %s487 [#allocation7]
        %v1538 = vld [vmem:[%s1537] sm:$0xff]
        %v1539 = vstv %s1536
        %v1540 = vmul.f32 %v1539, %v1538
        %v1541 = vadd.f32 %v1535, %v1540
        %s1542 = sld [smem:[#allocation10 + $0x100]]
        %s1543 = scalar_lea.vmem %s399, %s494 [#allocation7]
        %v1544 = vld [vmem:[%s1543] sm:$0xff]
        %v1545 = vstv %s1542
        %v1546 = vmul.f32 %v1545, %v1544
        %v1547 = vadd.f32 %v1541, %v1546
        %s1548 = sld [smem:[#allocation10 + $0x180]]
        %s1549 = scalar_lea.vmem %s399, %s501 [#allocation7]
        %v1550 = vld [vmem:[%s1549] sm:$0xff]
        %v1551 = vstv %s1548
        %v1552 = vmul.f32 %v1551, %v1550
        %v1553 = vadd.f32 %v1547, %v1552
        %v1554 = vsub.f32 %v1519, %v1553
        %v1555 = vmul.f32 %v484, %v1554
        %v1556 = vsub.f32 %v1553, %v483
        %v1557 = vmul.f32 %v1556, %v1556
        %s1558 = sld [smem:[#allocation10 + $0x1]]
        %v1559 = vstv %s1558
        %v1560 = vmul.f32 %v1559, %v1533
        %s1561 = sld [smem:[#allocation10 + $0x81]]
        %v1562 = vstv %s1561
        %v1563 = vmul.f32 %v1562, %v1538
        %v1564 = vadd.f32 %v1560, %v1563
        %s1565 = sld [smem:[#allocation10 + $0x101]]
        %v1566 = vstv %s1565
        %v1567 = vmul.f32 %v1566, %v1544
        %v1568 = vadd.f32 %v1564, %v1567
        %s1569 = sld [smem:[#allocation10 + $0x181]]
        %v1570 = vstv %s1569
        %v1571 = vmul.f32 %v1570, %v1550
        %v1572 = vadd.f32 %v1568, %v1571
        %v1573 = vsub.f32 %v1523, %v1572
        %v1574 = vmul.f32 %v491, %v1573
        %v1575 = vsub.f32 %v1572, %v489
        %v1576 = vadd.f32 %v1555, %v1574
        %v1577 = vmul.f32 %v1575, %v1575
        %v1578 = vadd.f32 %v1557, %v1577
        %s1579 = sld [smem:[#allocation10 + $0x2]]
        %v1580 = vstv %s1579
        %v1581 = vmul.f32 %v1580, %v1533
        %s1582 = sld [smem:[#allocation10 + $0x82]]
        %v1583 = vstv %s1582
        %v1584 = vmul.f32 %v1583, %v1538
        %v1585 = vadd.f32 %v1581, %v1584
        %s1586 = sld [smem:[#allocation10 + $0x102]]
        %v1587 = vstv %s1586
        %v1588 = vmul.f32 %v1587, %v1544
        %v1589 = vadd.f32 %v1585, %v1588
        %s1590 = sld [smem:[#allocation10 + $0x182]]
        %v1591 = vstv %s1590
        %v1592 = vmul.f32 %v1591, %v1550
        %v1593 = vadd.f32 %v1589, %v1592
        %v1594 = vsub.f32 %v1527, %v1593
        %v1595 = vmul.f32 %v498, %v1594
        %v1596 = vsub.f32 %v1593, %v496
        %v1597 = vadd.f32 %v1576, %v1595
        %v1598 = vmul.f32 %v1596, %v1596
        %v1599 = vadd.f32 %v1578, %v1598
        %s1600 = sld [smem:[#allocation10 + $0x3]]
        %v1601 = vstv %s1600
        %v1602 = vmul.f32 %v1601, %v1533
        %s1603 = sld [smem:[#allocation10 + $0x83]]
        %v1604 = vstv %s1603
        %v1605 = vmul.f32 %v1604, %v1538
        %v1606 = vadd.f32 %v1602, %v1605
        %s1607 = sld [smem:[#allocation10 + $0x103]]
        %v1608 = vstv %s1607
        %v1609 = vmul.f32 %v1608, %v1544
        %v1610 = vadd.f32 %v1606, %v1609
        %s1611 = sld [smem:[#allocation10 + $0x183]]
        %v1612 = vstv %s1611
        %v1613 = vmul.f32 %v1612, %v1550
        %v1614 = vadd.f32 %v1610, %v1613
        %v1615 = vsub.f32 %v1531, %v1614
        %v1616 = vmul.f32 %v505, %v1615
        %v1617 = vsub.f32 %v1614, %v503
        %v1618 = vadd.f32 %v1597, %v1616
        %v1619 = vmul.f32 %v1617, %v1617
        %v1620 = vadd.f32 %v1599, %v1619
        %v1621 = vadd.f32 %v1618, 0.0
        %v1622 = vadd.f32 %v1620, 0.0
        %v1623 = vld [vmem:[%s464] sm:$0xff]
        %v1624 = vadd.f32 %v1623, %v1621
        %1625 = vst [vmem:[%s464] sm:$0xff] %v1624
        %v1626 = vld [vmem:[%s471] sm:$0xff]
        %v1627 = vadd.f32 %v1626, %v1622
        %1628 = vst [vmem:[%s471] sm:$0xff] %v1627
        %s1629 = sand.u32 %s216, 1
        %s1630 = scalar_lea.sflag [#allocation4], %s1629
        %s1631 = sand.u32 %s216, 1
        %s1632 = smul.addr %s1631, 8
        %s1633 = scalar_lea.vmem [#allocation14], %s1632
        %s1634 = sand.u32 %s244, 1
        %s1635 = scalar_lea.sflag [#allocation16], %s1634
        %s1636 = sand.u32 %s244, 1
        %s1637 = smul.addr %s1636, 8
        %s1638 = scalar_lea.vmem [#allocation15], %s1637
        // Predicated region
        $region73: #{tpu_custom_call.1} parent=43 // pred_check
          %p1639 = pneg %p226
        $region74: #{tpu_custom_call.1} parent=43 // pred_check_branch
          %1641 = sbr.rel (%p1639) target = $region76
        $region75: #{tpu_custom_call.1} parent=43 // pred_region
          %s1642 = sadd.s32 %s39, %s40
          %1644 = vsyncadd %s1630, 0
          %s1645 = smul.addr %s1642, 8
          %s1646 = scalar_lea.hbm %s6, %s1645
          %s1648 = sshll.u32 %s1633, 4
          %s1649 = int_to_ptr.vmem [resolvable:$true] %s1648
          %s1650 = sshll.u32 %s1646, 4
          %s1651 = int_to_ptr.hbm [resolvable:$true] %s1650
          %1653 = dma.vmem_to_hbm [thread:$0]  %s1649, 128, %s1651, %s1630
        $region76: #{tpu_custom_call.1} parent=43 // pred_fallthru
          _
        // Predicated region
        $region77: #{tpu_custom_call.1} parent=43 // pred_check
          %p1654 = pneg %p254
        $region78: #{tpu_custom_call.1} parent=43 // pred_check_branch
          %1656 = sbr.rel (%p1654) target = $region80
        $region79: #{tpu_custom_call.1} parent=43 // pred_region
          %s1657 = sadd.s32 %s39, %s40
          %1659 = vsyncadd %s1635, 0
          %s1660 = smul.addr %s1657, 8
          %s1661 = scalar_lea.hbm %s7, %s1660
          %s1663 = sshll.u32 %s1638, 4
          %s1664 = int_to_ptr.vmem [resolvable:$true] %s1663
          %s1665 = sshll.u32 %s1661, 4
          %s1666 = int_to_ptr.hbm [resolvable:$true] %s1665
          %1668 = dma.vmem_to_hbm [thread:$0]  %s1664, 128, %s1666, %s1635
        $region80: #{tpu_custom_call.1} parent=43 // pred_fallthru
          _
      $region44: #{tpu_custom_call.1} parent=5 // pred_fallthru
        _
      %p1669 = scmp.le.s32.totalorder 2, %s29
      // Predicated region
      $region81: #{tpu_custom_call.1} parent=5 // pred_check
        %p1670 = pneg %p1669
      $region82: #{tpu_custom_call.1} parent=5 // pred_check_branch
        %1672 = sbr.rel (%p1670) target = $region84
      $region83: #{tpu_custom_call.1} parent=5 // pred_region
        %s1673 = ssub.s32 %s29, 2
        // Predicated region
        $region85: #{tpu_custom_call.1} parent=83 // pred_check
          %p1674 = pneg %p232
        $region86: #{tpu_custom_call.1} parent=83 // pred_check_branch
          %1676 = sbr.rel (%p1674) target = $region88
        $region87: #{tpu_custom_call.1} parent=83 // pred_region
          %s1677 = sand.u32 %s217, 1
          %s1678 = scalar_lea.sflag [#allocation4], %s1677
          %s1679 = sand.u32 %s217, 1
          %s1680 = smul.addr %s1679, 8
          %s1681 = scalar_lea.vmem [#allocation14], %s1680
          %1683 = dma.done %s1678, 128
        $region88: #{tpu_custom_call.1} parent=83 // pred_fallthru
          _
        // Predicated region
        $region89: #{tpu_custom_call.1} parent=83 // pred_check
          %p1684 = pneg %p260
        $region90: #{tpu_custom_call.1} parent=83 // pred_check_branch
          %1686 = sbr.rel (%p1684) target = $region92
        $region91: #{tpu_custom_call.1} parent=83 // pred_region
          %s1687 = sand.u32 %s245, 1
          %s1688 = scalar_lea.sflag [#allocation16], %s1687
          %s1689 = sand.u32 %s245, 1
          %s1690 = smul.addr %s1689, 8
          %s1691 = scalar_lea.vmem [#allocation15], %s1690
          %1693 = dma.done %s1688, 128
        $region92: #{tpu_custom_call.1} parent=83 // pred_fallthru
          _
      $region84: #{tpu_custom_call.1} parent=5 // pred_fallthru
        _
    $region6: #{tpu_custom_call.1} parent=1 // loop_footer
      %s33 = sadd.s32 1, %s29
    $region7: #{tpu_custom_call.1} parent=1 // loop_footer_branch
      %28 = sbr.rel target = $region3
    $region8: #{tpu_custom_call.1} parent=1 // loop_exit
      _
    %1694 = vsyncpa [#allocation3], 1
    %s1695 = scalar_lea.sflag [#allocation3], 1
    %1696 = vsyncpa %s1695, 1
    %1697 = vsyncpa [#allocation8], 1
    %s1698 = scalar_lea.sflag [#allocation8], 1
    %1699 = vsyncpa %s1698, 1
    %1700 = vsyncpa [#allocation4], 1
    %s1701 = scalar_lea.sflag [#allocation4], 1
    %1702 = vsyncpa %s1701, 1
    %1703 = vsyncpa [#allocation16], 1
    %s1704 = scalar_lea.sflag [#allocation16], 1
    %1705 = vsyncpa %s1704, 1
    %1706 = vsyncpa [#allocation5], 1
    %s1707 = scalar_lea.sflag [#allocation5], 1
    %1708 = vsyncpa %s1707, 1
    %1709 = vsyncpa [#allocation12], 1
    %1710 = vsyncpa [#allocation6], 1
    %s1711 = scalar_lea.sflag [#allocation6], 1
    %1712 = vsyncpa %s1711, 1

</llo_original>
